<compile_context>
chip_gen: v6e
topology: v6e:2x2x1
jax: 0.10.0
libtpu: 0.0.40
codegen_flags: <defaults>
</compile_context>

<pallas_src>
import functools
import numpy as np
import jax
import jax.numpy as jnp
from jax import lax
from jax.experimental import pallas as pl
from jax.experimental.pallas import tpu as pltpu

# ---- configuration / small shapes ----
OUTER_NC = 4      # outer_nc (input channels of the block)
INNER_NC = 8      # inner_nc (bottleneck channels)
N, H, W = 2, 16, 16
BN_EPS = 1e-5


# ---------------------------------------------------------------------------
# Fused kernel: LeakyReLU -> conv(s2) -> ReLU -> conv_transpose(s2) -> BN -> cat
# ---------------------------------------------------------------------------
def _fused_unet_kernel(x_ref, w1_ref, w2_ref, gb_ref, bb_ref, o_ref, *, cx):
    # x_ref  : (n, cx*H*W)     raw input, NCHW-flat per sample (also the skip data)
    # w1_ref : (cx*H*W, nd)    down-conv weights; zero columns provide the height pad of d
    # w2_ref : (nd, cx*H*W)    up-conv weights; columns are NCHW-flat (co, y, x) per sample
    # gb/bb  : (1, cx*H*W)     BN gamma/beta pre-broadcast over each channel's H*W block
    # o_ref  : (n, 2*cx*H*W)   cat([BN(u), x], dim=1) in NCHW-flat layout
    n = x_ref.shape[0]
    nu = w2_ref.shape[1]                      # cx * H * W
    hw = nu // cx                             # H * W
    inv_cnt = 1.0 / float(n * hw)             # 1 / (N*H*W) for batch statistics

    x = x_ref[...]                                          # (n, nu)
    xl = jnp.where(x >= 0, x, jnp.float32(0.2) * x)         # LeakyReLU(0.2)

    # -------- down: Conv2d(k4, s2, p1, no bias), one fused-K matmul --------
    d = jnp.dot(xl, w1_ref[...], preferred_element_type=jnp.float32)   # (n, nd)
    d = jnp.maximum(d, 0.0)                                 # ReLU (pad columns stay 0)

    # -------- up: ConvTranspose2d(k4, s2, p1, no bias), one fused-K matmul --------
    u = jnp.dot(d, w2_ref[...], preferred_element_type=jnp.float32)    # (n, nu)

    # -------- BatchNorm2d (training-mode batch stats) + skip concat --------
    # Channel co occupies the dense, 2-tile-aligned lane block [co*hw, (co+1)*hw).
    for c in range(cx):
        lo, hi = c * hw, (c + 1) * hw
        blk = u[:, lo:hi]                                   # (n, hw) dense lanes
        mean = jnp.sum(jnp.sum(blk, axis=1, keepdims=True),
                       axis=0, keepdims=True) * inv_cnt     # (1, 1)
        cen = blk - mean
        var = jnp.sum(jnp.sum(cen * cen, axis=1, keepdims=True),
                      axis=0, keepdims=True) * inv_cnt      # (1, 1)
        scale = lax.rsqrt(var + BN_EPS)                     # (1, 1)
        yb = cen * (scale * gb_ref[:, lo:hi]) + bb_ref[:, lo:hi]
        o_ref[:, lo:hi] = yb                                # dense 256-lane store
    o_ref[:, nu:] = x                                       # skip half: dense 1024-lane store


# ---------------------------------------------------------------------------
# One-time weight repacking (hoisted off the forward path).
# ---------------------------------------------------------------------------
def pack_params(wd_torch, wu_torch, gamma, beta):
    """Repack PyTorch conv weights into per-sample Toeplitz matmul weights + BN vectors."""
    wd = np.asarray(wd_torch, dtype=np.float32)   # (Ci, Cx, 4, 4)  Conv2d
    wu = np.asarray(wu_torch, dtype=np.float32)   # (Ci, Cx, 4, 4)  ConvTranspose2d
    ci, cx = wd.shape[0], wd.shape[1]
    hh, wo, hw = H // 2, W // 2, H * W
    kd = cx * hw                                  # flat input length per sample (NCHW)
    nd = (hh + 2) * wo * ci                       # flat (height-padded) d length per sample
    nu = cx * hw                                  # flat u length per sample (NCHW)

    # w1: LeakyReLU(x) (NCHW-flat) -> pre-ReLU d, flat as ((di+1), dj, ci).
    # Columns with di_pad in {0, hh+1} stay zero -> built-in zero pad for the up conv.
    w1 = np.zeros((kd, nd), np.float32)
    for di in range(hh):
        for kh in range(4):
            r = 2 * di + kh - 1
            if not (0 <= r < H):
                continue
            for dj in range(wo):
                for kw in range(4):
                    c = 2 * dj + kw - 1
                    if not (0 <= c < W):
                        continue
                    col0 = ((di + 1) * wo + dj) * ci
                    for cin in range(cx):
                        w1[cin * hw + r * W + c, col0:col0 + ci] = wd[:, cin, kh, kw]

    # w2: ReLU(padded d) -> u, columns NCHW-flat (co, y, x) per sample.
    w2 = np.zeros((nd, nu), np.float32)
    for co in range(cx):
        for y in range(H):
            for kh in range(4):
                if (y + 1 - kh) % 2:
                    continue
                di = (y + 1 - kh) // 2
                if not (0 <= di < hh):
                    continue
                for xcol in range(W):
                    for kw in range(4):
                        if (xcol + 1 - kw) % 2:
                            continue
                        dj = (xcol + 1 - kw) // 2
                        if not (0 <= dj < wo):
                            continue
                        row0 = ((di + 1) * wo + dj) * ci
                        w2[row0:row0 + ci, co * hw + y * W + xcol] = wu[:, co, kh, kw]

    gb = np.repeat(np.asarray(gamma, np.float32), hw)[None, :]   # (1, nu)
    bb = np.repeat(np.asarray(beta, np.float32), hw)[None, :]    # (1, nu)
    return jnp.asarray(w1), jnp.asarray(w2), jnp.asarray(gb), jnp.asarray(bb)


# ---------------------------------------------------------------------------
# Wrapper: free input/output reshapes, one pallas_call, no scratch.
# ---------------------------------------------------------------------------
def unet_innermost_block(x_nchw, w1, w2, gamma_b, beta_b):
    n, cx, h, w = x_nchw.shape
    hw = h * w
    nu = cx * hw
    x2d = x_nchw.reshape(n, nu)                   # free reshape: NCHW-flat per sample

    kernel = functools.partial(_fused_unet_kernel, cx=cx)
    out = pl.pallas_call(
        kernel,
        out_shape=jax.ShapeDtypeStruct((n, 2 * nu), jnp.float32),
        grid=(1,),
        in_specs=[
            pl.BlockSpec((n, nu), lambda i: (0, 0)),
            pl.BlockSpec(w1.shape, lambda i: (0, 0)),
            pl.BlockSpec(w2.shape, lambda i: (0, 0)),
            pl.BlockSpec((1, nu), lambda i: (0, 0)),
            pl.BlockSpec((1, nu), lambda i: (0, 0)),
        ],
        out_specs=pl.BlockSpec((n, 2 * nu), lambda i: (0, 0)),
        compiler_params=pltpu.CompilerParams(
            dimension_semantics=("arbitrary",),
            vmem_limit_bytes=32 * 1024 * 1024,
        ),
    )(x2d, w1, w2, gamma_b, beta_b)

    return out.reshape(n, 2 * cx, h, w)           # pure reshape: same linear layout


# ---------------------------------------------------------------------------
# Pure-JAX reference (same math via XLA convs) for correctness checking.
# ---------------------------------------------------------------------------
def reference(x_nchw, wd_torch, wu_torch, gamma, beta):
    d_in = jnp.where(x_nchw >= 0, x_nchw, 0.2 * x_nchw)
    d = lax.conv_general_dilated(d_in, wd_torch, (2, 2), ((1, 1), (1, 1)),
                                 dimension_numbers=('NCHW', 'OIHW', 'NCHW'))
    u_in = jnp.maximum(d, 0.0)
    w_conv = jnp.transpose(wu_torch[:, :, ::-1, ::-1], (1, 0, 2, 3))
    u = lax.conv_general_dilated(u_in, w_conv, (1, 1), ((2, 2), (2, 2)),
                                 lhs_dilation=(2, 2),
                                 dimension_numbers=('NCHW', 'OIHW', 'NCHW'))
    mean = jnp.mean(u, axis=(0, 2, 3), keepdims=True)
    var = jnp.mean((u - mean) ** 2, axis=(0, 2, 3), keepdims=True)
    y = ((u - mean) * lax.rsqrt(var + BN_EPS) * gamma.reshape(1, -1, 1, 1)
         + beta.reshape(1, -1, 1, 1))
    return jnp.concatenate([y, x_nchw], axis=1)


if __name__ == "__main__":
    key = jax.random.PRNGKey(0)
    k1, k2, k3, k4, k5 = jax.random.split(key, 5)
    x = jax.random.normal(k1, (N, OUTER_NC, H, W), jnp.float32)
    # Conv2d(outer_nc, inner_nc, 4): weight (inner_nc, outer_nc, 4, 4), no bias
    wd = jax.random.normal(k2, (INNER_NC, OUTER_NC, 4, 4), jnp.float32) * 0.1
    # ConvTranspose2d(inner_nc, outer_nc, 4): weight (inner_nc, outer_nc, 4, 4), no bias
    wu = jax.random.normal(k3, (INNER_NC, OUTER_NC, 4, 4), jnp.float32) * 0.1
    # BatchNorm2d(outer_nc) affine params
    gamma = 1.0 + 0.1 * jax.random.normal(k4, (OUTER_NC,), jnp.float32)
    beta = 0.1 * jax.random.normal(k5, (OUTER_NC,), jnp.float32)

    # one-time weight repack (hoisted off the per-forward critical path)
    w1, w2, gb, bb = pack_params(wd, wu, gamma, beta)

    fwd = jax.jit(unet_innermost_block)
    out = jax.block_until_ready(fwd(x, w1, w2, gb, bb))

    ref = reference(x, wd, wu, gamma, beta)
    assert out.shape == (N, 2 * OUTER_NC, H, W), out.shape
    assert jnp.allclose(out, ref, atol=1e-4, rtol=1e-4), \
        float(jnp.max(jnp.abs(out - ref)))
    print("KERNEL_OK")
</pallas_src>

<mosaic_0001>
module attributes {stable_mosaic.version = 11 : i64} {
  func.func @_fused_unet_kernel(%arg0: i32, %arg1: memref<2x1024xf32, #tpu.memory_space<vmem>>, %arg2: memref<1024x640xf32, #tpu.memory_space<vmem>>, %arg3: memref<640x1024xf32, #tpu.memory_space<vmem>>, %arg4: memref<1x1024xf32, #tpu.memory_space<vmem>>, %arg5: memref<1x1024xf32, #tpu.memory_space<vmem>>, %arg6: memref<2x2048xf32, #tpu.memory_space<vmem>>) attributes {dimension_semantics = [#tpu.dimension_semantics<arbitrary>], iteration_bounds = array<i64: 1>, scalar_prefetch = 0 : i64, scratch_operands = 0 : i64, tpu.core_type = #tpu.core_type<tc>, window_params = [{pipeline_mode = #tpu.pipeline_mode<synchronous>, transform_indices = @transform_0, window_bounds = array<i64: 2, 1024>}, {pipeline_mode = #tpu.pipeline_mode<synchronous>, transform_indices = @transform_1, window_bounds = array<i64: 1024, 640>}, {pipeline_mode = #tpu.pipeline_mode<synchronous>, transform_indices = @transform_2, window_bounds = array<i64: 640, 1024>}, {pipeline_mode = #tpu.pipeline_mode<synchronous>, transform_indices = @transform_3, window_bounds = array<i64: 1, 1024>}, {pipeline_mode = #tpu.pipeline_mode<synchronous>, transform_indices = @transform_4, window_bounds = array<i64: 1, 1024>}, {pipeline_mode = #tpu.pipeline_mode<synchronous>, transform_indices = @transform_5, window_bounds = array<i64: 2, 2048>}]} {
    %c0 = arith.constant 0 : index
    %c0_0 = arith.constant 0 : index
    %0 = vector.load %arg1[%c0, %c0_0] : memref<2x1024xf32, #tpu.memory_space<vmem>>, vector<2x1024xf32>
    %cst = arith.constant 0.000000e+00 : f32
    %1 = vector.broadcast %cst : f32 to vector<2x1024xf32>
    %2 = arith.cmpf oge, %0, %1 : vector<2x1024xf32>
    %cst_1 = arith.constant 2.000000e-01 : f32
    %3 = vector.broadcast %cst_1 : f32 to vector<2x1024xf32>
    %4 = arith.mulf %3, %0 : vector<2x1024xf32>
    %5 = arith.select %2, %0, %4 : vector<2x1024xi1>, vector<2x1024xf32>
    %c0_2 = arith.constant 0 : index
    %c0_3 = arith.constant 0 : index
    %6 = vector.load %arg2[%c0_2, %c0_3] : memref<1024x640xf32, #tpu.memory_space<vmem>>, vector<1024x640xf32>
    %cst_4 = arith.constant dense<0.000000e+00> : vector<2x640xf32>
    %7 = tpu.matmul %5, %6, %cst_4 {dimension_numbers = #tpu.dot_dimension_numbers<[1], [0], [0], [1], [0, 0, 1, 1], [], []>} : vector<2x1024xf32>, vector<1024x640xf32>, vector<2x640xf32> -> vector<2x640xf32>
    %cst_5 = arith.constant 0.000000e+00 : f32
    %8 = vector.broadcast %cst_5 : f32 to vector<2x640xf32>
    %9 = arith.maximumf %7, %8 : vector<2x640xf32>
    %c0_6 = arith.constant 0 : index
    %c0_7 = arith.constant 0 : index
    %10 = vector.load %arg3[%c0_6, %c0_7] : memref<640x1024xf32, #tpu.memory_space<vmem>>, vector<640x1024xf32>
    %cst_8 = arith.constant dense<0.000000e+00> : vector<2x1024xf32>
    %11 = tpu.matmul %9, %10, %cst_8 {dimension_numbers = #tpu.dot_dimension_numbers<[1], [0], [0], [1], [0, 0, 1, 1], [], []>} : vector<2x640xf32>, vector<640x1024xf32>, vector<2x1024xf32> -> vector<2x1024xf32>
    %12 = vector.extract_strided_slice %11 {offsets = [0, 0], sizes = [2, 256], strides = [1, 1]} : vector<2x1024xf32> to vector<2x256xf32>
    %cst_9 = arith.constant dense<0.000000e+00> : vector<2xf32>
    %13 = vector.multi_reduction <add>, %12, %cst_9 [1] : vector<2x256xf32> to vector<2xf32>
    %14 = vector.shape_cast %13 : vector<2xf32> to vector<2x1xf32>
    %cst_10 = arith.constant dense<0.000000e+00> : vector<1xf32>
    %15 = vector.multi_reduction <add>, %14, %cst_10 [0] : vector<2x1xf32> to vector<1xf32>
    %16 = vector.shape_cast %15 : vector<1xf32> to vector<1x1xf32>
    %cst_11 = arith.constant 0.001953125 : f32
    %17 = vector.broadcast %cst_11 : f32 to vector<1x1xf32>
    %18 = arith.mulf %16, %17 : vector<1x1xf32>
    %19 = vector.broadcast %18 : vector<1x1xf32> to vector<2x256xf32>
    %20 = arith.subf %12, %19 : vector<2x256xf32>
    %21 = arith.mulf %20, %20 : vector<2x256xf32>
    %cst_12 = arith.constant dense<0.000000e+00> : vector<2xf32>
    %22 = vector.multi_reduction <add>, %21, %cst_12 [1] : vector<2x256xf32> to vector<2xf32>
    %23 = vector.shape_cast %22 : vector<2xf32> to vector<2x1xf32>
    %cst_13 = arith.constant dense<0.000000e+00> : vector<1xf32>
    %24 = vector.multi_reduction <add>, %23, %cst_13 [0] : vector<2x1xf32> to vector<1xf32>
    %25 = vector.shape_cast %24 : vector<1xf32> to vector<1x1xf32>
    %cst_14 = arith.constant 0.001953125 : f32
    %26 = vector.broadcast %cst_14 : f32 to vector<1x1xf32>
    %27 = arith.mulf %25, %26 : vector<1x1xf32>
    %cst_15 = arith.constant 9.99999974E-6 : f32
    %28 = vector.broadcast %cst_15 : f32 to vector<1x1xf32>
    %29 = arith.addf %27, %28 : vector<1x1xf32>
    %30 = math.rsqrt %29 : vector<1x1xf32>
    %c0_16 = arith.constant 0 : index
    %c0_17 = arith.constant 0 : index
    %31 = vector.load %arg4[%c0_16, %c0_17] : memref<1x1024xf32, #tpu.memory_space<vmem>>, vector<1x256xf32>
    %32 = vector.broadcast %30 : vector<1x1xf32> to vector<1x256xf32>
    %33 = arith.mulf %32, %31 : vector<1x256xf32>
    %34 = vector.broadcast %33 : vector<1x256xf32> to vector<2x256xf32>
    %35 = arith.mulf %20, %34 : vector<2x256xf32>
    %c0_18 = arith.constant 0 : index
    %c0_19 = arith.constant 0 : index
    %36 = vector.load %arg5[%c0_18, %c0_19] : memref<1x1024xf32, #tpu.memory_space<vmem>>, vector<1x256xf32>
    %37 = vector.broadcast %36 : vector<1x256xf32> to vector<2x256xf32>
    %38 = arith.addf %35, %37 : vector<2x256xf32>
    %c0_20 = arith.constant 0 : index
    %c0_21 = arith.constant 0 : index
    %39 = vector.load %arg6[%c0_20, %c0_21] : memref<2x2048xf32, #tpu.memory_space<vmem>>, vector<2x256xf32>
    tpu.vector_store %arg6[%c0_20, %c0_21], %38 {strides = array<i32>} : memref<2x2048xf32, #tpu.memory_space<vmem>>, vector<2x256xf32>,
    %40 = vector.extract_strided_slice %11 {offsets = [0, 256], sizes = [2, 256], strides = [1, 1]} : vector<2x1024xf32> to vector<2x256xf32>
    %cst_22 = arith.constant dense<0.000000e+00> : vector<2xf32>
    %41 = vector.multi_reduction <add>, %40, %cst_22 [1] : vector<2x256xf32> to vector<2xf32>
    %42 = vector.shape_cast %41 : vector<2xf32> to vector<2x1xf32>
    %cst_23 = arith.constant dense<0.000000e+00> : vector<1xf32>
    %43 = vector.multi_reduction <add>, %42, %cst_23 [0] : vector<2x1xf32> to vector<1xf32>
    %44 = vector.shape_cast %43 : vector<1xf32> to vector<1x1xf32>
    %cst_24 = arith.constant 0.001953125 : f32
    %45 = vector.broadcast %cst_24 : f32 to vector<1x1xf32>
    %46 = arith.mulf %44, %45 : vector<1x1xf32>
    %47 = vector.broadcast %46 : vector<1x1xf32> to vector<2x256xf32>
    %48 = arith.subf %40, %47 : vector<2x256xf32>
    %49 = arith.mulf %48, %48 : vector<2x256xf32>
    %cst_25 = arith.constant dense<0.000000e+00> : vector<2xf32>
    %50 = vector.multi_reduction <add>, %49, %cst_25 [1] : vector<2x256xf32> to vector<2xf32>
    %51 = vector.shape_cast %50 : vector<2xf32> to vector<2x1xf32>
    %cst_26 = arith.constant dense<0.000000e+00> : vector<1xf32>
    %52 = vector.multi_reduction <add>, %51, %cst_26 [0] : vector<2x1xf32> to vector<1xf32>
    %53 = vector.shape_cast %52 : vector<1xf32> to vector<1x1xf32>
    %cst_27 = arith.constant 0.001953125 : f32
    %54 = vector.broadcast %cst_27 : f32 to vector<1x1xf32>
    %55 = arith.mulf %53, %54 : vector<1x1xf32>
    %cst_28 = arith.constant 9.99999974E-6 : f32
    %56 = vector.broadcast %cst_28 : f32 to vector<1x1xf32>
    %57 = arith.addf %55, %56 : vector<1x1xf32>
    %58 = math.rsqrt %57 : vector<1x1xf32>
    %c0_29 = arith.constant 0 : index
    %c256 = arith.constant 256 : index
    %59 = vector.load %arg4[%c0_29, %c256] : memref<1x1024xf32, #tpu.memory_space<vmem>>, vector<1x256xf32>
    %60 = vector.broadcast %58 : vector<1x1xf32> to vector<1x256xf32>
    %61 = arith.mulf %60, %59 : vector<1x256xf32>
    %62 = vector.broadcast %61 : vector<1x256xf32> to vector<2x256xf32>
    %63 = arith.mulf %48, %62 : vector<2x256xf32>
    %c0_30 = arith.constant 0 : index
    %c256_31 = arith.constant 256 : index
    %64 = vector.load %arg5[%c0_30, %c256_31] : memref<1x1024xf32, #tpu.memory_space<vmem>>, vector<1x256xf32>
    %65 = vector.broadcast %64 : vector<1x256xf32> to vector<2x256xf32>
    %66 = arith.addf %63, %65 : vector<2x256xf32>
    %c0_32 = arith.constant 0 : index
    %c256_33 = arith.constant 256 : index
    %67 = vector.load %arg6[%c0_32, %c256_33] : memref<2x2048xf32, #tpu.memory_space<vmem>>, vector<2x256xf32>
    tpu.vector_store %arg6[%c0_32, %c256_33], %66 {strides = array<i32>} : memref<2x2048xf32, #tpu.memory_space<vmem>>, vector<2x256xf32>,
    %68 = vector.extract_strided_slice %11 {offsets = [0, 512], sizes = [2, 256], strides = [1, 1]} : vector<2x1024xf32> to vector<2x256xf32>
    %cst_34 = arith.constant dense<0.000000e+00> : vector<2xf32>
    %69 = vector.multi_reduction <add>, %68, %cst_34 [1] : vector<2x256xf32> to vector<2xf32>
    %70 = vector.shape_cast %69 : vector<2xf32> to vector<2x1xf32>
    %cst_35 = arith.constant dense<0.000000e+00> : vector<1xf32>
    %71 = vector.multi_reduction <add>, %70, %cst_35 [0] : vector<2x1xf32> to vector<1xf32>
    %72 = vector.shape_cast %71 : vector<1xf32> to vector<1x1xf32>
    %cst_36 = arith.constant 0.001953125 : f32
    %73 = vector.broadcast %cst_36 : f32 to vector<1x1xf32>
    %74 = arith.mulf %72, %73 : vector<1x1xf32>
    %75 = vector.broadcast %74 : vector<1x1xf32> to vector<2x256xf32>
    %76 = arith.subf %68, %75 : vector<2x256xf32>
    %77 = arith.mulf %76, %76 : vector<2x256xf32>
    %cst_37 = arith.constant dense<0.000000e+00> : vector<2xf32>
    %78 = vector.multi_reduction <add>, %77, %cst_37 [1] : vector<2x256xf32> to vector<2xf32>
    %79 = vector.shape_cast %78 : vector<2xf32> to vector<2x1xf32>
    %cst_38 = arith.constant dense<0.000000e+00> : vector<1xf32>
    %80 = vector.multi_reduction <add>, %79, %cst_38 [0] : vector<2x1xf32> to vector<1xf32>
    %81 = vector.shape_cast %80 : vector<1xf32> to vector<1x1xf32>
    %cst_39 = arith.constant 0.001953125 : f32
    %82 = vector.broadcast %cst_39 : f32 to vector<1x1xf32>
    %83 = arith.mulf %81, %82 : vector<1x1xf32>
    %cst_40 = arith.constant 9.99999974E-6 : f32
    %84 = vector.broadcast %cst_40 : f32 to vector<1x1xf32>
    %85 = arith.addf %83, %84 : vector<1x1xf32>
    %86 = math.rsqrt %85 : vector<1x1xf32>
    %c0_41 = arith.constant 0 : index
    %c512 = arith.constant 512 : index
    %87 = vector.load %arg4[%c0_41, %c512] : memref<1x1024xf32, #tpu.memory_space<vmem>>, vector<1x256xf32>
    %88 = vector.broadcast %86 : vector<1x1xf32> to vector<1x256xf32>
    %89 = arith.mulf %88, %87 : vector<1x256xf32>
    %90 = vector.broadcast %89 : vector<1x256xf32> to vector<2x256xf32>
    %91 = arith.mulf %76, %90 : vector<2x256xf32>
    %c0_42 = arith.constant 0 : index
    %c512_43 = arith.constant 512 : index
    %92 = vector.load %arg5[%c0_42, %c512_43] : memref<1x1024xf32, #tpu.memory_space<vmem>>, vector<1x256xf32>
    %93 = vector.broadcast %92 : vector<1x256xf32> to vector<2x256xf32>
    %94 = arith.addf %91, %93 : vector<2x256xf32>
    %c0_44 = arith.constant 0 : index
    %c512_45 = arith.constant 512 : index
    %95 = vector.load %arg6[%c0_44, %c512_45] : memref<2x2048xf32, #tpu.memory_space<vmem>>, vector<2x256xf32>
    tpu.vector_store %arg6[%c0_44, %c512_45], %94 {strides = array<i32>} : memref<2x2048xf32, #tpu.memory_space<vmem>>, vector<2x256xf32>,
    %96 = vector.extract_strided_slice %11 {offsets = [0, 768], sizes = [2, 256], strides = [1, 1]} : vector<2x1024xf32> to vector<2x256xf32>
    %cst_46 = arith.constant dense<0.000000e+00> : vector<2xf32>
    %97 = vector.multi_reduction <add>, %96, %cst_46 [1] : vector<2x256xf32> to vector<2xf32>
    %98 = vector.shape_cast %97 : vector<2xf32> to vector<2x1xf32>
    %cst_47 = arith.constant dense<0.000000e+00> : vector<1xf32>
    %99 = vector.multi_reduction <add>, %98, %cst_47 [0] : vector<2x1xf32> to vector<1xf32>
    %100 = vector.shape_cast %99 : vector<1xf32> to vector<1x1xf32>
    %cst_48 = arith.constant 0.001953125 : f32
    %101 = vector.broadcast %cst_48 : f32 to vector<1x1xf32>
    %102 = arith.mulf %100, %101 : vector<1x1xf32>
    %103 = vector.broadcast %102 : vector<1x1xf32> to vector<2x256xf32>
    %104 = arith.subf %96, %103 : vector<2x256xf32>
    %105 = arith.mulf %104, %104 : vector<2x256xf32>
    %cst_49 = arith.constant dense<0.000000e+00> : vector<2xf32>
    %106 = vector.multi_reduction <add>, %105, %cst_49 [1] : vector<2x256xf32> to vector<2xf32>
    %107 = vector.shape_cast %106 : vector<2xf32> to vector<2x1xf32>
    %cst_50 = arith.constant dense<0.000000e+00> : vector<1xf32>
    %108 = vector.multi_reduction <add>, %107, %cst_50 [0] : vector<2x1xf32> to vector<1xf32>
    %109 = vector.shape_cast %108 : vector<1xf32> to vector<1x1xf32>
    %cst_51 = arith.constant 0.001953125 : f32
    %110 = vector.broadcast %cst_51 : f32 to vector<1x1xf32>
    %111 = arith.mulf %109, %110 : vector<1x1xf32>
    %cst_52 = arith.constant 9.99999974E-6 : f32
    %112 = vector.broadcast %cst_52 : f32 to vector<1x1xf32>
    %113 = arith.addf %111, %112 : vector<1x1xf32>
    %114 = math.rsqrt %113 : vector<1x1xf32>
    %c0_53 = arith.constant 0 : index
    %c768 = arith.constant 768 : index
    %115 = vector.load %arg4[%c0_53, %c768] : memref<1x1024xf32, #tpu.memory_space<vmem>>, vector<1x256xf32>
    %116 = vector.broadcast %114 : vector<1x1xf32> to vector<1x256xf32>
    %117 = arith.mulf %116, %115 : vector<1x256xf32>
    %118 = vector.broadcast %117 : vector<1x256xf32> to vector<2x256xf32>
    %119 = arith.mulf %104, %118 : vector<2x256xf32>
    %c0_54 = arith.constant 0 : index
    %c768_55 = arith.constant 768 : index
    %120 = vector.load %arg5[%c0_54, %c768_55] : memref<1x1024xf32, #tpu.memory_space<vmem>>, vector<1x256xf32>
    %121 = vector.broadcast %120 : vector<1x256xf32> to vector<2x256xf32>
    %122 = arith.addf %119, %121 : vector<2x256xf32>
    %c0_56 = arith.constant 0 : index
    %c768_57 = arith.constant 768 : index
    %123 = vector.load %arg6[%c0_56, %c768_57] : memref<2x2048xf32, #tpu.memory_space<vmem>>, vector<2x256xf32>
    tpu.vector_store %arg6[%c0_56, %c768_57], %122 {strides = array<i32>} : memref<2x2048xf32, #tpu.memory_space<vmem>>, vector<2x256xf32>,
    %c0_58 = arith.constant 0 : index
    %c1024 = arith.constant 1024 : index
    %124 = vector.load %arg6[%c0_58, %c1024] : memref<2x2048xf32, #tpu.memory_space<vmem>>, vector<2x1024xf32>
    tpu.vector_store %arg6[%c0_58, %c1024], %0 {strides = array<i32>} : memref<2x2048xf32, #tpu.memory_space<vmem>>, vector<2x1024xf32>,
    return
  }
  func.func @transform_0(%arg0: i32) -> (i32, i32) {
    %c0_i32 = arith.constant 0 : i32
    %c0_i32_0 = arith.constant 0 : i32
    %c0_i32_1 = arith.constant 0 : i32
    return %c0_i32, %c0_i32_0 : i32, i32
  }
  func.func @transform_1(%arg0: i32) -> (i32, i32) {
    %c0_i32 = arith.constant 0 : i32
    %c0_i32_0 = arith.constant 0 : i32
    %c0_i32_1 = arith.constant 0 : i32
    return %c0_i32, %c0_i32_0 : i32, i32
  }
  func.func @transform_2(%arg0: i32) -> (i32, i32) {
    %c0_i32 = arith.constant 0 : i32
    %c0_i32_0 = arith.constant 0 : i32
    %c0_i32_1 = arith.constant 0 : i32
    return %c0_i32, %c0_i32_0 : i32, i32
  }
  func.func @transform_3(%arg0: i32) -> (i32, i32) {
    %c0_i32 = arith.constant 0 : i32
    %c0_i32_0 = arith.constant 0 : i32
    %c0_i32_1 = arith.constant 0 : i32
    return %c0_i32, %c0_i32_0 : i32, i32
  }
  func.func @transform_4(%arg0: i32) -> (i32, i32) {
    %c0_i32 = arith.constant 0 : i32
    %c0_i32_0 = arith.constant 0 : i32
    %c0_i32_1 = arith.constant 0 : i32
    return %c0_i32, %c0_i32_0 : i32, i32
  }
  func.func @transform_5(%arg0: i32) -> (i32, i32) {
    %c0_i32 = arith.constant 0 : i32
    %c0_i32_0 = arith.constant 0 : i32
    %c0_i32_1 = arith.constant 0 : i32
    return %c0_i32, %c0_i32_0 : i32, i32
  }
}

</mosaic_0001>

<llo_original>
// kernel: unet_innermost_block.1
$region0: #{unet_innermost_block.1}
  #allocation0 [shape = 'u32[]', space=smem, size = 0x4, offset = 0x4, fixed_abs, tag = 'smem constant byte address 0x4 - core index']
  #allocation1 [shape = 'u32[144,128]{1,0:T(1,128)}', space=vmem, size = 0x12000, scoped, tag = 'internal scratch']
  %s0 = inlined_call_operand.vmem [shape: f32[2,1024], index: 0, kind: input, shape index: {}]
  %s1 = inlined_call_operand.hbm [shape: f32[1024,640], index: 1, kind: input, shape index: {}]
  %s2 = inlined_call_operand.hbm [shape: f32[640,1024], index: 2, kind: input, shape index: {}]
  %s3 = inlined_call_operand.hbm [shape: f32[1,1024], index: 3, kind: input, shape index: {}]
  %s4 = inlined_call_operand.hbm [shape: f32[1,1024], index: 4, kind: input, shape index: {}]
  %s5 = inlined_call_operand.vmem [shape: f32[2,2048], index: 5, kind: output, shape index: {}]
  %s6 = sld [smem:[#allocation0]]
  $region46: #{unet_innermost_block.1} parent=0
    _
  %s8 = ssub.s32 1, %s6
  %s9 = scalar_select 0, %s8, %s6
  $region1: #{unet_innermost_block.1} parent=0
    #allocation2 [shape = 'u8[2621440]{0}', space=vmem, size = 0x280000, scoped, tag = 'input window, operand 1, single buffered']
    #allocation3 [shape = 's32[1]{0}', space=sflag, size = 0x4, scoped, tag = 'scoped memory for unet_innermost_block.1']
    #allocation4 [shape = 'u8[2621440]{0}', space=vmem, size = 0x280000, scoped, tag = 'input window, operand 2, single buffered']
    #allocation5 [shape = 's32[1]{0}', space=sflag, size = 0x4, scoped, tag = 'scoped memory for unet_innermost_block.1']
    #allocation6 [shape = 'u8[4096]{0}', space=vmem, size = 0x1000, scoped, tag = 'input window, operand 3, single buffered']
    #allocation7 [shape = 'u8[4096]{0}', space=vmem, size = 0x1000, scoped, tag = 'input window, operand 4, single buffered']
    #allocation8 [shape = 's32[1]{0}', space=sflag, size = 0x4, scoped, tag = 'scoped memory for unet_innermost_block.1']
    %10 = vsyncpa [#allocation3], 0
    %11 = vsyncpa [#allocation5], 0
    %12 = vsyncpa [#allocation8], 0
    // Predicated region
    $region2: #{unet_innermost_block.1} parent=1 // pred_check
      _
    $region3: #{unet_innermost_block.1} parent=1 // pred_check_branch
      %14 = sbr.rel (0) target = $region5
    $region4: #{unet_innermost_block.1} parent=1 // pred_region
      _
    $region5: #{unet_innermost_block.1} parent=1 // pred_fallthru
      _
    // Predicated region
    $region6: #{unet_innermost_block.1} parent=1 // pred_check
      _
    $region7: #{unet_innermost_block.1} parent=1 // pred_check_branch
      %16 = sbr.rel (0) target = $region9
    $region8: #{unet_innermost_block.1} parent=1 // pred_region
      %s18 = ssub.s32 81920, 81920
      %19 = vsyncadd [#allocation3], %s18
      %s20 = sshll.u32 [#allocation2], 4
      %s21 = int_to_ptr.vmem [resolvable:$true] %s20
      %26 = dma.hbm_to_vmem [thread:$0]  %s1, 81920, %s21, [#allocation3], 640, 640, 40
    $region9: #{unet_innermost_block.1} parent=1 // pred_fallthru
      _
    // Predicated region
    $region10: #{unet_innermost_block.1} parent=1 // pred_check
      _
    $region11: #{unet_innermost_block.1} parent=1 // pred_check_branch
      %28 = sbr.rel (0) target = $region13
    $region12: #{unet_innermost_block.1} parent=1 // pred_region
      %s30 = ssub.s32 81920, 81920
      %31 = vsyncadd [#allocation5], %s30
      %s32 = sshll.u32 [#allocation4], 4
      %s33 = int_to_ptr.vmem [resolvable:$true] %s32
      %38 = dma.hbm_to_vmem [thread:$0]  %s2, 81920, %s33, [#allocation5], 1024, 1024, 64
    $region13: #{unet_innermost_block.1} parent=1 // pred_fallthru
      _
    // Predicated region
    $region14: #{unet_innermost_block.1} parent=1 // pred_check
      _
    $region15: #{unet_innermost_block.1} parent=1 // pred_check_branch
      %40 = sbr.rel (0) target = $region17
    $region16: #{unet_innermost_block.1} parent=1 // pred_region
      %s42 = ssub.s32 128, 128
      %43 = vsyncadd [#allocation5], %s42
      %s45 = sshll.u32 [#allocation6], 4
      %s46 = int_to_ptr.vmem [resolvable:$true] %s45
      %48 = dma.hbm_to_vmem [thread:$0]  %s3, 128, %s46, [#allocation5]
    $region17: #{unet_innermost_block.1} parent=1 // pred_fallthru
      _
    // Predicated region
    $region18: #{unet_innermost_block.1} parent=1 // pred_check
      _
    $region19: #{unet_innermost_block.1} parent=1 // pred_check_branch
      %50 = sbr.rel (0) target = $region21
    $region20: #{unet_innermost_block.1} parent=1 // pred_region
      %s52 = ssub.s32 128, 128
      %53 = vsyncadd [#allocation8], %s52
      %s55 = sshll.u32 [#allocation7], 4
      %s56 = int_to_ptr.vmem [resolvable:$true] %s55
      %58 = dma.hbm_to_vmem [thread:$0]  %s4, 128, %s56, [#allocation8]
    $region21: #{unet_innermost_block.1} parent=1 // pred_fallthru
      _
    // Predicated region
    $region22: #{unet_innermost_block.1} parent=1 // pred_check
      _
    $region23: #{unet_innermost_block.1} parent=1 // pred_check_branch
      %60 = sbr.rel (0) target = $region25
    $region24: #{unet_innermost_block.1} parent=1 // pred_region
      %61 = dma.done [#allocation3], 81920
    $region25: #{unet_innermost_block.1} parent=1 // pred_fallthru
      _
    // Predicated region
    $region26: #{unet_innermost_block.1} parent=1 // pred_check
      _
    $region27: #{unet_innermost_block.1} parent=1 // pred_check_branch
      %63 = sbr.rel (0) target = $region29
    $region28: #{unet_innermost_block.1} parent=1 // pred_region
      %64 = dma.done [#allocation5], 81920
    $region29: #{unet_innermost_block.1} parent=1 // pred_fallthru
      _
    // Predicated region
    $region30: #{unet_innermost_block.1} parent=1 // pred_check
      _
    $region31: #{unet_innermost_block.1} parent=1 // pred_check_branch
      %66 = sbr.rel (0) target = $region33
    $region32: #{unet_innermost_block.1} parent=1 // pred_region
      %67 = dma.done [#allocation5], 128
    $region33: #{unet_innermost_block.1} parent=1 // pred_fallthru
      _
    // Predicated region
    $region34: #{unet_innermost_block.1} parent=1 // pred_check
      _
    $region35: #{unet_innermost_block.1} parent=1 // pred_check_branch
      %69 = sbr.rel (0) target = $region37
    $region36: #{unet_innermost_block.1} parent=1 // pred_region
      %70 = dma.done [#allocation8], 128
    $region37: #{unet_innermost_block.1} parent=1 // pred_fallthru
      _
    %v71 = vld [vmem:[%s0] sm:$0xff]
    %v72 = vld [vmem:[%s0 + $0x8] sm:$0xff]
    %vm73 = vcmp.ge.f32.partialorder %v71, 0.0
    %vm74 = vcmp.ge.f32.partialorder %v72, 0.0
    %v75 = vmul.f32 %v71, 0.2
    %v76 = vmul.f32 %v72, 0.2
    %v77 = vsel %vm73, %v71, %v75
    %v78 = vsel %vm74, %v72, %v76
    %v79 = vld [vmem:[#allocation2] sm:$0xff]
    %v80 = vld [vmem:[#allocation2 + $0x8] sm:$0xff]
    %v81 = vld [vmem:[#allocation2 + $0x10] sm:$0xff]
    %v82 = vld [vmem:[#allocation2 + $0x18] sm:$0xff]
    %v83 = vld [vmem:[#allocation2 + $0x20] sm:$0xff]
    %v84 = vld [vmem:[#allocation2 + $0x28] sm:$0xff]
    %v85 = vld [vmem:[#allocation2 + $0x30] sm:$0xff]
    %v86 = vld [vmem:[#allocation2 + $0x38] sm:$0xff]
    %v87 = vld [vmem:[#allocation2 + $0x40] sm:$0xff]
    %v88 = vld [vmem:[#allocation2 + $0x48] sm:$0xff]
    %v89 = vld [vmem:[#allocation2 + $0x50] sm:$0xff]
    %v90 = vld [vmem:[#allocation2 + $0x58] sm:$0xff]
    %v91 = vld [vmem:[#allocation2 + $0x60] sm:$0xff]
    %v92 = vld [vmem:[#allocation2 + $0x68] sm:$0xff]
    %v93 = vld [vmem:[#allocation2 + $0x70] sm:$0xff]
    %v94 = vld [vmem:[#allocation2 + $0x78] sm:$0xff]
    %v95 = vld [vmem:[#allocation2 + $0x80] sm:$0xff]
    %v96 = vld [vmem:[#allocation2 + $0x88] sm:$0xff]
    %v97 = vld [vmem:[#allocation2 + $0x90] sm:$0xff]
    %v98 = vld [vmem:[#allocation2 + $0x98] sm:$0xff]
    %v99 = vld [vmem:[#allocation2 + $0xa0] sm:$0xff]
    %v100 = vld [vmem:[#allocation2 + $0xa8] sm:$0xff]
    %v101 = vld [vmem:[#allocation2 + $0xb0] sm:$0xff]
    %v102 = vld [vmem:[#allocation2 + $0xb8] sm:$0xff]
    %v103 = vld [vmem:[#allocation2 + $0xc0] sm:$0xff]
    %v104 = vld [vmem:[#allocation2 + $0xc8] sm:$0xff]
    %v105 = vld [vmem:[#allocation2 + $0xd0] sm:$0xff]
    %v106 = vld [vmem:[#allocation2 + $0xd8] sm:$0xff]
    %v107 = vld [vmem:[#allocation2 + $0xe0] sm:$0xff]
    %v108 = vld [vmem:[#allocation2 + $0xe8] sm:$0xff]
    %v109 = vld [vmem:[#allocation2 + $0xf0] sm:$0xff]
    %v110 = vld [vmem:[#allocation2 + $0xf8] sm:$0xff]
    %v111 = vld [vmem:[#allocation2 + $0x100] sm:$0xff]
    %v112 = vld [vmem:[#allocation2 + $0x108] sm:$0xff]
    %v113 = vld [vmem:[#allocation2 + $0x110] sm:$0xff]
    %v114 = vld [vmem:[#allocation2 + $0x118] sm:$0xff]
    %v115 = vld [vmem:[#allocation2 + $0x120] sm:$0xff]
    %v116 = vld [vmem:[#allocation2 + $0x128] sm:$0xff]
    %v117 = vld [vmem:[#allocation2 + $0x130] sm:$0xff]
    %v118 = vld [vmem:[#allocation2 + $0x138] sm:$0xff]
    %v119 = vld [vmem:[#allocation2 + $0x140] sm:$0xff]
    %v120 = vld [vmem:[#allocation2 + $0x148] sm:$0xff]
    %v121 = vld [vmem:[#allocation2 + $0x150] sm:$0xff]
    %v122 = vld [vmem:[#allocation2 + $0x158] sm:$0xff]
    %v123 = vld [vmem:[#allocation2 + $0x160] sm:$0xff]
    %v124 = vld [vmem:[#allocation2 + $0x168] sm:$0xff]
    %v125 = vld [vmem:[#allocation2 + $0x170] sm:$0xff]
    %v126 = vld [vmem:[#allocation2 + $0x178] sm:$0xff]
    %v127 = vld [vmem:[#allocation2 + $0x180] sm:$0xff]
    %v128 = vld [vmem:[#allocation2 + $0x188] sm:$0xff]
    %v129 = vld [vmem:[#allocation2 + $0x190] sm:$0xff]
    %v130 = vld [vmem:[#allocation2 + $0x198] sm:$0xff]
    %v131 = vld [vmem:[#allocation2 + $0x1a0] sm:$0xff]
    %v132 = vld [vmem:[#allocation2 + $0x1a8] sm:$0xff]
    %v133 = vld [vmem:[#allocation2 + $0x1b0] sm:$0xff]
    %v134 = vld [vmem:[#allocation2 + $0x1b8] sm:$0xff]
    %v135 = vld [vmem:[#allocation2 + $0x1c0] sm:$0xff]
    %v136 = vld [vmem:[#allocation2 + $0x1c8] sm:$0xff]
    %v137 = vld [vmem:[#allocation2 + $0x1d0] sm:$0xff]
    %v138 = vld [vmem:[#allocation2 + $0x1d8] sm:$0xff]
    %v139 = vld [vmem:[#allocation2 + $0x1e0] sm:$0xff]
    %v140 = vld [vmem:[#allocation2 + $0x1e8] sm:$0xff]
    %v141 = vld [vmem:[#allocation2 + $0x1f0] sm:$0xff]
    %v142 = vld [vmem:[#allocation2 + $0x1f8] sm:$0xff]
    %v143 = vld [vmem:[#allocation2 + $0x200] sm:$0xff]
    %v144 = vld [vmem:[#allocation2 + $0x208] sm:$0xff]
    %v145 = vld [vmem:[#allocation2 + $0x210] sm:$0xff]
    %v146 = vld [vmem:[#allocation2 + $0x218] sm:$0xff]
    %v147 = vld [vmem:[#allocation2 + $0x220] sm:$0xff]
    %v148 = vld [vmem:[#allocation2 + $0x228] sm:$0xff]
    %v149 = vld [vmem:[#allocation2 + $0x230] sm:$0xff]
    %v150 = vld [vmem:[#allocation2 + $0x238] sm:$0xff]
    %v151 = vld [vmem:[#allocation2 + $0x240] sm:$0xff]
    %v152 = vld [vmem:[#allocation2 + $0x248] sm:$0xff]
    %v153 = vld [vmem:[#allocation2 + $0x250] sm:$0xff]
    %v154 = vld [vmem:[#allocation2 + $0x258] sm:$0xff]
    %v155 = vld [vmem:[#allocation2 + $0x260] sm:$0xff]
    %v156 = vld [vmem:[#allocation2 + $0x268] sm:$0xff]
    %v157 = vld [vmem:[#allocation2 + $0x270] sm:$0xff]
    %v158 = vld [vmem:[#allocation2 + $0x278] sm:$0xff]
    %v159 = vld [vmem:[#allocation2 + $0x280] sm:$0xff]
    %v160 = vld [vmem:[#allocation2 + $0x288] sm:$0xff]
    %v161 = vld [vmem:[#allocation2 + $0x290] sm:$0xff]
    %v162 = vld [vmem:[#allocation2 + $0x298] sm:$0xff]
    %v163 = vld [vmem:[#allocation2 + $0x2a0] sm:$0xff]
    %v164 = vld [vmem:[#allocation2 + $0x2a8] sm:$0xff]
    %v165 = vld [vmem:[#allocation2 + $0x2b0] sm:$0xff]
    %v166 = vld [vmem:[#allocation2 + $0x2b8] sm:$0xff]
    %v167 = vld [vmem:[#allocation2 + $0x2c0] sm:$0xff]
    %v168 = vld [vmem:[#allocation2 + $0x2c8] sm:$0xff]
    %v169 = vld [vmem:[#allocation2 + $0x2d0] sm:$0xff]
    %v170 = vld [vmem:[#allocation2 + $0x2d8] sm:$0xff]
    %v171 = vld [vmem:[#allocation2 + $0x2e0] sm:$0xff]
    %v172 = vld [vmem:[#allocation2 + $0x2e8] sm:$0xff]
    %v173 = vld [vmem:[#allocation2 + $0x2f0] sm:$0xff]
    %v174 = vld [vmem:[#allocation2 + $0x2f8] sm:$0xff]
    %v175 = vld [vmem:[#allocation2 + $0x300] sm:$0xff]
    %v176 = vld [vmem:[#allocation2 + $0x308] sm:$0xff]
    %v177 = vld [vmem:[#allocation2 + $0x310] sm:$0xff]
    %v178 = vld [vmem:[#allocation2 + $0x318] sm:$0xff]
    %v179 = vld [vmem:[#allocation2 + $0x320] sm:$0xff]
    %v180 = vld [vmem:[#allocation2 + $0x328] sm:$0xff]
    %v181 = vld [vmem:[#allocation2 + $0x330] sm:$0xff]
    %v182 = vld [vmem:[#allocation2 + $0x338] sm:$0xff]
    %v183 = vld [vmem:[#allocation2 + $0x340] sm:$0xff]
    %v184 = vld [vmem:[#allocation2 + $0x348] sm:$0xff]
    %v185 = vld [vmem:[#allocation2 + $0x350] sm:$0xff]
    %v186 = vld [vmem:[#allocation2 + $0x358] sm:$0xff]
    %v187 = vld [vmem:[#allocation2 + $0x360] sm:$0xff]
    %v188 = vld [vmem:[#allocation2 + $0x368] sm:$0xff]
    %v189 = vld [vmem:[#allocation2 + $0x370] sm:$0xff]
    %v190 = vld [vmem:[#allocation2 + $0x378] sm:$0xff]
    %v191 = vld [vmem:[#allocation2 + $0x380] sm:$0xff]
    %v192 = vld [vmem:[#allocation2 + $0x388] sm:$0xff]
    %v193 = vld [vmem:[#allocation2 + $0x390] sm:$0xff]
    %v194 = vld [vmem:[#allocation2 + $0x398] sm:$0xff]
    %v195 = vld [vmem:[#allocation2 + $0x3a0] sm:$0xff]
    %v196 = vld [vmem:[#allocation2 + $0x3a8] sm:$0xff]
    %v197 = vld [vmem:[#allocation2 + $0x3b0] sm:$0xff]
    %v198 = vld [vmem:[#allocation2 + $0x3b8] sm:$0xff]
    %v199 = vld [vmem:[#allocation2 + $0x3c0] sm:$0xff]
    %v200 = vld [vmem:[#allocation2 + $0x3c8] sm:$0xff]
    %v201 = vld [vmem:[#allocation2 + $0x3d0] sm:$0xff]
    %v202 = vld [vmem:[#allocation2 + $0x3d8] sm:$0xff]
    %v203 = vld [vmem:[#allocation2 + $0x3e0] sm:$0xff]
    %v204 = vld [vmem:[#allocation2 + $0x3e8] sm:$0xff]
    %v205 = vld [vmem:[#allocation2 + $0x3f0] sm:$0xff]
    %v206 = vld [vmem:[#allocation2 + $0x3f8] sm:$0xff]
    %v207 = vld [vmem:[#allocation2 + $0x400] sm:$0xff]
    %v208 = vld [vmem:[#allocation2 + $0x408] sm:$0xff]
    %v209 = vld [vmem:[#allocation2 + $0x410] sm:$0xff]
    %v210 = vld [vmem:[#allocation2 + $0x418] sm:$0xff]
    %v211 = vld [vmem:[#allocation2 + $0x420] sm:$0xff]
    %v212 = vld [vmem:[#allocation2 + $0x428] sm:$0xff]
    %v213 = vld [vmem:[#allocation2 + $0x430] sm:$0xff]
    %v214 = vld [vmem:[#allocation2 + $0x438] sm:$0xff]
    %v215 = vld [vmem:[#allocation2 + $0x440] sm:$0xff]
    %v216 = vld [vmem:[#allocation2 + $0x448] sm:$0xff]
    %v217 = vld [vmem:[#allocation2 + $0x450] sm:$0xff]
    %v218 = vld [vmem:[#allocation2 + $0x458] sm:$0xff]
    %v219 = vld [vmem:[#allocation2 + $0x460] sm:$0xff]
    %v220 = vld [vmem:[#allocation2 + $0x468] sm:$0xff]
    %v221 = vld [vmem:[#allocation2 + $0x470] sm:$0xff]
    %v222 = vld [vmem:[#allocation2 + $0x478] sm:$0xff]
    %v223 = vld [vmem:[#allocation2 + $0x480] sm:$0xff]
    %v224 = vld [vmem:[#allocation2 + $0x488] sm:$0xff]
    %v225 = vld [vmem:[#allocation2 + $0x490] sm:$0xff]
    %v226 = vld [vmem:[#allocation2 + $0x498] sm:$0xff]
    %v227 = vld [vmem:[#allocation2 + $0x4a0] sm:$0xff]
    %v228 = vld [vmem:[#allocation2 + $0x4a8] sm:$0xff]
    %v229 = vld [vmem:[#allocation2 + $0x4b0] sm:$0xff]
    %v230 = vld [vmem:[#allocation2 + $0x4b8] sm:$0xff]
    %v231 = vld [vmem:[#allocation2 + $0x4c0] sm:$0xff]
    %v232 = vld [vmem:[#allocation2 + $0x4c8] sm:$0xff]
    %v233 = vld [vmem:[#allocation2 + $0x4d0] sm:$0xff]
    %v234 = vld [vmem:[#allocation2 + $0x4d8] sm:$0xff]
    %v235 = vld [vmem:[#allocation2 + $0x4e0] sm:$0xff]
    %v236 = vld [vmem:[#allocation2 + $0x4e8] sm:$0xff]
    %v237 = vld [vmem:[#allocation2 + $0x4f0] sm:$0xff]
    %v238 = vld [vmem:[#allocation2 + $0x4f8] sm:$0xff]
    %v239 = vld [vmem:[#allocation2 + $0x500] sm:$0xff]
    %v240 = vld [vmem:[#allocation2 + $0x508] sm:$0xff]
    %v241 = vld [vmem:[#allocation2 + $0x510] sm:$0xff]
    %v242 = vld [vmem:[#allocation2 + $0x518] sm:$0xff]
    %v243 = vld [vmem:[#allocation2 + $0x520] sm:$0xff]
    %v244 = vld [vmem:[#allocation2 + $0x528] sm:$0xff]
    %v245 = vld [vmem:[#allocation2 + $0x530] sm:$0xff]
    %v246 = vld [vmem:[#allocation2 + $0x538] sm:$0xff]
    %v247 = vld [vmem:[#allocation2 + $0x540] sm:$0xff]
    %v248 = vld [vmem:[#allocation2 + $0x548] sm:$0xff]
    %v249 = vld [vmem:[#allocation2 + $0x550] sm:$0xff]
    %v250 = vld [vmem:[#allocation2 + $0x558] sm:$0xff]
    %v251 = vld [vmem:[#allocation2 + $0x560] sm:$0xff]
    %v252 = vld [vmem:[#allocation2 + $0x568] sm:$0xff]
    %v253 = vld [vmem:[#allocation2 + $0x570] sm:$0xff]
    %v254 = vld [vmem:[#allocation2 + $0x578] sm:$0xff]
    %v255 = vld [vmem:[#allocation2 + $0x580] sm:$0xff]
    %v256 = vld [vmem:[#allocation2 + $0x588] sm:$0xff]
    %v257 = vld [vmem:[#allocation2 + $0x590] sm:$0xff]
    %v258 = vld [vmem:[#allocation2 + $0x598] sm:$0xff]
    %v259 = vld [vmem:[#allocation2 + $0x5a0] sm:$0xff]
    %v260 = vld [vmem:[#allocation2 + $0x5a8] sm:$0xff]
    %v261 = vld [vmem:[#allocation2 + $0x5b0] sm:$0xff]
    %v262 = vld [vmem:[#allocation2 + $0x5b8] sm:$0xff]
    %v263 = vld [vmem:[#allocation2 + $0x5c0] sm:$0xff]
    %v264 = vld [vmem:[#allocation2 + $0x5c8] sm:$0xff]
    %v265 = vld [vmem:[#allocation2 + $0x5d0] sm:$0xff]
    %v266 = vld [vmem:[#allocation2 + $0x5d8] sm:$0xff]
    %v267 = vld [vmem:[#allocation2 + $0x5e0] sm:$0xff]
    %v268 = vld [vmem:[#allocation2 + $0x5e8] sm:$0xff]
    %v269 = vld [vmem:[#allocation2 + $0x5f0] sm:$0xff]
    %v270 = vld [vmem:[#allocation2 + $0x5f8] sm:$0xff]
    %v271 = vld [vmem:[#allocation2 + $0x600] sm:$0xff]
    %v272 = vld [vmem:[#allocation2 + $0x608] sm:$0xff]
    %v273 = vld [vmem:[#allocation2 + $0x610] sm:$0xff]
    %v274 = vld [vmem:[#allocation2 + $0x618] sm:$0xff]
    %v275 = vld [vmem:[#allocation2 + $0x620] sm:$0xff]
    %v276 = vld [vmem:[#allocation2 + $0x628] sm:$0xff]
    %v277 = vld [vmem:[#allocation2 + $0x630] sm:$0xff]
    %v278 = vld [vmem:[#allocation2 + $0x638] sm:$0xff]
    %v279 = vld [vmem:[#allocation2 + $0x640] sm:$0xff]
    %v280 = vld [vmem:[#allocation2 + $0x648] sm:$0xff]
    %v281 = vld [vmem:[#allocation2 + $0x650] sm:$0xff]
    %v282 = vld [vmem:[#allocation2 + $0x658] sm:$0xff]
    %v283 = vld [vmem:[#allocation2 + $0x660] sm:$0xff]
    %v284 = vld [vmem:[#allocation2 + $0x668] sm:$0xff]
    %v285 = vld [vmem:[#allocation2 + $0x670] sm:$0xff]
    %v286 = vld [vmem:[#allocation2 + $0x678] sm:$0xff]
    %v287 = vld [vmem:[#allocation2 + $0x680] sm:$0xff]
    %v288 = vld [vmem:[#allocation2 + $0x688] sm:$0xff]
    %v289 = vld [vmem:[#allocation2 + $0x690] sm:$0xff]
    %v290 = vld [vmem:[#allocation2 + $0x698] sm:$0xff]
    %v291 = vld [vmem:[#allocation2 + $0x6a0] sm:$0xff]
    %v292 = vld [vmem:[#allocation2 + $0x6a8] sm:$0xff]
    %v293 = vld [vmem:[#allocation2 + $0x6b0] sm:$0xff]
    %v294 = vld [vmem:[#allocation2 + $0x6b8] sm:$0xff]
    %v295 = vld [vmem:[#allocation2 + $0x6c0] sm:$0xff]
    %v296 = vld [vmem:[#allocation2 + $0x6c8] sm:$0xff]
    %v297 = vld [vmem:[#allocation2 + $0x6d0] sm:$0xff]
    %v298 = vld [vmem:[#allocation2 + $0x6d8] sm:$0xff]
    %v299 = vld [vmem:[#allocation2 + $0x6e0] sm:$0xff]
    %v300 = vld [vmem:[#allocation2 + $0x6e8] sm:$0xff]
    %v301 = vld [vmem:[#allocation2 + $0x6f0] sm:$0xff]
    %v302 = vld [vmem:[#allocation2 + $0x6f8] sm:$0xff]
    %v303 = vld [vmem:[#allocation2 + $0x700] sm:$0xff]
    %v304 = vld [vmem:[#allocation2 + $0x708] sm:$0xff]
    %v305 = vld [vmem:[#allocation2 + $0x710] sm:$0xff]
    %v306 = vld [vmem:[#allocation2 + $0x718] sm:$0xff]
    %v307 = vld [vmem:[#allocation2 + $0x720] sm:$0xff]
    %v308 = vld [vmem:[#allocation2 + $0x728] sm:$0xff]
    %v309 = vld [vmem:[#allocation2 + $0x730] sm:$0xff]
    %v310 = vld [vmem:[#allocation2 + $0x738] sm:$0xff]
    %v311 = vld [vmem:[#allocation2 + $0x740] sm:$0xff]
    %v312 = vld [vmem:[#allocation2 + $0x748] sm:$0xff]
    %v313 = vld [vmem:[#allocation2 + $0x750] sm:$0xff]
    %v314 = vld [vmem:[#allocation2 + $0x758] sm:$0xff]
    %v315 = vld [vmem:[#allocation2 + $0x760] sm:$0xff]
    %v316 = vld [vmem:[#allocation2 + $0x768] sm:$0xff]
    %v317 = vld [vmem:[#allocation2 + $0x770] sm:$0xff]
    %v318 = vld [vmem:[#allocation2 + $0x778] sm:$0xff]
    %v319 = vld [vmem:[#allocation2 + $0x780] sm:$0xff]
    %v320 = vld [vmem:[#allocation2 + $0x788] sm:$0xff]
    %v321 = vld [vmem:[#allocation2 + $0x790] sm:$0xff]
    %v322 = vld [vmem:[#allocation2 + $0x798] sm:$0xff]
    %v323 = vld [vmem:[#allocation2 + $0x7a0] sm:$0xff]
    %v324 = vld [vmem:[#allocation2 + $0x7a8] sm:$0xff]
    %v325 = vld [vmem:[#allocation2 + $0x7b0] sm:$0xff]
    %v326 = vld [vmem:[#allocation2 + $0x7b8] sm:$0xff]
    %v327 = vld [vmem:[#allocation2 + $0x7c0] sm:$0xff]
    %v328 = vld [vmem:[#allocation2 + $0x7c8] sm:$0xff]
    %v329 = vld [vmem:[#allocation2 + $0x7d0] sm:$0xff]
    %v330 = vld [vmem:[#allocation2 + $0x7d8] sm:$0xff]
    %v331 = vld [vmem:[#allocation2 + $0x7e0] sm:$0xff]
    %v332 = vld [vmem:[#allocation2 + $0x7e8] sm:$0xff]
    %v333 = vld [vmem:[#allocation2 + $0x7f0] sm:$0xff]
    %v334 = vld [vmem:[#allocation2 + $0x7f8] sm:$0xff]
    %v335 = vld [vmem:[#allocation2 + $0x800] sm:$0xff]
    %v336 = vld [vmem:[#allocation2 + $0x808] sm:$0xff]
    %v337 = vld [vmem:[#allocation2 + $0x810] sm:$0xff]
    %v338 = vld [vmem:[#allocation2 + $0x818] sm:$0xff]
    %v339 = vld [vmem:[#allocation2 + $0x820] sm:$0xff]
    %v340 = vld [vmem:[#allocation2 + $0x828] sm:$0xff]
    %v341 = vld [vmem:[#allocation2 + $0x830] sm:$0xff]
    %v342 = vld [vmem:[#allocation2 + $0x838] sm:$0xff]
    %v343 = vld [vmem:[#allocation2 + $0x840] sm:$0xff]
    %v344 = vld [vmem:[#allocation2 + $0x848] sm:$0xff]
    %v345 = vld [vmem:[#allocation2 + $0x850] sm:$0xff]
    %v346 = vld [vmem:[#allocation2 + $0x858] sm:$0xff]
    %v347 = vld [vmem:[#allocation2 + $0x860] sm:$0xff]
    %v348 = vld [vmem:[#allocation2 + $0x868] sm:$0xff]
    %v349 = vld [vmem:[#allocation2 + $0x870] sm:$0xff]
    %v350 = vld [vmem:[#allocation2 + $0x878] sm:$0xff]
    %v351 = vld [vmem:[#allocation2 + $0x880] sm:$0xff]
    %v352 = vld [vmem:[#allocation2 + $0x888] sm:$0xff]
    %v353 = vld [vmem:[#allocation2 + $0x890] sm:$0xff]
    %v354 = vld [vmem:[#allocation2 + $0x898] sm:$0xff]
    %v355 = vld [vmem:[#allocation2 + $0x8a0] sm:$0xff]
    %v356 = vld [vmem:[#allocation2 + $0x8a8] sm:$0xff]
    %v357 = vld [vmem:[#allocation2 + $0x8b0] sm:$0xff]
    %v358 = vld [vmem:[#allocation2 + $0x8b8] sm:$0xff]
    %v359 = vld [vmem:[#allocation2 + $0x8c0] sm:$0xff]
    %v360 = vld [vmem:[#allocation2 + $0x8c8] sm:$0xff]
    %v361 = vld [vmem:[#allocation2 + $0x8d0] sm:$0xff]
    %v362 = vld [vmem:[#allocation2 + $0x8d8] sm:$0xff]
    %v363 = vld [vmem:[#allocation2 + $0x8e0] sm:$0xff]
    %v364 = vld [vmem:[#allocation2 + $0x8e8] sm:$0xff]
    %v365 = vld [vmem:[#allocation2 + $0x8f0] sm:$0xff]
    %v366 = vld [vmem:[#allocation2 + $0x8f8] sm:$0xff]
    %v367 = vld [vmem:[#allocation2 + $0x900] sm:$0xff]
    %v368 = vld [vmem:[#allocation2 + $0x908] sm:$0xff]
    %v369 = vld [vmem:[#allocation2 + $0x910] sm:$0xff]
    %v370 = vld [vmem:[#allocation2 + $0x918] sm:$0xff]
    %v371 = vld [vmem:[#allocation2 + $0x920] sm:$0xff]
    %v372 = vld [vmem:[#allocation2 + $0x928] sm:$0xff]
    %v373 = vld [vmem:[#allocation2 + $0x930] sm:$0xff]
    %v374 = vld [vmem:[#allocation2 + $0x938] sm:$0xff]
    %v375 = vld [vmem:[#allocation2 + $0x940] sm:$0xff]
    %v376 = vld [vmem:[#allocation2 + $0x948] sm:$0xff]
    %v377 = vld [vmem:[#allocation2 + $0x950] sm:$0xff]
    %v378 = vld [vmem:[#allocation2 + $0x958] sm:$0xff]
    %v379 = vld [vmem:[#allocation2 + $0x960] sm:$0xff]
    %v380 = vld [vmem:[#allocation2 + $0x968] sm:$0xff]
    %v381 = vld [vmem:[#allocation2 + $0x970] sm:$0xff]
    %v382 = vld [vmem:[#allocation2 + $0x978] sm:$0xff]
    %v383 = vld [vmem:[#allocation2 + $0x980] sm:$0xff]
    %v384 = vld [vmem:[#allocation2 + $0x988] sm:$0xff]
    %v385 = vld [vmem:[#allocation2 + $0x990] sm:$0xff]
    %v386 = vld [vmem:[#allocation2 + $0x998] sm:$0xff]
    %v387 = vld [vmem:[#allocation2 + $0x9a0] sm:$0xff]
    %v388 = vld [vmem:[#allocation2 + $0x9a8] sm:$0xff]
    %v389 = vld [vmem:[#allocation2 + $0x9b0] sm:$0xff]
    %v390 = vld [vmem:[#allocation2 + $0x9b8] sm:$0xff]
    %v391 = vld [vmem:[#allocation2 + $0x9c0] sm:$0xff]
    %v392 = vld [vmem:[#allocation2 + $0x9c8] sm:$0xff]
    %v393 = vld [vmem:[#allocation2 + $0x9d0] sm:$0xff]
    %v394 = vld [vmem:[#allocation2 + $0x9d8] sm:$0xff]
    %v395 = vld [vmem:[#allocation2 + $0x9e0] sm:$0xff]
    %v396 = vld [vmem:[#allocation2 + $0x9e8] sm:$0xff]
    %v397 = vld [vmem:[#allocation2 + $0x9f0] sm:$0xff]
    %v398 = vld [vmem:[#allocation2 + $0x9f8] sm:$0xff]
    %v399 = vld [vmem:[#allocation2 + $0xa00] sm:$0xff]
    %v400 = vld [vmem:[#allocation2 + $0xa08] sm:$0xff]
    %v401 = vld [vmem:[#allocation2 + $0xa10] sm:$0xff]
    %v402 = vld [vmem:[#allocation2 + $0xa18] sm:$0xff]
    %v403 = vld [vmem:[#allocation2 + $0xa20] sm:$0xff]
    %v404 = vld [vmem:[#allocation2 + $0xa28] sm:$0xff]
    %v405 = vld [vmem:[#allocation2 + $0xa30] sm:$0xff]
    %v406 = vld [vmem:[#allocation2 + $0xa38] sm:$0xff]
    %v407 = vld [vmem:[#allocation2 + $0xa40] sm:$0xff]
    %v408 = vld [vmem:[#allocation2 + $0xa48] sm:$0xff]
    %v409 = vld [vmem:[#allocation2 + $0xa50] sm:$0xff]
    %v410 = vld [vmem:[#allocation2 + $0xa58] sm:$0xff]
    %v411 = vld [vmem:[#allocation2 + $0xa60] sm:$0xff]
    %v412 = vld [vmem:[#allocation2 + $0xa68] sm:$0xff]
    %v413 = vld [vmem:[#allocation2 + $0xa70] sm:$0xff]
    %v414 = vld [vmem:[#allocation2 + $0xa78] sm:$0xff]
    %v415 = vld [vmem:[#allocation2 + $0xa80] sm:$0xff]
    %v416 = vld [vmem:[#allocation2 + $0xa88] sm:$0xff]
    %v417 = vld [vmem:[#allocation2 + $0xa90] sm:$0xff]
    %v418 = vld [vmem:[#allocation2 + $0xa98] sm:$0xff]
    %v419 = vld [vmem:[#allocation2 + $0xaa0] sm:$0xff]
    %v420 = vld [vmem:[#allocation2 + $0xaa8] sm:$0xff]
    %v421 = vld [vmem:[#allocation2 + $0xab0] sm:$0xff]
    %v422 = vld [vmem:[#allocation2 + $0xab8] sm:$0xff]
    %v423 = vld [vmem:[#allocation2 + $0xac0] sm:$0xff]
    %v424 = vld [vmem:[#allocation2 + $0xac8] sm:$0xff]
    %v425 = vld [vmem:[#allocation2 + $0xad0] sm:$0xff]
    %v426 = vld [vmem:[#allocation2 + $0xad8] sm:$0xff]
    %v427 = vld [vmem:[#allocation2 + $0xae0] sm:$0xff]
    %v428 = vld [vmem:[#allocation2 + $0xae8] sm:$0xff]
    %v429 = vld [vmem:[#allocation2 + $0xaf0] sm:$0xff]
    %v430 = vld [vmem:[#allocation2 + $0xaf8] sm:$0xff]
    %v431 = vld [vmem:[#allocation2 + $0xb00] sm:$0xff]
    %v432 = vld [vmem:[#allocation2 + $0xb08] sm:$0xff]
    %v433 = vld [vmem:[#allocation2 + $0xb10] sm:$0xff]
    %v434 = vld [vmem:[#allocation2 + $0xb18] sm:$0xff]
    %v435 = vld [vmem:[#allocation2 + $0xb20] sm:$0xff]
    %v436 = vld [vmem:[#allocation2 + $0xb28] sm:$0xff]
    %v437 = vld [vmem:[#allocation2 + $0xb30] sm:$0xff]
    %v438 = vld [vmem:[#allocation2 + $0xb38] sm:$0xff]
    %v439 = vld [vmem:[#allocation2 + $0xb40] sm:$0xff]
    %v440 = vld [vmem:[#allocation2 + $0xb48] sm:$0xff]
    %v441 = vld [vmem:[#allocation2 + $0xb50] sm:$0xff]
    %v442 = vld [vmem:[#allocation2 + $0xb58] sm:$0xff]
    %v443 = vld [vmem:[#allocation2 + $0xb60] sm:$0xff]
    %v444 = vld [vmem:[#allocation2 + $0xb68] sm:$0xff]
    %v445 = vld [vmem:[#allocation2 + $0xb70] sm:$0xff]
    %v446 = vld [vmem:[#allocation2 + $0xb78] sm:$0xff]
    %v447 = vld [vmem:[#allocation2 + $0xb80] sm:$0xff]
    %v448 = vld [vmem:[#allocation2 + $0xb88] sm:$0xff]
    %v449 = vld [vmem:[#allocation2 + $0xb90] sm:$0xff]
    %v450 = vld [vmem:[#allocation2 + $0xb98] sm:$0xff]
    %v451 = vld [vmem:[#allocation2 + $0xba0] sm:$0xff]
    %v452 = vld [vmem:[#allocation2 + $0xba8] sm:$0xff]
    %v453 = vld [vmem:[#allocation2 + $0xbb0] sm:$0xff]
    %v454 = vld [vmem:[#allocation2 + $0xbb8] sm:$0xff]
    %v455 = vld [vmem:[#allocation2 + $0xbc0] sm:$0xff]
    %v456 = vld [vmem:[#allocation2 + $0xbc8] sm:$0xff]
    %v457 = vld [vmem:[#allocation2 + $0xbd0] sm:$0xff]
    %v458 = vld [vmem:[#allocation2 + $0xbd8] sm:$0xff]
    %v459 = vld [vmem:[#allocation2 + $0xbe0] sm:$0xff]
    %v460 = vld [vmem:[#allocation2 + $0xbe8] sm:$0xff]
    %v461 = vld [vmem:[#allocation2 + $0xbf0] sm:$0xff]
    %v462 = vld [vmem:[#allocation2 + $0xbf8] sm:$0xff]
    %v463 = vld [vmem:[#allocation2 + $0xc00] sm:$0xff]
    %v464 = vld [vmem:[#allocation2 + $0xc08] sm:$0xff]
    %v465 = vld [vmem:[#allocation2 + $0xc10] sm:$0xff]
    %v466 = vld [vmem:[#allocation2 + $0xc18] sm:$0xff]
    %v467 = vld [vmem:[#allocation2 + $0xc20] sm:$0xff]
    %v468 = vld [vmem:[#allocation2 + $0xc28] sm:$0xff]
    %v469 = vld [vmem:[#allocation2 + $0xc30] sm:$0xff]
    %v470 = vld [vmem:[#allocation2 + $0xc38] sm:$0xff]
    %v471 = vld [vmem:[#allocation2 + $0xc40] sm:$0xff]
    %v472 = vld [vmem:[#allocation2 + $0xc48] sm:$0xff]
    %v473 = vld [vmem:[#allocation2 + $0xc50] sm:$0xff]
    %v474 = vld [vmem:[#allocation2 + $0xc58] sm:$0xff]
    %v475 = vld [vmem:[#allocation2 + $0xc60] sm:$0xff]
    %v476 = vld [vmem:[#allocation2 + $0xc68] sm:$0xff]
    %v477 = vld [vmem:[#allocation2 + $0xc70] sm:$0xff]
    %v478 = vld [vmem:[#allocation2 + $0xc78] sm:$0xff]
    %v479 = vld [vmem:[#allocation2 + $0xc80] sm:$0xff]
    %v480 = vld [vmem:[#allocation2 + $0xc88] sm:$0xff]
    %v481 = vld [vmem:[#allocation2 + $0xc90] sm:$0xff]
    %v482 = vld [vmem:[#allocation2 + $0xc98] sm:$0xff]
    %v483 = vld [vmem:[#allocation2 + $0xca0] sm:$0xff]
    %v484 = vld [vmem:[#allocation2 + $0xca8] sm:$0xff]
    %v485 = vld [vmem:[#allocation2 + $0xcb0] sm:$0xff]
    %v486 = vld [vmem:[#allocation2 + $0xcb8] sm:$0xff]
    %v487 = vld [vmem:[#allocation2 + $0xcc0] sm:$0xff]
    %v488 = vld [vmem:[#allocation2 + $0xcc8] sm:$0xff]
    %v489 = vld [vmem:[#allocation2 + $0xcd0] sm:$0xff]
    %v490 = vld [vmem:[#allocation2 + $0xcd8] sm:$0xff]
    %v491 = vld [vmem:[#allocation2 + $0xce0] sm:$0xff]
    %v492 = vld [vmem:[#allocation2 + $0xce8] sm:$0xff]
    %v493 = vld [vmem:[#allocation2 + $0xcf0] sm:$0xff]
    %v494 = vld [vmem:[#allocation2 + $0xcf8] sm:$0xff]
    %v495 = vld [vmem:[#allocation2 + $0xd00] sm:$0xff]
    %v496 = vld [vmem:[#allocation2 + $0xd08] sm:$0xff]
    %v497 = vld [vmem:[#allocation2 + $0xd10] sm:$0xff]
    %v498 = vld [vmem:[#allocation2 + $0xd18] sm:$0xff]
    %v499 = vld [vmem:[#allocation2 + $0xd20] sm:$0xff]
    %v500 = vld [vmem:[#allocation2 + $0xd28] sm:$0xff]
    %v501 = vld [vmem:[#allocation2 + $0xd30] sm:$0xff]
    %v502 = vld [vmem:[#allocation2 + $0xd38] sm:$0xff]
    %v503 = vld [vmem:[#allocation2 + $0xd40] sm:$0xff]
    %v504 = vld [vmem:[#allocation2 + $0xd48] sm:$0xff]
    %v505 = vld [vmem:[#allocation2 + $0xd50] sm:$0xff]
    %v506 = vld [vmem:[#allocation2 + $0xd58] sm:$0xff]
    %v507 = vld [vmem:[#allocation2 + $0xd60] sm:$0xff]
    %v508 = vld [vmem:[#allocation2 + $0xd68] sm:$0xff]
    %v509 = vld [vmem:[#allocation2 + $0xd70] sm:$0xff]
    %v510 = vld [vmem:[#allocation2 + $0xd78] sm:$0xff]
    %v511 = vld [vmem:[#allocation2 + $0xd80] sm:$0xff]
    %v512 = vld [vmem:[#allocation2 + $0xd88] sm:$0xff]
    %v513 = vld [vmem:[#allocation2 + $0xd90] sm:$0xff]
    %v514 = vld [vmem:[#allocation2 + $0xd98] sm:$0xff]
    %v515 = vld [vmem:[#allocation2 + $0xda0] sm:$0xff]
    %v516 = vld [vmem:[#allocation2 + $0xda8] sm:$0xff]
    %v517 = vld [vmem:[#allocation2 + $0xdb0] sm:$0xff]
    %v518 = vld [vmem:[#allocation2 + $0xdb8] sm:$0xff]
    %v519 = vld [vmem:[#allocation2 + $0xdc0] sm:$0xff]
    %v520 = vld [vmem:[#allocation2 + $0xdc8] sm:$0xff]
    %v521 = vld [vmem:[#allocation2 + $0xdd0] sm:$0xff]
    %v522 = vld [vmem:[#allocation2 + $0xdd8] sm:$0xff]
    %v523 = vld [vmem:[#allocation2 + $0xde0] sm:$0xff]
    %v524 = vld [vmem:[#allocation2 + $0xde8] sm:$0xff]
    %v525 = vld [vmem:[#allocation2 + $0xdf0] sm:$0xff]
    %v526 = vld [vmem:[#allocation2 + $0xdf8] sm:$0xff]
    %v527 = vld [vmem:[#allocation2 + $0xe00] sm:$0xff]
    %v528 = vld [vmem:[#allocation2 + $0xe08] sm:$0xff]
    %v529 = vld [vmem:[#allocation2 + $0xe10] sm:$0xff]
    %v530 = vld [vmem:[#allocation2 + $0xe18] sm:$0xff]
    %v531 = vld [vmem:[#allocation2 + $0xe20] sm:$0xff]
    %v532 = vld [vmem:[#allocation2 + $0xe28] sm:$0xff]
    %v533 = vld [vmem:[#allocation2 + $0xe30] sm:$0xff]
    %v534 = vld [vmem:[#allocation2 + $0xe38] sm:$0xff]
    %v535 = vld [vmem:[#allocation2 + $0xe40] sm:$0xff]
    %v536 = vld [vmem:[#allocation2 + $0xe48] sm:$0xff]
    %v537 = vld [vmem:[#allocation2 + $0xe50] sm:$0xff]
    %v538 = vld [vmem:[#allocation2 + $0xe58] sm:$0xff]
    %v539 = vld [vmem:[#allocation2 + $0xe60] sm:$0xff]
    %v540 = vld [vmem:[#allocation2 + $0xe68] sm:$0xff]
    %v541 = vld [vmem:[#allocation2 + $0xe70] sm:$0xff]
    %v542 = vld [vmem:[#allocation2 + $0xe78] sm:$0xff]
    %v543 = vld [vmem:[#allocation2 + $0xe80] sm:$0xff]
    %v544 = vld [vmem:[#allocation2 + $0xe88] sm:$0xff]
    %v545 = vld [vmem:[#allocation2 + $0xe90] sm:$0xff]
    %v546 = vld [vmem:[#allocation2 + $0xe98] sm:$0xff]
    %v547 = vld [vmem:[#allocation2 + $0xea0] sm:$0xff]
    %v548 = vld [vmem:[#allocation2 + $0xea8] sm:$0xff]
    %v549 = vld [vmem:[#allocation2 + $0xeb0] sm:$0xff]
    %v550 = vld [vmem:[#allocation2 + $0xeb8] sm:$0xff]
    %v551 = vld [vmem:[#allocation2 + $0xec0] sm:$0xff]
    %v552 = vld [vmem:[#allocation2 + $0xec8] sm:$0xff]
    %v553 = vld [vmem:[#allocation2 + $0xed0] sm:$0xff]
    %v554 = vld [vmem:[#allocation2 + $0xed8] sm:$0xff]
    %v555 = vld [vmem:[#allocation2 + $0xee0] sm:$0xff]
    %v556 = vld [vmem:[#allocation2 + $0xee8] sm:$0xff]
    %v557 = vld [vmem:[#allocation2 + $0xef0] sm:$0xff]
    %v558 = vld [vmem:[#allocation2 + $0xef8] sm:$0xff]
    %v559 = vld [vmem:[#allocation2 + $0xf00] sm:$0xff]
    %v560 = vld [vmem:[#allocation2 + $0xf08] sm:$0xff]
    %v561 = vld [vmem:[#allocation2 + $0xf10] sm:$0xff]
    %v562 = vld [vmem:[#allocation2 + $0xf18] sm:$0xff]
    %v563 = vld [vmem:[#allocation2 + $0xf20] sm:$0xff]
    %v564 = vld [vmem:[#allocation2 + $0xf28] sm:$0xff]
    %v565 = vld [vmem:[#allocation2 + $0xf30] sm:$0xff]
    %v566 = vld [vmem:[#allocation2 + $0xf38] sm:$0xff]
    %v567 = vld [vmem:[#allocation2 + $0xf40] sm:$0xff]
    %v568 = vld [vmem:[#allocation2 + $0xf48] sm:$0xff]
    %v569 = vld [vmem:[#allocation2 + $0xf50] sm:$0xff]
    %v570 = vld [vmem:[#allocation2 + $0xf58] sm:$0xff]
    %v571 = vld [vmem:[#allocation2 + $0xf60] sm:$0xff]
    %v572 = vld [vmem:[#allocation2 + $0xf68] sm:$0xff]
    %v573 = vld [vmem:[#allocation2 + $0xf70] sm:$0xff]
    %v574 = vld [vmem:[#allocation2 + $0xf78] sm:$0xff]
    %v575 = vld [vmem:[#allocation2 + $0xf80] sm:$0xff]
    %v576 = vld [vmem:[#allocation2 + $0xf88] sm:$0xff]
    %v577 = vld [vmem:[#allocation2 + $0xf90] sm:$0xff]
    %v578 = vld [vmem:[#allocation2 + $0xf98] sm:$0xff]
    %v579 = vld [vmem:[#allocation2 + $0xfa0] sm:$0xff]
    %v580 = vld [vmem:[#allocation2 + $0xfa8] sm:$0xff]
    %v581 = vld [vmem:[#allocation2 + $0xfb0] sm:$0xff]
    %v582 = vld [vmem:[#allocation2 + $0xfb8] sm:$0xff]
    %v583 = vld [vmem:[#allocation2 + $0xfc0] sm:$0xff]
    %v584 = vld [vmem:[#allocation2 + $0xfc8] sm:$0xff]
    %v585 = vld [vmem:[#allocation2 + $0xfd0] sm:$0xff]
    %v586 = vld [vmem:[#allocation2 + $0xfd8] sm:$0xff]
    %v587 = vld [vmem:[#allocation2 + $0xfe0] sm:$0xff]
    %v588 = vld [vmem:[#allocation2 + $0xfe8] sm:$0xff]
    %v589 = vld [vmem:[#allocation2 + $0xff0] sm:$0xff]
    %v590 = vld [vmem:[#allocation2 + $0xff8] sm:$0xff]
    %v591 = vld [vmem:[#allocation2 + $0x1000] sm:$0xff]
    %v592 = vld [vmem:[#allocation2 + $0x1008] sm:$0xff]
    %v593 = vld [vmem:[#allocation2 + $0x1010] sm:$0xff]
    %v594 = vld [vmem:[#allocation2 + $0x1018] sm:$0xff]
    %v595 = vld [vmem:[#allocation2 + $0x1020] sm:$0xff]
    %v596 = vld [vmem:[#allocation2 + $0x1028] sm:$0xff]
    %v597 = vld [vmem:[#allocation2 + $0x1030] sm:$0xff]
    %v598 = vld [vmem:[#allocation2 + $0x1038] sm:$0xff]
    %v599 = vld [vmem:[#allocation2 + $0x1040] sm:$0xff]
    %v600 = vld [vmem:[#allocation2 + $0x1048] sm:$0xff]
    %v601 = vld [vmem:[#allocation2 + $0x1050] sm:$0xff]
    %v602 = vld [vmem:[#allocation2 + $0x1058] sm:$0xff]
    %v603 = vld [vmem:[#allocation2 + $0x1060] sm:$0xff]
    %v604 = vld [vmem:[#allocation2 + $0x1068] sm:$0xff]
    %v605 = vld [vmem:[#allocation2 + $0x1070] sm:$0xff]
    %v606 = vld [vmem:[#allocation2 + $0x1078] sm:$0xff]
    %v607 = vld [vmem:[#allocation2 + $0x1080] sm:$0xff]
    %v608 = vld [vmem:[#allocation2 + $0x1088] sm:$0xff]
    %v609 = vld [vmem:[#allocation2 + $0x1090] sm:$0xff]
    %v610 = vld [vmem:[#allocation2 + $0x1098] sm:$0xff]
    %v611 = vld [vmem:[#allocation2 + $0x10a0] sm:$0xff]
    %v612 = vld [vmem:[#allocation2 + $0x10a8] sm:$0xff]
    %v613 = vld [vmem:[#allocation2 + $0x10b0] sm:$0xff]
    %v614 = vld [vmem:[#allocation2 + $0x10b8] sm:$0xff]
    %v615 = vld [vmem:[#allocation2 + $0x10c0] sm:$0xff]
    %v616 = vld [vmem:[#allocation2 + $0x10c8] sm:$0xff]
    %v617 = vld [vmem:[#allocation2 + $0x10d0] sm:$0xff]
    %v618 = vld [vmem:[#allocation2 + $0x10d8] sm:$0xff]
    %v619 = vld [vmem:[#allocation2 + $0x10e0] sm:$0xff]
    %v620 = vld [vmem:[#allocation2 + $0x10e8] sm:$0xff]
    %v621 = vld [vmem:[#allocation2 + $0x10f0] sm:$0xff]
    %v622 = vld [vmem:[#allocation2 + $0x10f8] sm:$0xff]
    %v623 = vld [vmem:[#allocation2 + $0x1100] sm:$0xff]
    %v624 = vld [vmem:[#allocation2 + $0x1108] sm:$0xff]
    %v625 = vld [vmem:[#allocation2 + $0x1110] sm:$0xff]
    %v626 = vld [vmem:[#allocation2 + $0x1118] sm:$0xff]
    %v627 = vld [vmem:[#allocation2 + $0x1120] sm:$0xff]
    %v628 = vld [vmem:[#allocation2 + $0x1128] sm:$0xff]
    %v629 = vld [vmem:[#allocation2 + $0x1130] sm:$0xff]
    %v630 = vld [vmem:[#allocation2 + $0x1138] sm:$0xff]
    %v631 = vld [vmem:[#allocation2 + $0x1140] sm:$0xff]
    %v632 = vld [vmem:[#allocation2 + $0x1148] sm:$0xff]
    %v633 = vld [vmem:[#allocation2 + $0x1150] sm:$0xff]
    %v634 = vld [vmem:[#allocation2 + $0x1158] sm:$0xff]
    %v635 = vld [vmem:[#allocation2 + $0x1160] sm:$0xff]
    %v636 = vld [vmem:[#allocation2 + $0x1168] sm:$0xff]
    %v637 = vld [vmem:[#allocation2 + $0x1170] sm:$0xff]
    %v638 = vld [vmem:[#allocation2 + $0x1178] sm:$0xff]
    %v639 = vld [vmem:[#allocation2 + $0x1180] sm:$0xff]
    %v640 = vld [vmem:[#allocation2 + $0x1188] sm:$0xff]
    %v641 = vld [vmem:[#allocation2 + $0x1190] sm:$0xff]
    %v642 = vld [vmem:[#allocation2 + $0x1198] sm:$0xff]
    %v643 = vld [vmem:[#allocation2 + $0x11a0] sm:$0xff]
    %v644 = vld [vmem:[#allocation2 + $0x11a8] sm:$0xff]
    %v645 = vld [vmem:[#allocation2 + $0x11b0] sm:$0xff]
    %v646 = vld [vmem:[#allocation2 + $0x11b8] sm:$0xff]
    %v647 = vld [vmem:[#allocation2 + $0x11c0] sm:$0xff]
    %v648 = vld [vmem:[#allocation2 + $0x11c8] sm:$0xff]
    %v649 = vld [vmem:[#allocation2 + $0x11d0] sm:$0xff]
    %v650 = vld [vmem:[#allocation2 + $0x11d8] sm:$0xff]
    %v651 = vld [vmem:[#allocation2 + $0x11e0] sm:$0xff]
    %v652 = vld [vmem:[#allocation2 + $0x11e8] sm:$0xff]
    %v653 = vld [vmem:[#allocation2 + $0x11f0] sm:$0xff]
    %v654 = vld [vmem:[#allocation2 + $0x11f8] sm:$0xff]
    %v655 = vld [vmem:[#allocation2 + $0x1200] sm:$0xff]
    %v656 = vld [vmem:[#allocation2 + $0x1208] sm:$0xff]
    %v657 = vld [vmem:[#allocation2 + $0x1210] sm:$0xff]
    %v658 = vld [vmem:[#allocation2 + $0x1218] sm:$0xff]
    %v659 = vld [vmem:[#allocation2 + $0x1220] sm:$0xff]
    %v660 = vld [vmem:[#allocation2 + $0x1228] sm:$0xff]
    %v661 = vld [vmem:[#allocation2 + $0x1230] sm:$0xff]
    %v662 = vld [vmem:[#allocation2 + $0x1238] sm:$0xff]
    %v663 = vld [vmem:[#allocation2 + $0x1240] sm:$0xff]
    %v664 = vld [vmem:[#allocation2 + $0x1248] sm:$0xff]
    %v665 = vld [vmem:[#allocation2 + $0x1250] sm:$0xff]
    %v666 = vld [vmem:[#allocation2 + $0x1258] sm:$0xff]
    %v667 = vld [vmem:[#allocation2 + $0x1260] sm:$0xff]
    %v668 = vld [vmem:[#allocation2 + $0x1268] sm:$0xff]
    %v669 = vld [vmem:[#allocation2 + $0x1270] sm:$0xff]
    %v670 = vld [vmem:[#allocation2 + $0x1278] sm:$0xff]
    %v671 = vld [vmem:[#allocation2 + $0x1280] sm:$0xff]
    %v672 = vld [vmem:[#allocation2 + $0x1288] sm:$0xff]
    %v673 = vld [vmem:[#allocation2 + $0x1290] sm:$0xff]
    %v674 = vld [vmem:[#allocation2 + $0x1298] sm:$0xff]
    %v675 = vld [vmem:[#allocation2 + $0x12a0] sm:$0xff]
    %v676 = vld [vmem:[#allocation2 + $0x12a8] sm:$0xff]
    %v677 = vld [vmem:[#allocation2 + $0x12b0] sm:$0xff]
    %v678 = vld [vmem:[#allocation2 + $0x12b8] sm:$0xff]
    %v679 = vld [vmem:[#allocation2 + $0x12c0] sm:$0xff]
    %v680 = vld [vmem:[#allocation2 + $0x12c8] sm:$0xff]
    %v681 = vld [vmem:[#allocation2 + $0x12d0] sm:$0xff]
    %v682 = vld [vmem:[#allocation2 + $0x12d8] sm:$0xff]
    %v683 = vld [vmem:[#allocation2 + $0x12e0] sm:$0xff]
    %v684 = vld [vmem:[#allocation2 + $0x12e8] sm:$0xff]
    %v685 = vld [vmem:[#allocation2 + $0x12f0] sm:$0xff]
    %v686 = vld [vmem:[#allocation2 + $0x12f8] sm:$0xff]
    %v687 = vld [vmem:[#allocation2 + $0x1300] sm:$0xff]
    %v688 = vld [vmem:[#allocation2 + $0x1308] sm:$0xff]
    %v689 = vld [vmem:[#allocation2 + $0x1310] sm:$0xff]
    %v690 = vld [vmem:[#allocation2 + $0x1318] sm:$0xff]
    %v691 = vld [vmem:[#allocation2 + $0x1320] sm:$0xff]
    %v692 = vld [vmem:[#allocation2 + $0x1328] sm:$0xff]
    %v693 = vld [vmem:[#allocation2 + $0x1330] sm:$0xff]
    %v694 = vld [vmem:[#allocation2 + $0x1338] sm:$0xff]
    %v695 = vld [vmem:[#allocation2 + $0x1340] sm:$0xff]
    %v696 = vld [vmem:[#allocation2 + $0x1348] sm:$0xff]
    %v697 = vld [vmem:[#allocation2 + $0x1350] sm:$0xff]
    %v698 = vld [vmem:[#allocation2 + $0x1358] sm:$0xff]
    %v699 = vld [vmem:[#allocation2 + $0x1360] sm:$0xff]
    %v700 = vld [vmem:[#allocation2 + $0x1368] sm:$0xff]
    %v701 = vld [vmem:[#allocation2 + $0x1370] sm:$0xff]
    %v702 = vld [vmem:[#allocation2 + $0x1378] sm:$0xff]
    %v703 = vld [vmem:[#allocation2 + $0x1380] sm:$0xff]
    %v704 = vld [vmem:[#allocation2 + $0x1388] sm:$0xff]
    %v705 = vld [vmem:[#allocation2 + $0x1390] sm:$0xff]
    %v706 = vld [vmem:[#allocation2 + $0x1398] sm:$0xff]
    %v707 = vld [vmem:[#allocation2 + $0x13a0] sm:$0xff]
    %v708 = vld [vmem:[#allocation2 + $0x13a8] sm:$0xff]
    %v709 = vld [vmem:[#allocation2 + $0x13b0] sm:$0xff]
    %v710 = vld [vmem:[#allocation2 + $0x13b8] sm:$0xff]
    %v711 = vld [vmem:[#allocation2 + $0x13c0] sm:$0xff]
    %v712 = vld [vmem:[#allocation2 + $0x13c8] sm:$0xff]
    %v713 = vld [vmem:[#allocation2 + $0x13d0] sm:$0xff]
    %v714 = vld [vmem:[#allocation2 + $0x13d8] sm:$0xff]
    %v715 = vld [vmem:[#allocation2 + $0x13e0] sm:$0xff]
    %v716 = vld [vmem:[#allocation2 + $0x13e8] sm:$0xff]
    %v717 = vld [vmem:[#allocation2 + $0x13f0] sm:$0xff]
    %v718 = vld [vmem:[#allocation2 + $0x13f8] sm:$0xff]
    %v721 = vcombine.high %v77, %v77
    %v723 = vunpack.c.l.s4 1983009808
    %v724 = vunpack.c.0.s8 %v723
    %v725 = vlaneseq
    %v726 = vshrl.u32 %v725, 7
    %v727 = vsub.s32 %v724, %v726
    %v728 = vrot.slane %v77, %v727
    %v730 = vunpack.c.l.s4 1983009808
    %v731 = vunpack.c.0.s8 %v730
    %v732 = vlaneseq
    %v733 = vshrl.u32 %v732, 7
    %v734 = vsub.s32 %v731, %v733
    %v735 = vrot.slane %v721, %v734
    %v736 = vcombine.high %v728, %v728
    %v737 = vcombine.high %v735, %v735
    %v738 = vcombine.high %v78, %v78
    %v740 = vunpack.c.l.s4 1983009808
    %v741 = vunpack.c.0.s8 %v740
    %v742 = vlaneseq
    %v743 = vshrl.u32 %v742, 7
    %v744 = vsub.s32 %v741, %v743
    %v745 = vrot.slane %v78, %v744
    %v747 = vunpack.c.l.s4 1983009808
    %v748 = vunpack.c.0.s8 %v747
    %v749 = vlaneseq
    %v750 = vshrl.u32 %v749, 7
    %v751 = vsub.s32 %v748, %v750
    %v752 = vrot.slane %v738, %v751
    %v753 = vcombine.high %v745, %v745
    %v754 = vcombine.high %v752, %v752
    %763 = vmatprep.subr.mxu0 %v155
    %764 = vmatpush1.msra.mxu0 %v154
    %765 = vmatprep.subr.mxu0 %v150
    %766 = vmatpush1.msra.mxu0 %v149
    %767 = vmatprep.subr.mxu0 %v145
    %768 = vmatpush1.msra.mxu0 %v144
    %769 = vmatprep.subr.mxu0 %v140
    %770 = vmatpush1.msra.mxu0 %v139
    %771 = vmatprep.subr.mxu0 %v135
    %772 = vmatpush1.msra.mxu0 %v134
    %773 = vmatprep.subr.mxu0 %v130
    %774 = vmatpush1.msra.mxu0 %v129
    %775 = vmatprep.subr.mxu0 %v125
    %776 = vmatpush1.msra.mxu0 %v124
    %777 = vmatprep.subr.mxu0 %v120
    %778 = vmatpush1.msra.mxu0 %v119
    %779 = vmatprep.subr.mxu0 %v115
    %780 = vmatpush1.msra.mxu0 %v114
    %781 = vmatprep.subr.mxu0 %v110
    %782 = vmatpush1.msra.mxu0 %v109
    %783 = vmatprep.subr.mxu0 %v105
    %784 = vmatpush1.msra.mxu0 %v104
    %785 = vmatprep.subr.mxu0 %v100
    %786 = vmatpush1.msra.mxu0 %v99
    %787 = vmatprep.subr.mxu0 %v95
    %788 = vmatpush1.msra.mxu0 %v94
    %789 = vmatprep.subr.mxu0 %v90
    %790 = vmatpush1.msra.mxu0 %v89
    %791 = vmatprep.subr.mxu0 %v85
    %792 = vmatpush1.msra.mxu0 %v84
    %793 = vmatprep.subr.mxu0 %v80
    %794 = vmatpush1.msra.mxu0 %v79
    %795 = vmatprep.subr.mxu0 %v235
    %796 = vmatpush2.msra.mxu0 %v234
    %797 = vmatprep.subr.mxu0 %v230
    %798 = vmatpush2.msra.mxu0 %v229
    %799 = vmatprep.subr.mxu0 %v225
    %800 = vmatpush2.msra.mxu0 %v224
    %801 = vmatprep.subr.mxu0 %v220
    %802 = vmatpush2.msra.mxu0 %v219
    %803 = vmatprep.subr.mxu0 %v215
    %804 = vmatpush2.msra.mxu0 %v214
    %805 = vmatprep.subr.mxu0 %v210
    %806 = vmatpush2.msra.mxu0 %v209
    %807 = vmatprep.subr.mxu0 %v205
    %808 = vmatpush2.msra.mxu0 %v204
    %809 = vmatprep.subr.mxu0 %v200
    %810 = vmatpush2.msra.mxu0 %v199
    %811 = vmatprep.subr.mxu0 %v195
    %812 = vmatpush2.msra.mxu0 %v194
    %813 = vmatprep.subr.mxu0 %v190
    %814 = vmatpush2.msra.mxu0 %v189
    %815 = vmatprep.subr.mxu0 %v185
    %816 = vmatpush2.msra.mxu0 %v184
    %817 = vmatprep.subr.mxu0 %v180
    %818 = vmatpush2.msra.mxu0 %v179
    %819 = vmatprep.subr.mxu0 %v175
    %820 = vmatpush2.msra.mxu0 %v174
    %821 = vmatprep.subr.mxu0 %v170
    %822 = vmatpush2.msra.mxu0 %v169
    %823 = vmatprep.subr.mxu0 %v165
    %824 = vmatpush2.msra.mxu0 %v164
    %825 = vmatprep.subr.mxu0 %v160
    %826 = vmatpush2.msra.mxu0 %v159
    %827 = vmatprep.mubr.f32.mxu0 %v736
    %828 = vmatmul.mubr.f32.gmra.mxu0 %v728
    %v829 = vpop.f32.mrf.mxu0
    %v830 = vadd.f32 0.0, %v829
    %v831 = vpop.f32.mrf.mxu0
    %v832 = vadd.f32 0.0, %v831
    %833 = vdwg.mxu0
    %834 = vmatprep.subr.mxu0 %v315
    %835 = vmatpush1.msra.mxu0 %v314
    %836 = vmatprep.subr.mxu0 %v310
    %837 = vmatpush1.msra.mxu0 %v309
    %838 = vmatprep.subr.mxu0 %v305
    %839 = vmatpush1.msra.mxu0 %v304
    %840 = vmatprep.subr.mxu0 %v300
    %841 = vmatpush1.msra.mxu0 %v299
    %842 = vmatprep.subr.mxu0 %v295
    %843 = vmatpush1.msra.mxu0 %v294
    %844 = vmatprep.subr.mxu0 %v290
    %845 = vmatpush1.msra.mxu0 %v289
    %846 = vmatprep.subr.mxu0 %v285
    %847 = vmatpush1.msra.mxu0 %v284
    %848 = vmatprep.subr.mxu0 %v280
    %849 = vmatpush1.msra.mxu0 %v279
    %850 = vmatprep.subr.mxu0 %v275
    %851 = vmatpush1.msra.mxu0 %v274
    %852 = vmatprep.subr.mxu0 %v270
    %853 = vmatpush1.msra.mxu0 %v269
    %854 = vmatprep.subr.mxu0 %v265
    %855 = vmatpush1.msra.mxu0 %v264
    %856 = vmatprep.subr.mxu0 %v260
    %857 = vmatpush1.msra.mxu0 %v259
    %858 = vmatprep.subr.mxu0 %v255
    %859 = vmatpush1.msra.mxu0 %v254
    %860 = vmatprep.subr.mxu0 %v250
    %861 = vmatpush1.msra.mxu0 %v249
    %862 = vmatprep.subr.mxu0 %v245
    %863 = vmatpush1.msra.mxu0 %v244
    %864 = vmatprep.subr.mxu0 %v240
    %865 = vmatpush1.msra.mxu0 %v239
    %866 = vmatprep.subr.mxu0 %v395
    %867 = vmatpush2.msra.mxu0 %v394
    %868 = vmatprep.subr.mxu0 %v390
    %869 = vmatpush2.msra.mxu0 %v389
    %870 = vmatprep.subr.mxu0 %v385
    %871 = vmatpush2.msra.mxu0 %v384
    %872 = vmatprep.subr.mxu0 %v380
    %873 = vmatpush2.msra.mxu0 %v379
    %874 = vmatprep.subr.mxu0 %v375
    %875 = vmatpush2.msra.mxu0 %v374
    %876 = vmatprep.subr.mxu0 %v370
    %877 = vmatpush2.msra.mxu0 %v369
    %878 = vmatprep.subr.mxu0 %v365
    %879 = vmatpush2.msra.mxu0 %v364
    %880 = vmatprep.subr.mxu0 %v360
    %881 = vmatpush2.msra.mxu0 %v359
    %882 = vmatprep.subr.mxu0 %v355
    %883 = vmatpush2.msra.mxu0 %v354
    %884 = vmatprep.subr.mxu0 %v350
    %885 = vmatpush2.msra.mxu0 %v349
    %886 = vmatprep.subr.mxu0 %v345
    %887 = vmatpush2.msra.mxu0 %v344
    %888 = vmatprep.subr.mxu0 %v340
    %889 = vmatpush2.msra.mxu0 %v339
    %890 = vmatprep.subr.mxu0 %v335
    %891 = vmatpush2.msra.mxu0 %v334
    %892 = vmatprep.subr.mxu0 %v330
    %893 = vmatpush2.msra.mxu0 %v329
    %894 = vmatprep.subr.mxu0 %v325
    %895 = vmatpush2.msra.mxu0 %v324
    %896 = vmatprep.subr.mxu0 %v320
    %897 = vmatpush2.msra.mxu0 %v319
    %898 = vmatprep.mubr.f32.mxu0 %v737
    %899 = vmatmul.mubr.f32.gmra.mxu0 %v735
    %v900 = vpop.f32.mrf.mxu0
    %v901 = vadd.f32 %v830, %v900
    %v902 = vpop.f32.mrf.mxu0
    %v903 = vadd.f32 %v832, %v902
    %904 = vdwg.mxu0
    %905 = vmatprep.subr.mxu0 %v475
    %906 = vmatpush1.msra.mxu0 %v474
    %907 = vmatprep.subr.mxu0 %v470
    %908 = vmatpush1.msra.mxu0 %v469
    %909 = vmatprep.subr.mxu0 %v465
    %910 = vmatpush1.msra.mxu0 %v464
    %911 = vmatprep.subr.mxu0 %v460
    %912 = vmatpush1.msra.mxu0 %v459
    %913 = vmatprep.subr.mxu0 %v455
    %914 = vmatpush1.msra.mxu0 %v454
    %915 = vmatprep.subr.mxu0 %v450
    %916 = vmatpush1.msra.mxu0 %v449
    %917 = vmatprep.subr.mxu0 %v445
    %918 = vmatpush1.msra.mxu0 %v444
    %919 = vmatprep.subr.mxu0 %v440
    %920 = vmatpush1.msra.mxu0 %v439
    %921 = vmatprep.subr.mxu0 %v435
    %922 = vmatpush1.msra.mxu0 %v434
    %923 = vmatprep.subr.mxu0 %v430
    %924 = vmatpush1.msra.mxu0 %v429
    %925 = vmatprep.subr.mxu0 %v425
    %926 = vmatpush1.msra.mxu0 %v424
    %927 = vmatprep.subr.mxu0 %v420
    %928 = vmatpush1.msra.mxu0 %v419
    %929 = vmatprep.subr.mxu0 %v415
    %930 = vmatpush1.msra.mxu0 %v414
    %931 = vmatprep.subr.mxu0 %v410
    %932 = vmatpush1.msra.mxu0 %v409
    %933 = vmatprep.subr.mxu0 %v405
    %934 = vmatpush1.msra.mxu0 %v404
    %935 = vmatprep.subr.mxu0 %v400
    %936 = vmatpush1.msra.mxu0 %v399
    %937 = vmatprep.subr.mxu0 %v555
    %938 = vmatpush2.msra.mxu0 %v554
    %939 = vmatprep.subr.mxu0 %v550
    %940 = vmatpush2.msra.mxu0 %v549
    %941 = vmatprep.subr.mxu0 %v545
    %942 = vmatpush2.msra.mxu0 %v544
    %943 = vmatprep.subr.mxu0 %v540
    %944 = vmatpush2.msra.mxu0 %v539
    %945 = vmatprep.subr.mxu0 %v535
    %946 = vmatpush2.msra.mxu0 %v534
    %947 = vmatprep.subr.mxu0 %v530
    %948 = vmatpush2.msra.mxu0 %v529
    %949 = vmatprep.subr.mxu0 %v525
    %950 = vmatpush2.msra.mxu0 %v524
    %951 = vmatprep.subr.mxu0 %v520
    %952 = vmatpush2.msra.mxu0 %v519
    %953 = vmatprep.subr.mxu0 %v515
    %954 = vmatpush2.msra.mxu0 %v514
    %955 = vmatprep.subr.mxu0 %v510
    %956 = vmatpush2.msra.mxu0 %v509
    %957 = vmatprep.subr.mxu0 %v505
    %958 = vmatpush2.msra.mxu0 %v504
    %959 = vmatprep.subr.mxu0 %v500
    %960 = vmatpush2.msra.mxu0 %v499
    %961 = vmatprep.subr.mxu0 %v495
    %962 = vmatpush2.msra.mxu0 %v494
    %963 = vmatprep.subr.mxu0 %v490
    %964 = vmatpush2.msra.mxu0 %v489
    %965 = vmatprep.subr.mxu0 %v485
    %966 = vmatpush2.msra.mxu0 %v484
    %967 = vmatprep.subr.mxu0 %v480
    %968 = vmatpush2.msra.mxu0 %v479
    %969 = vmatprep.mubr.f32.mxu0 %v753
    %970 = vmatmul.mubr.f32.gmra.mxu0 %v745
    %v971 = vpop.f32.mrf.mxu0
    %v972 = vadd.f32 %v901, %v971
    %v973 = vpop.f32.mrf.mxu0
    %v974 = vadd.f32 %v903, %v973
    %975 = vdwg.mxu0
    %976 = vmatprep.subr.mxu0 %v635
    %977 = vmatpush1.msra.mxu0 %v634
    %978 = vmatprep.subr.mxu0 %v630
    %979 = vmatpush1.msra.mxu0 %v629
    %980 = vmatprep.subr.mxu0 %v625
    %981 = vmatpush1.msra.mxu0 %v624
    %982 = vmatprep.subr.mxu0 %v620
    %983 = vmatpush1.msra.mxu0 %v619
    %984 = vmatprep.subr.mxu0 %v615
    %985 = vmatpush1.msra.mxu0 %v614
    %986 = vmatprep.subr.mxu0 %v610
    %987 = vmatpush1.msra.mxu0 %v609
    %988 = vmatprep.subr.mxu0 %v605
    %989 = vmatpush1.msra.mxu0 %v604
    %990 = vmatprep.subr.mxu0 %v600
    %991 = vmatpush1.msra.mxu0 %v599
    %992 = vmatprep.subr.mxu0 %v595
    %993 = vmatpush1.msra.mxu0 %v594
    %994 = vmatprep.subr.mxu0 %v590
    %995 = vmatpush1.msra.mxu0 %v589
    %996 = vmatprep.subr.mxu0 %v585
    %997 = vmatpush1.msra.mxu0 %v584
    %998 = vmatprep.subr.mxu0 %v580
    %999 = vmatpush1.msra.mxu0 %v579
    %1000 = vmatprep.subr.mxu0 %v575
    %1001 = vmatpush1.msra.mxu0 %v574
    %1002 = vmatprep.subr.mxu0 %v570
    %1003 = vmatpush1.msra.mxu0 %v569
    %1004 = vmatprep.subr.mxu0 %v565
    %1005 = vmatpush1.msra.mxu0 %v564
    %1006 = vmatprep.subr.mxu0 %v560
    %1007 = vmatpush1.msra.mxu0 %v559
    %1008 = vmatprep.subr.mxu0 %v715
    %1009 = vmatpush2.msra.mxu0 %v714
    %1010 = vmatprep.subr.mxu0 %v710
    %1011 = vmatpush2.msra.mxu0 %v709
    %1012 = vmatprep.subr.mxu0 %v705
    %1013 = vmatpush2.msra.mxu0 %v704
    %1014 = vmatprep.subr.mxu0 %v700
    %1015 = vmatpush2.msra.mxu0 %v699
    %1016 = vmatprep.subr.mxu0 %v695
    %1017 = vmatpush2.msra.mxu0 %v694
    %1018 = vmatprep.subr.mxu0 %v690
    %1019 = vmatpush2.msra.mxu0 %v689
    %1020 = vmatprep.subr.mxu0 %v685
    %1021 = vmatpush2.msra.mxu0 %v684
    %1022 = vmatprep.subr.mxu0 %v680
    %1023 = vmatpush2.msra.mxu0 %v679
    %1024 = vmatprep.subr.mxu0 %v675
    %1025 = vmatpush2.msra.mxu0 %v674
    %1026 = vmatprep.subr.mxu0 %v670
    %1027 = vmatpush2.msra.mxu0 %v669
    %1028 = vmatprep.subr.mxu0 %v665
    %1029 = vmatpush2.msra.mxu0 %v664
    %1030 = vmatprep.subr.mxu0 %v660
    %1031 = vmatpush2.msra.mxu0 %v659
    %1032 = vmatprep.subr.mxu0 %v655
    %1033 = vmatpush2.msra.mxu0 %v654
    %1034 = vmatprep.subr.mxu0 %v650
    %1035 = vmatpush2.msra.mxu0 %v649
    %1036 = vmatprep.subr.mxu0 %v645
    %1037 = vmatpush2.msra.mxu0 %v644
    %1038 = vmatprep.subr.mxu0 %v640
    %1039 = vmatpush2.msra.mxu0 %v639
    %1040 = vmatprep.mubr.f32.mxu0 %v754
    %1041 = vmatmul.mubr.f32.gmra.mxu0 %v752
    %v1042 = vpop.f32.mrf.mxu0
    %v1043 = vadd.f32 %v972, %v1042
    %v1044 = vpop.f32.mrf.mxu0
    %v1045 = vadd.f32 %v974, %v1044
    %1046 = vdwg.mxu0
    %1047 = vmatprep.subr.mxu0 %v157
    %1048 = vmatpush1.msra.mxu0 %v156
    %1049 = vmatprep.subr.mxu0 %v152
    %1050 = vmatpush1.msra.mxu0 %v151
    %1051 = vmatprep.subr.mxu0 %v147
    %1052 = vmatpush1.msra.mxu0 %v146
    %1053 = vmatprep.subr.mxu0 %v142
    %1054 = vmatpush1.msra.mxu0 %v141
    %1055 = vmatprep.subr.mxu0 %v137
    %1056 = vmatpush1.msra.mxu0 %v136
    %1057 = vmatprep.subr.mxu0 %v132
    %1058 = vmatpush1.msra.mxu0 %v131
    %1059 = vmatprep.subr.mxu0 %v127
    %1060 = vmatpush1.msra.mxu0 %v126
    %1061 = vmatprep.subr.mxu0 %v122
    %1062 = vmatpush1.msra.mxu0 %v121
    %1063 = vmatprep.subr.mxu0 %v117
    %1064 = vmatpush1.msra.mxu0 %v116
    %1065 = vmatprep.subr.mxu0 %v112
    %1066 = vmatpush1.msra.mxu0 %v111
    %1067 = vmatprep.subr.mxu0 %v107
    %1068 = vmatpush1.msra.mxu0 %v106
    %1069 = vmatprep.subr.mxu0 %v102
    %1070 = vmatpush1.msra.mxu0 %v101
    %1071 = vmatprep.subr.mxu0 %v97
    %1072 = vmatpush1.msra.mxu0 %v96
    %1073 = vmatprep.subr.mxu0 %v92
    %1074 = vmatpush1.msra.mxu0 %v91
    %1075 = vmatprep.subr.mxu0 %v87
    %1076 = vmatpush1.msra.mxu0 %v86
    %1077 = vmatprep.subr.mxu0 %v82
    %1078 = vmatpush1.msra.mxu0 %v81
    %1079 = vmatprep.subr.mxu0 %v237
    %1080 = vmatpush2.msra.mxu0 %v236
    %1081 = vmatprep.subr.mxu0 %v232
    %1082 = vmatpush2.msra.mxu0 %v231
    %1083 = vmatprep.subr.mxu0 %v227
    %1084 = vmatpush2.msra.mxu0 %v226
    %1085 = vmatprep.subr.mxu0 %v222
    %1086 = vmatpush2.msra.mxu0 %v221
    %1087 = vmatprep.subr.mxu0 %v217
    %1088 = vmatpush2.msra.mxu0 %v216
    %1089 = vmatprep.subr.mxu0 %v212
    %1090 = vmatpush2.msra.mxu0 %v211
    %1091 = vmatprep.subr.mxu0 %v207
    %1092 = vmatpush2.msra.mxu0 %v206
    %1093 = vmatprep.subr.mxu0 %v202
    %1094 = vmatpush2.msra.mxu0 %v201
    %1095 = vmatprep.subr.mxu0 %v197
    %1096 = vmatpush2.msra.mxu0 %v196
    %1097 = vmatprep.subr.mxu0 %v192
    %1098 = vmatpush2.msra.mxu0 %v191
    %1099 = vmatprep.subr.mxu0 %v187
    %1100 = vmatpush2.msra.mxu0 %v186
    %1101 = vmatprep.subr.mxu0 %v182
    %1102 = vmatpush2.msra.mxu0 %v181
    %1103 = vmatprep.subr.mxu0 %v177
    %1104 = vmatpush2.msra.mxu0 %v176
    %1105 = vmatprep.subr.mxu0 %v172
    %1106 = vmatpush2.msra.mxu0 %v171
    %1107 = vmatprep.subr.mxu0 %v167
    %1108 = vmatpush2.msra.mxu0 %v166
    %1109 = vmatprep.subr.mxu0 %v162
    %1110 = vmatpush2.msra.mxu0 %v161
    %1111 = vmatprep.mubr.f32.mxu0 %v736
    %1112 = vmatmul.mubr.f32.gmra.mxu0 %v728
    %v1113 = vpop.f32.mrf.mxu0
    %v1114 = vadd.f32 0.0, %v1113
    %v1115 = vpop.f32.mrf.mxu0
    %v1116 = vadd.f32 0.0, %v1115
    %1117 = vdwg.mxu0
    %1118 = vmatprep.subr.mxu0 %v317
    %1119 = vmatpush1.msra.mxu0 %v316
    %1120 = vmatprep.subr.mxu0 %v312
    %1121 = vmatpush1.msra.mxu0 %v311
    %1122 = vmatprep.subr.mxu0 %v307
    %1123 = vmatpush1.msra.mxu0 %v306
    %1124 = vmatprep.subr.mxu0 %v302
    %1125 = vmatpush1.msra.mxu0 %v301
    %1126 = vmatprep.subr.mxu0 %v297
    %1127 = vmatpush1.msra.mxu0 %v296
    %1128 = vmatprep.subr.mxu0 %v292
    %1129 = vmatpush1.msra.mxu0 %v291
    %1130 = vmatprep.subr.mxu0 %v287
    %1131 = vmatpush1.msra.mxu0 %v286
    %1132 = vmatprep.subr.mxu0 %v282
    %1133 = vmatpush1.msra.mxu0 %v281
    %1134 = vmatprep.subr.mxu0 %v277
    %1135 = vmatpush1.msra.mxu0 %v276
    %1136 = vmatprep.subr.mxu0 %v272
    %1137 = vmatpush1.msra.mxu0 %v271
    %1138 = vmatprep.subr.mxu0 %v267
    %1139 = vmatpush1.msra.mxu0 %v266
    %1140 = vmatprep.subr.mxu0 %v262
    %1141 = vmatpush1.msra.mxu0 %v261
    %1142 = vmatprep.subr.mxu0 %v257
    %1143 = vmatpush1.msra.mxu0 %v256
    %1144 = vmatprep.subr.mxu0 %v252
    %1145 = vmatpush1.msra.mxu0 %v251
    %1146 = vmatprep.subr.mxu0 %v247
    %1147 = vmatpush1.msra.mxu0 %v246
    %1148 = vmatprep.subr.mxu0 %v242
    %1149 = vmatpush1.msra.mxu0 %v241
    %1150 = vmatprep.subr.mxu0 %v397
    %1151 = vmatpush2.msra.mxu0 %v396
    %1152 = vmatprep.subr.mxu0 %v392
    %1153 = vmatpush2.msra.mxu0 %v391
    %1154 = vmatprep.subr.mxu0 %v387
    %1155 = vmatpush2.msra.mxu0 %v386
    %1156 = vmatprep.subr.mxu0 %v382
    %1157 = vmatpush2.msra.mxu0 %v381
    %1158 = vmatprep.subr.mxu0 %v377
    %1159 = vmatpush2.msra.mxu0 %v376
    %1160 = vmatprep.subr.mxu0 %v372
    %1161 = vmatpush2.msra.mxu0 %v371
    %1162 = vmatprep.subr.mxu0 %v367
    %1163 = vmatpush2.msra.mxu0 %v366
    %1164 = vmatprep.subr.mxu0 %v362
    %1165 = vmatpush2.msra.mxu0 %v361
    %1166 = vmatprep.subr.mxu0 %v357
    %1167 = vmatpush2.msra.mxu0 %v356
    %1168 = vmatprep.subr.mxu0 %v352
    %1169 = vmatpush2.msra.mxu0 %v351
    %1170 = vmatprep.subr.mxu0 %v347
    %1171 = vmatpush2.msra.mxu0 %v346
    %1172 = vmatprep.subr.mxu0 %v342
    %1173 = vmatpush2.msra.mxu0 %v341
    %1174 = vmatprep.subr.mxu0 %v337
    %1175 = vmatpush2.msra.mxu0 %v336
    %1176 = vmatprep.subr.mxu0 %v332
    %1177 = vmatpush2.msra.mxu0 %v331
    %1178 = vmatprep.subr.mxu0 %v327
    %1179 = vmatpush2.msra.mxu0 %v326
    %1180 = vmatprep.subr.mxu0 %v322
    %1181 = vmatpush2.msra.mxu0 %v321
    %1182 = vmatprep.mubr.f32.mxu0 %v737
    %1183 = vmatmul.mubr.f32.gmra.mxu0 %v735
    %v1184 = vpop.f32.mrf.mxu0
    %v1185 = vadd.f32 %v1114, %v1184
    %v1186 = vpop.f32.mrf.mxu0
    %v1187 = vadd.f32 %v1116, %v1186
    %1188 = vdwg.mxu0
    %1189 = vmatprep.subr.mxu0 %v477
    %1190 = vmatpush1.msra.mxu0 %v476
    %1191 = vmatprep.subr.mxu0 %v472
    %1192 = vmatpush1.msra.mxu0 %v471
    %1193 = vmatprep.subr.mxu0 %v467
    %1194 = vmatpush1.msra.mxu0 %v466
    %1195 = vmatprep.subr.mxu0 %v462
    %1196 = vmatpush1.msra.mxu0 %v461
    %1197 = vmatprep.subr.mxu0 %v457
    %1198 = vmatpush1.msra.mxu0 %v456
    %1199 = vmatprep.subr.mxu0 %v452
    %1200 = vmatpush1.msra.mxu0 %v451
    %1201 = vmatprep.subr.mxu0 %v447
    %1202 = vmatpush1.msra.mxu0 %v446
    %1203 = vmatprep.subr.mxu0 %v442
    %1204 = vmatpush1.msra.mxu0 %v441
    %1205 = vmatprep.subr.mxu0 %v437
    %1206 = vmatpush1.msra.mxu0 %v436
    %1207 = vmatprep.subr.mxu0 %v432
    %1208 = vmatpush1.msra.mxu0 %v431
    %1209 = vmatprep.subr.mxu0 %v427
    %1210 = vmatpush1.msra.mxu0 %v426
    %1211 = vmatprep.subr.mxu0 %v422
    %1212 = vmatpush1.msra.mxu0 %v421
    %1213 = vmatprep.subr.mxu0 %v417
    %1214 = vmatpush1.msra.mxu0 %v416
    %1215 = vmatprep.subr.mxu0 %v412
    %1216 = vmatpush1.msra.mxu0 %v411
    %1217 = vmatprep.subr.mxu0 %v407
    %1218 = vmatpush1.msra.mxu0 %v406
    %1219 = vmatprep.subr.mxu0 %v402
    %1220 = vmatpush1.msra.mxu0 %v401
    %1221 = vmatprep.subr.mxu0 %v557
    %1222 = vmatpush2.msra.mxu0 %v556
    %1223 = vmatprep.subr.mxu0 %v552
    %1224 = vmatpush2.msra.mxu0 %v551
    %1225 = vmatprep.subr.mxu0 %v547
    %1226 = vmatpush2.msra.mxu0 %v546
    %1227 = vmatprep.subr.mxu0 %v542
    %1228 = vmatpush2.msra.mxu0 %v541
    %1229 = vmatprep.subr.mxu0 %v537
    %1230 = vmatpush2.msra.mxu0 %v536
    %1231 = vmatprep.subr.mxu0 %v532
    %1232 = vmatpush2.msra.mxu0 %v531
    %1233 = vmatprep.subr.mxu0 %v527
    %1234 = vmatpush2.msra.mxu0 %v526
    %1235 = vmatprep.subr.mxu0 %v522
    %1236 = vmatpush2.msra.mxu0 %v521
    %1237 = vmatprep.subr.mxu0 %v517
    %1238 = vmatpush2.msra.mxu0 %v516
    %1239 = vmatprep.subr.mxu0 %v512
    %1240 = vmatpush2.msra.mxu0 %v511
    %1241 = vmatprep.subr.mxu0 %v507
    %1242 = vmatpush2.msra.mxu0 %v506
    %1243 = vmatprep.subr.mxu0 %v502
    %1244 = vmatpush2.msra.mxu0 %v501
    %1245 = vmatprep.subr.mxu0 %v497
    %1246 = vmatpush2.msra.mxu0 %v496
    %1247 = vmatprep.subr.mxu0 %v492
    %1248 = vmatpush2.msra.mxu0 %v491
    %1249 = vmatprep.subr.mxu0 %v487
    %1250 = vmatpush2.msra.mxu0 %v486
    %1251 = vmatprep.subr.mxu0 %v482
    %1252 = vmatpush2.msra.mxu0 %v481
    %1253 = vmatprep.mubr.f32.mxu0 %v753
    %1254 = vmatmul.mubr.f32.gmra.mxu0 %v745
    %v1255 = vpop.f32.mrf.mxu0
    %v1256 = vadd.f32 %v1185, %v1255
    %v1257 = vpop.f32.mrf.mxu0
    %v1258 = vadd.f32 %v1187, %v1257
    %1259 = vdwg.mxu0
    %1260 = vmatprep.subr.mxu0 %v637
    %1261 = vmatpush1.msra.mxu0 %v636
    %1262 = vmatprep.subr.mxu0 %v632
    %1263 = vmatpush1.msra.mxu0 %v631
    %1264 = vmatprep.subr.mxu0 %v627
    %1265 = vmatpush1.msra.mxu0 %v626
    %1266 = vmatprep.subr.mxu0 %v622
    %1267 = vmatpush1.msra.mxu0 %v621
    %1268 = vmatprep.subr.mxu0 %v617
    %1269 = vmatpush1.msra.mxu0 %v616
    %1270 = vmatprep.subr.mxu0 %v612
    %1271 = vmatpush1.msra.mxu0 %v611
    %1272 = vmatprep.subr.mxu0 %v607
    %1273 = vmatpush1.msra.mxu0 %v606
    %1274 = vmatprep.subr.mxu0 %v602
    %1275 = vmatpush1.msra.mxu0 %v601
    %1276 = vmatprep.subr.mxu0 %v597
    %1277 = vmatpush1.msra.mxu0 %v596
    %1278 = vmatprep.subr.mxu0 %v592
    %1279 = vmatpush1.msra.mxu0 %v591
    %1280 = vmatprep.subr.mxu0 %v587
    %1281 = vmatpush1.msra.mxu0 %v586
    %1282 = vmatprep.subr.mxu0 %v582
    %1283 = vmatpush1.msra.mxu0 %v581
    %1284 = vmatprep.subr.mxu0 %v577
    %1285 = vmatpush1.msra.mxu0 %v576
    %1286 = vmatprep.subr.mxu0 %v572
    %1287 = vmatpush1.msra.mxu0 %v571
    %1288 = vmatprep.subr.mxu0 %v567
    %1289 = vmatpush1.msra.mxu0 %v566
    %1290 = vmatprep.subr.mxu0 %v562
    %1291 = vmatpush1.msra.mxu0 %v561
    %1292 = vmatprep.subr.mxu0 %v717
    %1293 = vmatpush2.msra.mxu0 %v716
    %1294 = vmatprep.subr.mxu0 %v712
    %1295 = vmatpush2.msra.mxu0 %v711
    %1296 = vmatprep.subr.mxu0 %v707
    %1297 = vmatpush2.msra.mxu0 %v706
    %1298 = vmatprep.subr.mxu0 %v702
    %1299 = vmatpush2.msra.mxu0 %v701
    %1300 = vmatprep.subr.mxu0 %v697
    %1301 = vmatpush2.msra.mxu0 %v696
    %1302 = vmatprep.subr.mxu0 %v692
    %1303 = vmatpush2.msra.mxu0 %v691
    %1304 = vmatprep.subr.mxu0 %v687
    %1305 = vmatpush2.msra.mxu0 %v686
    %1306 = vmatprep.subr.mxu0 %v682
    %1307 = vmatpush2.msra.mxu0 %v681
    %1308 = vmatprep.subr.mxu0 %v677
    %1309 = vmatpush2.msra.mxu0 %v676
    %1310 = vmatprep.subr.mxu0 %v672
    %1311 = vmatpush2.msra.mxu0 %v671
    %1312 = vmatprep.subr.mxu0 %v667
    %1313 = vmatpush2.msra.mxu0 %v666
    %1314 = vmatprep.subr.mxu0 %v662
    %1315 = vmatpush2.msra.mxu0 %v661
    %1316 = vmatprep.subr.mxu0 %v657
    %1317 = vmatpush2.msra.mxu0 %v656
    %1318 = vmatprep.subr.mxu0 %v652
    %1319 = vmatpush2.msra.mxu0 %v651
    %1320 = vmatprep.subr.mxu0 %v647
    %1321 = vmatpush2.msra.mxu0 %v646
    %1322 = vmatprep.subr.mxu0 %v642
    %1323 = vmatpush2.msra.mxu0 %v641
    %1324 = vmatprep.mubr.f32.mxu0 %v754
    %1325 = vmatmul.mubr.f32.gmra.mxu0 %v752
    %v1326 = vpop.f32.mrf.mxu0
    %v1327 = vadd.f32 %v1256, %v1326
    %v1328 = vpop.f32.mrf.mxu0
    %v1329 = vadd.f32 %v1258, %v1328
    %1330 = vdwg.mxu0
    %1331 = vmatprep.subr.mxu0 0.0
    %1332 = vmatpush1.msra.mxu0 %v158
    %1333 = vmatprep.subr.mxu0 0.0
    %1334 = vmatpush1.msra.mxu0 %v153
    %1335 = vmatprep.subr.mxu0 0.0
    %1336 = vmatpush1.msra.mxu0 %v148
    %1337 = vmatprep.subr.mxu0 0.0
    %1338 = vmatpush1.msra.mxu0 %v143
    %1339 = vmatprep.subr.mxu0 0.0
    %1340 = vmatpush1.msra.mxu0 %v138
    %1341 = vmatprep.subr.mxu0 0.0
    %1342 = vmatpush1.msra.mxu0 %v133
    %1343 = vmatprep.subr.mxu0 0.0
    %1344 = vmatpush1.msra.mxu0 %v128
    %1345 = vmatprep.subr.mxu0 0.0
    %1346 = vmatpush1.msra.mxu0 %v123
    %1347 = vmatprep.subr.mxu0 0.0
    %1348 = vmatpush1.msra.mxu0 %v118
    %1349 = vmatprep.subr.mxu0 0.0
    %1350 = vmatpush1.msra.mxu0 %v113
    %1351 = vmatprep.subr.mxu0 0.0
    %1352 = vmatpush1.msra.mxu0 %v108
    %1353 = vmatprep.subr.mxu0 0.0
    %1354 = vmatpush1.msra.mxu0 %v103
    %1355 = vmatprep.subr.mxu0 0.0
    %1356 = vmatpush1.msra.mxu0 %v98
    %1357 = vmatprep.subr.mxu0 0.0
    %1358 = vmatpush1.msra.mxu0 %v93
    %1359 = vmatprep.subr.mxu0 0.0
    %1360 = vmatpush1.msra.mxu0 %v88
    %1361 = vmatprep.subr.mxu0 0.0
    %1362 = vmatpush1.msra.mxu0 %v83
    %1363 = vmatprep.subr.mxu0 0.0
    %1364 = vmatpush2.msra.mxu0 %v238
    %1365 = vmatprep.subr.mxu0 0.0
    %1366 = vmatpush2.msra.mxu0 %v233
    %1367 = vmatprep.subr.mxu0 0.0
    %1368 = vmatpush2.msra.mxu0 %v228
    %1369 = vmatprep.subr.mxu0 0.0
    %1370 = vmatpush2.msra.mxu0 %v223
    %1371 = vmatprep.subr.mxu0 0.0
    %1372 = vmatpush2.msra.mxu0 %v218
    %1373 = vmatprep.subr.mxu0 0.0
    %1374 = vmatpush2.msra.mxu0 %v213
    %1375 = vmatprep.subr.mxu0 0.0
    %1376 = vmatpush2.msra.mxu0 %v208
    %1377 = vmatprep.subr.mxu0 0.0
    %1378 = vmatpush2.msra.mxu0 %v203
    %1379 = vmatprep.subr.mxu0 0.0
    %1380 = vmatpush2.msra.mxu0 %v198
    %1381 = vmatprep.subr.mxu0 0.0
    %1382 = vmatpush2.msra.mxu0 %v193
    %1383 = vmatprep.subr.mxu0 0.0
    %1384 = vmatpush2.msra.mxu0 %v188
    %1385 = vmatprep.subr.mxu0 0.0
    %1386 = vmatpush2.msra.mxu0 %v183
    %1387 = vmatprep.subr.mxu0 0.0
    %1388 = vmatpush2.msra.mxu0 %v178
    %1389 = vmatprep.subr.mxu0 0.0
    %1390 = vmatpush2.msra.mxu0 %v173
    %1391 = vmatprep.subr.mxu0 0.0
    %1392 = vmatpush2.msra.mxu0 %v168
    %1393 = vmatprep.subr.mxu0 0.0
    %1394 = vmatpush2.msra.mxu0 %v163
    %1395 = vmatprep.mubr.f32.mxu0 %v736
    %1396 = vmatmul.mubr.f32.gmra.mxu0 %v728
    %v1397 = vpop.f32.mrf.mxu0
    %v1398 = vadd.f32 0.0, %v1397
    %v1399 = vpop.f32.mrf.mxu0
    %1400 = vdwg.mxu0
    %1401 = vmatprep.subr.mxu0 0.0
    %1402 = vmatpush1.msra.mxu0 %v318
    %1403 = vmatprep.subr.mxu0 0.0
    %1404 = vmatpush1.msra.mxu0 %v313
    %1405 = vmatprep.subr.mxu0 0.0
    %1406 = vmatpush1.msra.mxu0 %v308
    %1407 = vmatprep.subr.mxu0 0.0
    %1408 = vmatpush1.msra.mxu0 %v303
    %1409 = vmatprep.subr.mxu0 0.0
    %1410 = vmatpush1.msra.mxu0 %v298
    %1411 = vmatprep.subr.mxu0 0.0
    %1412 = vmatpush1.msra.mxu0 %v293
    %1413 = vmatprep.subr.mxu0 0.0
    %1414 = vmatpush1.msra.mxu0 %v288
    %1415 = vmatprep.subr.mxu0 0.0
    %1416 = vmatpush1.msra.mxu0 %v283
    %1417 = vmatprep.subr.mxu0 0.0
    %1418 = vmatpush1.msra.mxu0 %v278
    %1419 = vmatprep.subr.mxu0 0.0
    %1420 = vmatpush1.msra.mxu0 %v273
    %1421 = vmatprep.subr.mxu0 0.0
    %1422 = vmatpush1.msra.mxu0 %v268
    %1423 = vmatprep.subr.mxu0 0.0
    %1424 = vmatpush1.msra.mxu0 %v263
    %1425 = vmatprep.subr.mxu0 0.0
    %1426 = vmatpush1.msra.mxu0 %v258
    %1427 = vmatprep.subr.mxu0 0.0
    %1428 = vmatpush1.msra.mxu0 %v253
    %1429 = vmatprep.subr.mxu0 0.0
    %1430 = vmatpush1.msra.mxu0 %v248
    %1431 = vmatprep.subr.mxu0 0.0
    %1432 = vmatpush1.msra.mxu0 %v243
    %1433 = vmatprep.subr.mxu0 0.0
    %1434 = vmatpush2.msra.mxu0 %v398
    %1435 = vmatprep.subr.mxu0 0.0
    %1436 = vmatpush2.msra.mxu0 %v393
    %1437 = vmatprep.subr.mxu0 0.0
    %1438 = vmatpush2.msra.mxu0 %v388
    %1439 = vmatprep.subr.mxu0 0.0
    %1440 = vmatpush2.msra.mxu0 %v383
    %1441 = vmatprep.subr.mxu0 0.0
    %1442 = vmatpush2.msra.mxu0 %v378
    %1443 = vmatprep.subr.mxu0 0.0
    %1444 = vmatpush2.msra.mxu0 %v373
    %1445 = vmatprep.subr.mxu0 0.0
    %1446 = vmatpush2.msra.mxu0 %v368
    %1447 = vmatprep.subr.mxu0 0.0
    %1448 = vmatpush2.msra.mxu0 %v363
    %1449 = vmatprep.subr.mxu0 0.0
    %1450 = vmatpush2.msra.mxu0 %v358
    %1451 = vmatprep.subr.mxu0 0.0
    %1452 = vmatpush2.msra.mxu0 %v353
    %1453 = vmatprep.subr.mxu0 0.0
    %1454 = vmatpush2.msra.mxu0 %v348
    %1455 = vmatprep.subr.mxu0 0.0
    %1456 = vmatpush2.msra.mxu0 %v343
    %1457 = vmatprep.subr.mxu0 0.0
    %1458 = vmatpush2.msra.mxu0 %v338
    %1459 = vmatprep.subr.mxu0 0.0
    %1460 = vmatpush2.msra.mxu0 %v333
    %1461 = vmatprep.subr.mxu0 0.0
    %1462 = vmatpush2.msra.mxu0 %v328
    %1463 = vmatprep.subr.mxu0 0.0
    %1464 = vmatpush2.msra.mxu0 %v323
    %1465 = vmatprep.mubr.f32.mxu0 %v737
    %1466 = vmatmul.mubr.f32.gmra.mxu0 %v735
    %v1467 = vpop.f32.mrf.mxu0
    %v1468 = vadd.f32 %v1398, %v1467
    %v1469 = vpop.f32.mrf.mxu0
    %1470 = vdwg.mxu0
    %1471 = vmatprep.subr.mxu0 0.0
    %1472 = vmatpush1.msra.mxu0 %v478
    %1473 = vmatprep.subr.mxu0 0.0
    %1474 = vmatpush1.msra.mxu0 %v473
    %1475 = vmatprep.subr.mxu0 0.0
    %1476 = vmatpush1.msra.mxu0 %v468
    %1477 = vmatprep.subr.mxu0 0.0
    %1478 = vmatpush1.msra.mxu0 %v463
    %1479 = vmatprep.subr.mxu0 0.0
    %1480 = vmatpush1.msra.mxu0 %v458
    %1481 = vmatprep.subr.mxu0 0.0
    %1482 = vmatpush1.msra.mxu0 %v453
    %1483 = vmatprep.subr.mxu0 0.0
    %1484 = vmatpush1.msra.mxu0 %v448
    %1485 = vmatprep.subr.mxu0 0.0
    %1486 = vmatpush1.msra.mxu0 %v443
    %1487 = vmatprep.subr.mxu0 0.0
    %1488 = vmatpush1.msra.mxu0 %v438
    %1489 = vmatprep.subr.mxu0 0.0
    %1490 = vmatpush1.msra.mxu0 %v433
    %1491 = vmatprep.subr.mxu0 0.0
    %1492 = vmatpush1.msra.mxu0 %v428
    %1493 = vmatprep.subr.mxu0 0.0
    %1494 = vmatpush1.msra.mxu0 %v423
    %1495 = vmatprep.subr.mxu0 0.0
    %1496 = vmatpush1.msra.mxu0 %v418
    %1497 = vmatprep.subr.mxu0 0.0
    %1498 = vmatpush1.msra.mxu0 %v413
    %1499 = vmatprep.subr.mxu0 0.0
    %1500 = vmatpush1.msra.mxu0 %v408
    %1501 = vmatprep.subr.mxu0 0.0
    %1502 = vmatpush1.msra.mxu0 %v403
    %1503 = vmatprep.subr.mxu0 0.0
    %1504 = vmatpush2.msra.mxu0 %v558
    %1505 = vmatprep.subr.mxu0 0.0
    %1506 = vmatpush2.msra.mxu0 %v553
    %1507 = vmatprep.subr.mxu0 0.0
    %1508 = vmatpush2.msra.mxu0 %v548
    %1509 = vmatprep.subr.mxu0 0.0
    %1510 = vmatpush2.msra.mxu0 %v543
    %1511 = vmatprep.subr.mxu0 0.0
    %1512 = vmatpush2.msra.mxu0 %v538
    %1513 = vmatprep.subr.mxu0 0.0
    %1514 = vmatpush2.msra.mxu0 %v533
    %1515 = vmatprep.subr.mxu0 0.0
    %1516 = vmatpush2.msra.mxu0 %v528
    %1517 = vmatprep.subr.mxu0 0.0
    %1518 = vmatpush2.msra.mxu0 %v523
    %1519 = vmatprep.subr.mxu0 0.0
    %1520 = vmatpush2.msra.mxu0 %v518
    %1521 = vmatprep.subr.mxu0 0.0
    %1522 = vmatpush2.msra.mxu0 %v513
    %1523 = vmatprep.subr.mxu0 0.0
    %1524 = vmatpush2.msra.mxu0 %v508
    %1525 = vmatprep.subr.mxu0 0.0
    %1526 = vmatpush2.msra.mxu0 %v503
    %1527 = vmatprep.subr.mxu0 0.0
    %1528 = vmatpush2.msra.mxu0 %v498
    %1529 = vmatprep.subr.mxu0 0.0
    %1530 = vmatpush2.msra.mxu0 %v493
    %1531 = vmatprep.subr.mxu0 0.0
    %1532 = vmatpush2.msra.mxu0 %v488
    %1533 = vmatprep.subr.mxu0 0.0
    %1534 = vmatpush2.msra.mxu0 %v483
    %1535 = vmatprep.mubr.f32.mxu0 %v753
    %1536 = vmatmul.mubr.f32.gmra.mxu0 %v745
    %v1537 = vpop.f32.mrf.mxu0
    %v1538 = vadd.f32 %v1468, %v1537
    %v1539 = vpop.f32.mrf.mxu0
    %1540 = vdwg.mxu0
    %1541 = vmatprep.subr.mxu0 0.0
    %1542 = vmatpush1.msra.mxu0 %v638
    %1543 = vmatprep.subr.mxu0 0.0
    %1544 = vmatpush1.msra.mxu0 %v633
    %1545 = vmatprep.subr.mxu0 0.0
    %1546 = vmatpush1.msra.mxu0 %v628
    %1547 = vmatprep.subr.mxu0 0.0
    %1548 = vmatpush1.msra.mxu0 %v623
    %1549 = vmatprep.subr.mxu0 0.0
    %1550 = vmatpush1.msra.mxu0 %v618
    %1551 = vmatprep.subr.mxu0 0.0
    %1552 = vmatpush1.msra.mxu0 %v613
    %1553 = vmatprep.subr.mxu0 0.0
    %1554 = vmatpush1.msra.mxu0 %v608
    %1555 = vmatprep.subr.mxu0 0.0
    %1556 = vmatpush1.msra.mxu0 %v603
    %1557 = vmatprep.subr.mxu0 0.0
    %1558 = vmatpush1.msra.mxu0 %v598
    %1559 = vmatprep.subr.mxu0 0.0
    %1560 = vmatpush1.msra.mxu0 %v593
    %1561 = vmatprep.subr.mxu0 0.0
    %1562 = vmatpush1.msra.mxu0 %v588
    %1563 = vmatprep.subr.mxu0 0.0
    %1564 = vmatpush1.msra.mxu0 %v583
    %1565 = vmatprep.subr.mxu0 0.0
    %1566 = vmatpush1.msra.mxu0 %v578
    %1567 = vmatprep.subr.mxu0 0.0
    %1568 = vmatpush1.msra.mxu0 %v573
    %1569 = vmatprep.subr.mxu0 0.0
    %1570 = vmatpush1.msra.mxu0 %v568
    %1571 = vmatprep.subr.mxu0 0.0
    %1572 = vmatpush1.msra.mxu0 %v563
    %1573 = vmatprep.subr.mxu0 0.0
    %1574 = vmatpush2.msra.mxu0 %v718
    %1575 = vmatprep.subr.mxu0 0.0
    %1576 = vmatpush2.msra.mxu0 %v713
    %1577 = vmatprep.subr.mxu0 0.0
    %1578 = vmatpush2.msra.mxu0 %v708
    %1579 = vmatprep.subr.mxu0 0.0
    %1580 = vmatpush2.msra.mxu0 %v703
    %1581 = vmatprep.subr.mxu0 0.0
    %1582 = vmatpush2.msra.mxu0 %v698
    %1583 = vmatprep.subr.mxu0 0.0
    %1584 = vmatpush2.msra.mxu0 %v693
    %1585 = vmatprep.subr.mxu0 0.0
    %1586 = vmatpush2.msra.mxu0 %v688
    %1587 = vmatprep.subr.mxu0 0.0
    %1588 = vmatpush2.msra.mxu0 %v683
    %1589 = vmatprep.subr.mxu0 0.0
    %1590 = vmatpush2.msra.mxu0 %v678
    %1591 = vmatprep.subr.mxu0 0.0
    %1592 = vmatpush2.msra.mxu0 %v673
    %1593 = vmatprep.subr.mxu0 0.0
    %1594 = vmatpush2.msra.mxu0 %v668
    %1595 = vmatprep.subr.mxu0 0.0
    %1596 = vmatpush2.msra.mxu0 %v663
    %1597 = vmatprep.subr.mxu0 0.0
    %1598 = vmatpush2.msra.mxu0 %v658
    %1599 = vmatprep.subr.mxu0 0.0
    %1600 = vmatpush2.msra.mxu0 %v653
    %1601 = vmatprep.subr.mxu0 0.0
    %1602 = vmatpush2.msra.mxu0 %v648
    %1603 = vmatprep.subr.mxu0 0.0
    %1604 = vmatpush2.msra.mxu0 %v643
    %1605 = vmatprep.mubr.f32.mxu0 %v754
    %1606 = vmatmul.mubr.f32.gmra.mxu0 %v752
    %v1607 = vpop.f32.mrf.mxu0
    %v1608 = vadd.f32 %v1538, %v1607
    %v1609 = vpop.f32.mrf.mxu0
    %1610 = vdwg.mxu0
    %v1611 = vmax.f32 %v1043, 0.0
    %v1612 = vmax.f32 %v1045, 0.0
    %v1613 = vmax.f32 %v1327, 0.0
    %v1614 = vmax.f32 %v1329, 0.0
    %v1615 = vmax.f32 %v1608, 0.0
    %v1616 = vld [vmem:[#allocation4] sm:$0xff]
    %v1617 = vld [vmem:[#allocation4 + $0x8] sm:$0xff]
    %v1618 = vld [vmem:[#allocation4 + $0x10] sm:$0xff]
    %v1619 = vld [vmem:[#allocation4 + $0x18] sm:$0xff]
    %v1620 = vld [vmem:[#allocation4 + $0x20] sm:$0xff]
    %v1621 = vld [vmem:[#allocation4 + $0x28] sm:$0xff]
    %v1622 = vld [vmem:[#allocation4 + $0x30] sm:$0xff]
    %v1623 = vld [vmem:[#allocation4 + $0x38] sm:$0xff]
    %v1624 = vld [vmem:[#allocation4 + $0x40] sm:$0xff]
    %v1625 = vld [vmem:[#allocation4 + $0x48] sm:$0xff]
    %v1626 = vld [vmem:[#allocation4 + $0x50] sm:$0xff]
    %v1627 = vld [vmem:[#allocation4 + $0x58] sm:$0xff]
    %v1628 = vld [vmem:[#allocation4 + $0x60] sm:$0xff]
    %v1629 = vld [vmem:[#allocation4 + $0x68] sm:$0xff]
    %v1630 = vld [vmem:[#allocation4 + $0x70] sm:$0xff]
    %v1631 = vld [vmem:[#allocation4 + $0x78] sm:$0xff]
    %v1632 = vld [vmem:[#allocation4 + $0x80] sm:$0xff]
    %v1633 = vld [vmem:[#allocation4 + $0x88] sm:$0xff]
    %v1634 = vld [vmem:[#allocation4 + $0x90] sm:$0xff]
    %v1635 = vld [vmem:[#allocation4 + $0x98] sm:$0xff]
    %v1636 = vld [vmem:[#allocation4 + $0xa0] sm:$0xff]
    %v1637 = vld [vmem:[#allocation4 + $0xa8] sm:$0xff]
    %v1638 = vld [vmem:[#allocation4 + $0xb0] sm:$0xff]
    %v1639 = vld [vmem:[#allocation4 + $0xb8] sm:$0xff]
    %v1640 = vld [vmem:[#allocation4 + $0xc0] sm:$0xff]
    %v1641 = vld [vmem:[#allocation4 + $0xc8] sm:$0xff]
    %v1642 = vld [vmem:[#allocation4 + $0xd0] sm:$0xff]
    %v1643 = vld [vmem:[#allocation4 + $0xd8] sm:$0xff]
    %v1644 = vld [vmem:[#allocation4 + $0xe0] sm:$0xff]
    %v1645 = vld [vmem:[#allocation4 + $0xe8] sm:$0xff]
    %v1646 = vld [vmem:[#allocation4 + $0xf0] sm:$0xff]
    %v1647 = vld [vmem:[#allocation4 + $0xf8] sm:$0xff]
    %v1648 = vld [vmem:[#allocation4 + $0x100] sm:$0xff]
    %v1649 = vld [vmem:[#allocation4 + $0x108] sm:$0xff]
    %v1650 = vld [vmem:[#allocation4 + $0x110] sm:$0xff]
    %v1651 = vld [vmem:[#allocation4 + $0x118] sm:$0xff]
    %v1652 = vld [vmem:[#allocation4 + $0x120] sm:$0xff]
    %v1653 = vld [vmem:[#allocation4 + $0x128] sm:$0xff]
    %v1654 = vld [vmem:[#allocation4 + $0x130] sm:$0xff]
    %v1655 = vld [vmem:[#allocation4 + $0x138] sm:$0xff]
    %v1656 = vld [vmem:[#allocation4 + $0x140] sm:$0xff]
    %v1657 = vld [vmem:[#allocation4 + $0x148] sm:$0xff]
    %v1658 = vld [vmem:[#allocation4 + $0x150] sm:$0xff]
    %v1659 = vld [vmem:[#allocation4 + $0x158] sm:$0xff]
    %v1660 = vld [vmem:[#allocation4 + $0x160] sm:$0xff]
    %v1661 = vld [vmem:[#allocation4 + $0x168] sm:$0xff]
    %v1662 = vld [vmem:[#allocation4 + $0x170] sm:$0xff]
    %v1663 = vld [vmem:[#allocation4 + $0x178] sm:$0xff]
    %v1664 = vld [vmem:[#allocation4 + $0x180] sm:$0xff]
    %v1665 = vld [vmem:[#allocation4 + $0x188] sm:$0xff]
    %v1666 = vld [vmem:[#allocation4 + $0x190] sm:$0xff]
    %v1667 = vld [vmem:[#allocation4 + $0x198] sm:$0xff]
    %v1668 = vld [vmem:[#allocation4 + $0x1a0] sm:$0xff]
    %v1669 = vld [vmem:[#allocation4 + $0x1a8] sm:$0xff]
    %v1670 = vld [vmem:[#allocation4 + $0x1b0] sm:$0xff]
    %v1671 = vld [vmem:[#allocation4 + $0x1b8] sm:$0xff]
    %v1672 = vld [vmem:[#allocation4 + $0x1c0] sm:$0xff]
    %v1673 = vld [vmem:[#allocation4 + $0x1c8] sm:$0xff]
    %v1674 = vld [vmem:[#allocation4 + $0x1d0] sm:$0xff]
    %v1675 = vld [vmem:[#allocation4 + $0x1d8] sm:$0xff]
    %v1676 = vld [vmem:[#allocation4 + $0x1e0] sm:$0xff]
    %v1677 = vld [vmem:[#allocation4 + $0x1e8] sm:$0xff]
    %v1678 = vld [vmem:[#allocation4 + $0x1f0] sm:$0xff]
    %v1679 = vld [vmem:[#allocation4 + $0x1f8] sm:$0xff]
    %v1680 = vld [vmem:[#allocation4 + $0x200] sm:$0xff]
    %v1681 = vld [vmem:[#allocation4 + $0x208] sm:$0xff]
    %v1682 = vld [vmem:[#allocation4 + $0x210] sm:$0xff]
    %v1683 = vld [vmem:[#allocation4 + $0x218] sm:$0xff]
    %v1684 = vld [vmem:[#allocation4 + $0x220] sm:$0xff]
    %v1685 = vld [vmem:[#allocation4 + $0x228] sm:$0xff]
    %v1686 = vld [vmem:[#allocation4 + $0x230] sm:$0xff]
    %v1687 = vld [vmem:[#allocation4 + $0x238] sm:$0xff]
    %v1688 = vld [vmem:[#allocation4 + $0x240] sm:$0xff]
    %v1689 = vld [vmem:[#allocation4 + $0x248] sm:$0xff]
    %v1690 = vld [vmem:[#allocation4 + $0x250] sm:$0xff]
    %v1691 = vld [vmem:[#allocation4 + $0x258] sm:$0xff]
    %v1692 = vld [vmem:[#allocation4 + $0x260] sm:$0xff]
    %v1693 = vld [vmem:[#allocation4 + $0x268] sm:$0xff]
    %v1694 = vld [vmem:[#allocation4 + $0x270] sm:$0xff]
    %v1695 = vld [vmem:[#allocation4 + $0x278] sm:$0xff]
    %v1696 = vld [vmem:[#allocation4 + $0x280] sm:$0xff]
    %v1697 = vld [vmem:[#allocation4 + $0x288] sm:$0xff]
    %v1698 = vld [vmem:[#allocation4 + $0x290] sm:$0xff]
    %v1699 = vld [vmem:[#allocation4 + $0x298] sm:$0xff]
    %v1700 = vld [vmem:[#allocation4 + $0x2a0] sm:$0xff]
    %v1701 = vld [vmem:[#allocation4 + $0x2a8] sm:$0xff]
    %v1702 = vld [vmem:[#allocation4 + $0x2b0] sm:$0xff]
    %v1703 = vld [vmem:[#allocation4 + $0x2b8] sm:$0xff]
    %v1704 = vld [vmem:[#allocation4 + $0x2c0] sm:$0xff]
    %v1705 = vld [vmem:[#allocation4 + $0x2c8] sm:$0xff]
    %v1706 = vld [vmem:[#allocation4 + $0x2d0] sm:$0xff]
    %v1707 = vld [vmem:[#allocation4 + $0x2d8] sm:$0xff]
    %v1708 = vld [vmem:[#allocation4 + $0x2e0] sm:$0xff]
    %v1709 = vld [vmem:[#allocation4 + $0x2e8] sm:$0xff]
    %v1710 = vld [vmem:[#allocation4 + $0x2f0] sm:$0xff]
    %v1711 = vld [vmem:[#allocation4 + $0x2f8] sm:$0xff]
    %v1712 = vld [vmem:[#allocation4 + $0x300] sm:$0xff]
    %v1713 = vld [vmem:[#allocation4 + $0x308] sm:$0xff]
    %v1714 = vld [vmem:[#allocation4 + $0x310] sm:$0xff]
    %v1715 = vld [vmem:[#allocation4 + $0x318] sm:$0xff]
    %v1716 = vld [vmem:[#allocation4 + $0x320] sm:$0xff]
    %v1717 = vld [vmem:[#allocation4 + $0x328] sm:$0xff]
    %v1718 = vld [vmem:[#allocation4 + $0x330] sm:$0xff]
    %v1719 = vld [vmem:[#allocation4 + $0x338] sm:$0xff]
    %v1720 = vld [vmem:[#allocation4 + $0x340] sm:$0xff]
    %v1721 = vld [vmem:[#allocation4 + $0x348] sm:$0xff]
    %v1722 = vld [vmem:[#allocation4 + $0x350] sm:$0xff]
    %v1723 = vld [vmem:[#allocation4 + $0x358] sm:$0xff]
    %v1724 = vld [vmem:[#allocation4 + $0x360] sm:$0xff]
    %v1725 = vld [vmem:[#allocation4 + $0x368] sm:$0xff]
    %v1726 = vld [vmem:[#allocation4 + $0x370] sm:$0xff]
    %v1727 = vld [vmem:[#allocation4 + $0x378] sm:$0xff]
    %v1728 = vld [vmem:[#allocation4 + $0x380] sm:$0xff]
    %v1729 = vld [vmem:[#allocation4 + $0x388] sm:$0xff]
    %v1730 = vld [vmem:[#allocation4 + $0x390] sm:$0xff]
    %v1731 = vld [vmem:[#allocation4 + $0x398] sm:$0xff]
    %v1732 = vld [vmem:[#allocation4 + $0x3a0] sm:$0xff]
    %v1733 = vld [vmem:[#allocation4 + $0x3a8] sm:$0xff]
    %v1734 = vld [vmem:[#allocation4 + $0x3b0] sm:$0xff]
    %v1735 = vld [vmem:[#allocation4 + $0x3b8] sm:$0xff]
    %v1736 = vld [vmem:[#allocation4 + $0x3c0] sm:$0xff]
    %v1737 = vld [vmem:[#allocation4 + $0x3c8] sm:$0xff]
    %v1738 = vld [vmem:[#allocation4 + $0x3d0] sm:$0xff]
    %v1739 = vld [vmem:[#allocation4 + $0x3d8] sm:$0xff]
    %v1740 = vld [vmem:[#allocation4 + $0x3e0] sm:$0xff]
    %v1741 = vld [vmem:[#allocation4 + $0x3e8] sm:$0xff]
    %v1742 = vld [vmem:[#allocation4 + $0x3f0] sm:$0xff]
    %v1743 = vld [vmem:[#allocation4 + $0x3f8] sm:$0xff]
    %v1744 = vld [vmem:[#allocation4 + $0x400] sm:$0xff]
    %v1745 = vld [vmem:[#allocation4 + $0x408] sm:$0xff]
    %v1746 = vld [vmem:[#allocation4 + $0x410] sm:$0xff]
    %v1747 = vld [vmem:[#allocation4 + $0x418] sm:$0xff]
    %v1748 = vld [vmem:[#allocation4 + $0x420] sm:$0xff]
    %v1749 = vld [vmem:[#allocation4 + $0x428] sm:$0xff]
    %v1750 = vld [vmem:[#allocation4 + $0x430] sm:$0xff]
    %v1751 = vld [vmem:[#allocation4 + $0x438] sm:$0xff]
    %v1752 = vld [vmem:[#allocation4 + $0x440] sm:$0xff]
    %v1753 = vld [vmem:[#allocation4 + $0x448] sm:$0xff]
    %v1754 = vld [vmem:[#allocation4 + $0x450] sm:$0xff]
    %v1755 = vld [vmem:[#allocation4 + $0x458] sm:$0xff]
    %v1756 = vld [vmem:[#allocation4 + $0x460] sm:$0xff]
    %v1757 = vld [vmem:[#allocation4 + $0x468] sm:$0xff]
    %v1758 = vld [vmem:[#allocation4 + $0x470] sm:$0xff]
    %v1759 = vld [vmem:[#allocation4 + $0x478] sm:$0xff]
    %v1760 = vld [vmem:[#allocation4 + $0x480] sm:$0xff]
    %v1761 = vld [vmem:[#allocation4 + $0x488] sm:$0xff]
    %v1762 = vld [vmem:[#allocation4 + $0x490] sm:$0xff]
    %v1763 = vld [vmem:[#allocation4 + $0x498] sm:$0xff]
    %v1764 = vld [vmem:[#allocation4 + $0x4a0] sm:$0xff]
    %v1765 = vld [vmem:[#allocation4 + $0x4a8] sm:$0xff]
    %v1766 = vld [vmem:[#allocation4 + $0x4b0] sm:$0xff]
    %v1767 = vld [vmem:[#allocation4 + $0x4b8] sm:$0xff]
    %v1768 = vld [vmem:[#allocation4 + $0x4c0] sm:$0xff]
    %v1769 = vld [vmem:[#allocation4 + $0x4c8] sm:$0xff]
    %v1770 = vld [vmem:[#allocation4 + $0x4d0] sm:$0xff]
    %v1771 = vld [vmem:[#allocation4 + $0x4d8] sm:$0xff]
    %v1772 = vld [vmem:[#allocation4 + $0x4e0] sm:$0xff]
    %v1773 = vld [vmem:[#allocation4 + $0x4e8] sm:$0xff]
    %v1774 = vld [vmem:[#allocation4 + $0x4f0] sm:$0xff]
    %v1775 = vld [vmem:[#allocation4 + $0x4f8] sm:$0xff]
    %v1776 = vld [vmem:[#allocation4 + $0x500] sm:$0xff]
    %v1777 = vld [vmem:[#allocation4 + $0x508] sm:$0xff]
    %v1778 = vld [vmem:[#allocation4 + $0x510] sm:$0xff]
    %v1779 = vld [vmem:[#allocation4 + $0x518] sm:$0xff]
    %v1780 = vld [vmem:[#allocation4 + $0x520] sm:$0xff]
    %v1781 = vld [vmem:[#allocation4 + $0x528] sm:$0xff]
    %v1782 = vld [vmem:[#allocation4 + $0x530] sm:$0xff]
    %v1783 = vld [vmem:[#allocation4 + $0x538] sm:$0xff]
    %v1784 = vld [vmem:[#allocation4 + $0x540] sm:$0xff]
    %v1785 = vld [vmem:[#allocation4 + $0x548] sm:$0xff]
    %v1786 = vld [vmem:[#allocation4 + $0x550] sm:$0xff]
    %v1787 = vld [vmem:[#allocation4 + $0x558] sm:$0xff]
    %v1788 = vld [vmem:[#allocation4 + $0x560] sm:$0xff]
    %v1789 = vld [vmem:[#allocation4 + $0x568] sm:$0xff]
    %v1790 = vld [vmem:[#allocation4 + $0x570] sm:$0xff]
    %v1791 = vld [vmem:[#allocation4 + $0x578] sm:$0xff]
    %v1792 = vld [vmem:[#allocation4 + $0x580] sm:$0xff]
    %v1793 = vld [vmem:[#allocation4 + $0x588] sm:$0xff]
    %v1794 = vld [vmem:[#allocation4 + $0x590] sm:$0xff]
    %v1795 = vld [vmem:[#allocation4 + $0x598] sm:$0xff]
    %v1796 = vld [vmem:[#allocation4 + $0x5a0] sm:$0xff]
    %v1797 = vld [vmem:[#allocation4 + $0x5a8] sm:$0xff]
    %v1798 = vld [vmem:[#allocation4 + $0x5b0] sm:$0xff]
    %v1799 = vld [vmem:[#allocation4 + $0x5b8] sm:$0xff]
    %v1800 = vld [vmem:[#allocation4 + $0x5c0] sm:$0xff]
    %v1801 = vld [vmem:[#allocation4 + $0x5c8] sm:$0xff]
    %v1802 = vld [vmem:[#allocation4 + $0x5d0] sm:$0xff]
    %v1803 = vld [vmem:[#allocation4 + $0x5d8] sm:$0xff]
    %v1804 = vld [vmem:[#allocation4 + $0x5e0] sm:$0xff]
    %v1805 = vld [vmem:[#allocation4 + $0x5e8] sm:$0xff]
    %v1806 = vld [vmem:[#allocation4 + $0x5f0] sm:$0xff]
    %v1807 = vld [vmem:[#allocation4 + $0x5f8] sm:$0xff]
    %v1808 = vld [vmem:[#allocation4 + $0x600] sm:$0xff]
    %v1809 = vld [vmem:[#allocation4 + $0x608] sm:$0xff]
    %v1810 = vld [vmem:[#allocation4 + $0x610] sm:$0xff]
    %v1811 = vld [vmem:[#allocation4 + $0x618] sm:$0xff]
    %v1812 = vld [vmem:[#allocation4 + $0x620] sm:$0xff]
    %v1813 = vld [vmem:[#allocation4 + $0x628] sm:$0xff]
    %v1814 = vld [vmem:[#allocation4 + $0x630] sm:$0xff]
    %v1815 = vld [vmem:[#allocation4 + $0x638] sm:$0xff]
    %v1816 = vld [vmem:[#allocation4 + $0x640] sm:$0xff]
    %v1817 = vld [vmem:[#allocation4 + $0x648] sm:$0xff]
    %v1818 = vld [vmem:[#allocation4 + $0x650] sm:$0xff]
    %v1819 = vld [vmem:[#allocation4 + $0x658] sm:$0xff]
    %v1820 = vld [vmem:[#allocation4 + $0x660] sm:$0xff]
    %v1821 = vld [vmem:[#allocation4 + $0x668] sm:$0xff]
    %v1822 = vld [vmem:[#allocation4 + $0x670] sm:$0xff]
    %v1823 = vld [vmem:[#allocation4 + $0x678] sm:$0xff]
    %v1824 = vld [vmem:[#allocation4 + $0x680] sm:$0xff]
    %v1825 = vld [vmem:[#allocation4 + $0x688] sm:$0xff]
    %v1826 = vld [vmem:[#allocation4 + $0x690] sm:$0xff]
    %v1827 = vld [vmem:[#allocation4 + $0x698] sm:$0xff]
    %v1828 = vld [vmem:[#allocation4 + $0x6a0] sm:$0xff]
    %v1829 = vld [vmem:[#allocation4 + $0x6a8] sm:$0xff]
    %v1830 = vld [vmem:[#allocation4 + $0x6b0] sm:$0xff]
    %v1831 = vld [vmem:[#allocation4 + $0x6b8] sm:$0xff]
    %v1832 = vld [vmem:[#allocation4 + $0x6c0] sm:$0xff]
    %v1833 = vld [vmem:[#allocation4 + $0x6c8] sm:$0xff]
    %v1834 = vld [vmem:[#allocation4 + $0x6d0] sm:$0xff]
    %v1835 = vld [vmem:[#allocation4 + $0x6d8] sm:$0xff]
    %v1836 = vld [vmem:[#allocation4 + $0x6e0] sm:$0xff]
    %v1837 = vld [vmem:[#allocation4 + $0x6e8] sm:$0xff]
    %v1838 = vld [vmem:[#allocation4 + $0x6f0] sm:$0xff]
    %v1839 = vld [vmem:[#allocation4 + $0x6f8] sm:$0xff]
    %v1840 = vld [vmem:[#allocation4 + $0x700] sm:$0xff]
    %v1841 = vld [vmem:[#allocation4 + $0x708] sm:$0xff]
    %v1842 = vld [vmem:[#allocation4 + $0x710] sm:$0xff]
    %v1843 = vld [vmem:[#allocation4 + $0x718] sm:$0xff]
    %v1844 = vld [vmem:[#allocation4 + $0x720] sm:$0xff]
    %v1845 = vld [vmem:[#allocation4 + $0x728] sm:$0xff]
    %v1846 = vld [vmem:[#allocation4 + $0x730] sm:$0xff]
    %v1847 = vld [vmem:[#allocation4 + $0x738] sm:$0xff]
    %v1848 = vld [vmem:[#allocation4 + $0x740] sm:$0xff]
    %v1849 = vld [vmem:[#allocation4 + $0x748] sm:$0xff]
    %v1850 = vld [vmem:[#allocation4 + $0x750] sm:$0xff]
    %v1851 = vld [vmem:[#allocation4 + $0x758] sm:$0xff]
    %v1852 = vld [vmem:[#allocation4 + $0x760] sm:$0xff]
    %v1853 = vld [vmem:[#allocation4 + $0x768] sm:$0xff]
    %v1854 = vld [vmem:[#allocation4 + $0x770] sm:$0xff]
    %v1855 = vld [vmem:[#allocation4 + $0x778] sm:$0xff]
    %v1856 = vld [vmem:[#allocation4 + $0x780] sm:$0xff]
    %v1857 = vld [vmem:[#allocation4 + $0x788] sm:$0xff]
    %v1858 = vld [vmem:[#allocation4 + $0x790] sm:$0xff]
    %v1859 = vld [vmem:[#allocation4 + $0x798] sm:$0xff]
    %v1860 = vld [vmem:[#allocation4 + $0x7a0] sm:$0xff]
    %v1861 = vld [vmem:[#allocation4 + $0x7a8] sm:$0xff]
    %v1862 = vld [vmem:[#allocation4 + $0x7b0] sm:$0xff]
    %v1863 = vld [vmem:[#allocation4 + $0x7b8] sm:$0xff]
    %v1864 = vld [vmem:[#allocation4 + $0x7c0] sm:$0xff]
    %v1865 = vld [vmem:[#allocation4 + $0x7c8] sm:$0xff]
    %v1866 = vld [vmem:[#allocation4 + $0x7d0] sm:$0xff]
    %v1867 = vld [vmem:[#allocation4 + $0x7d8] sm:$0xff]
    %v1868 = vld [vmem:[#allocation4 + $0x7e0] sm:$0xff]
    %v1869 = vld [vmem:[#allocation4 + $0x7e8] sm:$0xff]
    %v1870 = vld [vmem:[#allocation4 + $0x7f0] sm:$0xff]
    %v1871 = vld [vmem:[#allocation4 + $0x7f8] sm:$0xff]
    %v1872 = vld [vmem:[#allocation4 + $0x800] sm:$0xff]
    %v1873 = vld [vmem:[#allocation4 + $0x808] sm:$0xff]
    %v1874 = vld [vmem:[#allocation4 + $0x810] sm:$0xff]
    %v1875 = vld [vmem:[#allocation4 + $0x818] sm:$0xff]
    %v1876 = vld [vmem:[#allocation4 + $0x820] sm:$0xff]
    %v1877 = vld [vmem:[#allocation4 + $0x828] sm:$0xff]
    %v1878 = vld [vmem:[#allocation4 + $0x830] sm:$0xff]
    %v1879 = vld [vmem:[#allocation4 + $0x838] sm:$0xff]
    %v1880 = vld [vmem:[#allocation4 + $0x840] sm:$0xff]
    %v1881 = vld [vmem:[#allocation4 + $0x848] sm:$0xff]
    %v1882 = vld [vmem:[#allocation4 + $0x850] sm:$0xff]
    %v1883 = vld [vmem:[#allocation4 + $0x858] sm:$0xff]
    %v1884 = vld [vmem:[#allocation4 + $0x860] sm:$0xff]
    %v1885 = vld [vmem:[#allocation4 + $0x868] sm:$0xff]
    %v1886 = vld [vmem:[#allocation4 + $0x870] sm:$0xff]
    %v1887 = vld [vmem:[#allocation4 + $0x878] sm:$0xff]
    %v1888 = vld [vmem:[#allocation4 + $0x880] sm:$0xff]
    %v1889 = vld [vmem:[#allocation4 + $0x888] sm:$0xff]
    %v1890 = vld [vmem:[#allocation4 + $0x890] sm:$0xff]
    %v1891 = vld [vmem:[#allocation4 + $0x898] sm:$0xff]
    %v1892 = vld [vmem:[#allocation4 + $0x8a0] sm:$0xff]
    %v1893 = vld [vmem:[#allocation4 + $0x8a8] sm:$0xff]
    %v1894 = vld [vmem:[#allocation4 + $0x8b0] sm:$0xff]
    %v1895 = vld [vmem:[#allocation4 + $0x8b8] sm:$0xff]
    %v1896 = vld [vmem:[#allocation4 + $0x8c0] sm:$0xff]
    %v1897 = vld [vmem:[#allocation4 + $0x8c8] sm:$0xff]
    %v1898 = vld [vmem:[#allocation4 + $0x8d0] sm:$0xff]
    %v1899 = vld [vmem:[#allocation4 + $0x8d8] sm:$0xff]
    %v1900 = vld [vmem:[#allocation4 + $0x8e0] sm:$0xff]
    %v1901 = vld [vmem:[#allocation4 + $0x8e8] sm:$0xff]
    %v1902 = vld [vmem:[#allocation4 + $0x8f0] sm:$0xff]
    %v1903 = vld [vmem:[#allocation4 + $0x8f8] sm:$0xff]
    %v1904 = vld [vmem:[#allocation4 + $0x900] sm:$0xff]
    %v1905 = vld [vmem:[#allocation4 + $0x908] sm:$0xff]
    %v1906 = vld [vmem:[#allocation4 + $0x910] sm:$0xff]
    %v1907 = vld [vmem:[#allocation4 + $0x918] sm:$0xff]
    %v1908 = vld [vmem:[#allocation4 + $0x920] sm:$0xff]
    %v1909 = vld [vmem:[#allocation4 + $0x928] sm:$0xff]
    %v1910 = vld [vmem:[#allocation4 + $0x930] sm:$0xff]
    %v1911 = vld [vmem:[#allocation4 + $0x938] sm:$0xff]
    %v1912 = vld [vmem:[#allocation4 + $0x940] sm:$0xff]
    %v1913 = vld [vmem:[#allocation4 + $0x948] sm:$0xff]
    %v1914 = vld [vmem:[#allocation4 + $0x950] sm:$0xff]
    %v1915 = vld [vmem:[#allocation4 + $0x958] sm:$0xff]
    %v1916 = vld [vmem:[#allocation4 + $0x960] sm:$0xff]
    %v1917 = vld [vmem:[#allocation4 + $0x968] sm:$0xff]
    %v1918 = vld [vmem:[#allocation4 + $0x970] sm:$0xff]
    %v1919 = vld [vmem:[#allocation4 + $0x978] sm:$0xff]
    %v1920 = vld [vmem:[#allocation4 + $0x980] sm:$0xff]
    %v1921 = vld [vmem:[#allocation4 + $0x988] sm:$0xff]
    %v1922 = vld [vmem:[#allocation4 + $0x990] sm:$0xff]
    %v1923 = vld [vmem:[#allocation4 + $0x998] sm:$0xff]
    %v1924 = vld [vmem:[#allocation4 + $0x9a0] sm:$0xff]
    %v1925 = vld [vmem:[#allocation4 + $0x9a8] sm:$0xff]
    %v1926 = vld [vmem:[#allocation4 + $0x9b0] sm:$0xff]
    %v1927 = vld [vmem:[#allocation4 + $0x9b8] sm:$0xff]
    %v1928 = vld [vmem:[#allocation4 + $0x9c0] sm:$0xff]
    %v1929 = vld [vmem:[#allocation4 + $0x9c8] sm:$0xff]
    %v1930 = vld [vmem:[#allocation4 + $0x9d0] sm:$0xff]
    %v1931 = vld [vmem:[#allocation4 + $0x9d8] sm:$0xff]
    %v1932 = vld [vmem:[#allocation4 + $0x9e0] sm:$0xff]
    %v1933 = vld [vmem:[#allocation4 + $0x9e8] sm:$0xff]
    %v1934 = vld [vmem:[#allocation4 + $0x9f0] sm:$0xff]
    %v1935 = vld [vmem:[#allocation4 + $0x9f8] sm:$0xff]
    %v1936 = vld [vmem:[#allocation4 + $0xa00] sm:$0xff]
    %v1937 = vld [vmem:[#allocation4 + $0xa08] sm:$0xff]
    %v1938 = vld [vmem:[#allocation4 + $0xa10] sm:$0xff]
    %v1939 = vld [vmem:[#allocation4 + $0xa18] sm:$0xff]
    %v1940 = vld [vmem:[#allocation4 + $0xa20] sm:$0xff]
    %v1941 = vld [vmem:[#allocation4 + $0xa28] sm:$0xff]
    %v1942 = vld [vmem:[#allocation4 + $0xa30] sm:$0xff]
    %v1943 = vld [vmem:[#allocation4 + $0xa38] sm:$0xff]
    %v1944 = vld [vmem:[#allocation4 + $0xa40] sm:$0xff]
    %v1945 = vld [vmem:[#allocation4 + $0xa48] sm:$0xff]
    %v1946 = vld [vmem:[#allocation4 + $0xa50] sm:$0xff]
    %v1947 = vld [vmem:[#allocation4 + $0xa58] sm:$0xff]
    %v1948 = vld [vmem:[#allocation4 + $0xa60] sm:$0xff]
    %v1949 = vld [vmem:[#allocation4 + $0xa68] sm:$0xff]
    %v1950 = vld [vmem:[#allocation4 + $0xa70] sm:$0xff]
    %v1951 = vld [vmem:[#allocation4 + $0xa78] sm:$0xff]
    %v1952 = vld [vmem:[#allocation4 + $0xa80] sm:$0xff]
    %v1953 = vld [vmem:[#allocation4 + $0xa88] sm:$0xff]
    %v1954 = vld [vmem:[#allocation4 + $0xa90] sm:$0xff]
    %v1955 = vld [vmem:[#allocation4 + $0xa98] sm:$0xff]
    %v1956 = vld [vmem:[#allocation4 + $0xaa0] sm:$0xff]
    %v1957 = vld [vmem:[#allocation4 + $0xaa8] sm:$0xff]
    %v1958 = vld [vmem:[#allocation4 + $0xab0] sm:$0xff]
    %v1959 = vld [vmem:[#allocation4 + $0xab8] sm:$0xff]
    %v1960 = vld [vmem:[#allocation4 + $0xac0] sm:$0xff]
    %v1961 = vld [vmem:[#allocation4 + $0xac8] sm:$0xff]
    %v1962 = vld [vmem:[#allocation4 + $0xad0] sm:$0xff]
    %v1963 = vld [vmem:[#allocation4 + $0xad8] sm:$0xff]
    %v1964 = vld [vmem:[#allocation4 + $0xae0] sm:$0xff]
    %v1965 = vld [vmem:[#allocation4 + $0xae8] sm:$0xff]
    %v1966 = vld [vmem:[#allocation4 + $0xaf0] sm:$0xff]
    %v1967 = vld [vmem:[#allocation4 + $0xaf8] sm:$0xff]
    %v1968 = vld [vmem:[#allocation4 + $0xb00] sm:$0xff]
    %v1969 = vld [vmem:[#allocation4 + $0xb08] sm:$0xff]
    %v1970 = vld [vmem:[#allocation4 + $0xb10] sm:$0xff]
    %v1971 = vld [vmem:[#allocation4 + $0xb18] sm:$0xff]
    %v1972 = vld [vmem:[#allocation4 + $0xb20] sm:$0xff]
    %v1973 = vld [vmem:[#allocation4 + $0xb28] sm:$0xff]
    %v1974 = vld [vmem:[#allocation4 + $0xb30] sm:$0xff]
    %v1975 = vld [vmem:[#allocation4 + $0xb38] sm:$0xff]
    %v1976 = vld [vmem:[#allocation4 + $0xb40] sm:$0xff]
    %v1977 = vld [vmem:[#allocation4 + $0xb48] sm:$0xff]
    %v1978 = vld [vmem:[#allocation4 + $0xb50] sm:$0xff]
    %v1979 = vld [vmem:[#allocation4 + $0xb58] sm:$0xff]
    %v1980 = vld [vmem:[#allocation4 + $0xb60] sm:$0xff]
    %v1981 = vld [vmem:[#allocation4 + $0xb68] sm:$0xff]
    %v1982 = vld [vmem:[#allocation4 + $0xb70] sm:$0xff]
    %v1983 = vld [vmem:[#allocation4 + $0xb78] sm:$0xff]
    %v1984 = vld [vmem:[#allocation4 + $0xb80] sm:$0xff]
    %v1985 = vld [vmem:[#allocation4 + $0xb88] sm:$0xff]
    %v1986 = vld [vmem:[#allocation4 + $0xb90] sm:$0xff]
    %v1987 = vld [vmem:[#allocation4 + $0xb98] sm:$0xff]
    %v1988 = vld [vmem:[#allocation4 + $0xba0] sm:$0xff]
    %v1989 = vld [vmem:[#allocation4 + $0xba8] sm:$0xff]
    %v1990 = vld [vmem:[#allocation4 + $0xbb0] sm:$0xff]
    %v1991 = vld [vmem:[#allocation4 + $0xbb8] sm:$0xff]
    %v1992 = vld [vmem:[#allocation4 + $0xbc0] sm:$0xff]
    %v1993 = vld [vmem:[#allocation4 + $0xbc8] sm:$0xff]
    %v1994 = vld [vmem:[#allocation4 + $0xbd0] sm:$0xff]
    %v1995 = vld [vmem:[#allocation4 + $0xbd8] sm:$0xff]
    %v1996 = vld [vmem:[#allocation4 + $0xbe0] sm:$0xff]
    %v1997 = vld [vmem:[#allocation4 + $0xbe8] sm:$0xff]
    %v1998 = vld [vmem:[#allocation4 + $0xbf0] sm:$0xff]
    %v1999 = vld [vmem:[#allocation4 + $0xbf8] sm:$0xff]
    %v2000 = vld [vmem:[#allocation4 + $0xc00] sm:$0xff]
    %v2001 = vld [vmem:[#allocation4 + $0xc08] sm:$0xff]
    %v2002 = vld [vmem:[#allocation4 + $0xc10] sm:$0xff]
    %v2003 = vld [vmem:[#allocation4 + $0xc18] sm:$0xff]
    %v2004 = vld [vmem:[#allocation4 + $0xc20] sm:$0xff]
    %v2005 = vld [vmem:[#allocation4 + $0xc28] sm:$0xff]
    %v2006 = vld [vmem:[#allocation4 + $0xc30] sm:$0xff]
    %v2007 = vld [vmem:[#allocation4 + $0xc38] sm:$0xff]
    %v2008 = vld [vmem:[#allocation4 + $0xc40] sm:$0xff]
    %v2009 = vld [vmem:[#allocation4 + $0xc48] sm:$0xff]
    %v2010 = vld [vmem:[#allocation4 + $0xc50] sm:$0xff]
    %v2011 = vld [vmem:[#allocation4 + $0xc58] sm:$0xff]
    %v2012 = vld [vmem:[#allocation4 + $0xc60] sm:$0xff]
    %v2013 = vld [vmem:[#allocation4 + $0xc68] sm:$0xff]
    %v2014 = vld [vmem:[#allocation4 + $0xc70] sm:$0xff]
    %v2015 = vld [vmem:[#allocation4 + $0xc78] sm:$0xff]
    %v2016 = vld [vmem:[#allocation4 + $0xc80] sm:$0xff]
    %v2017 = vld [vmem:[#allocation4 + $0xc88] sm:$0xff]
    %v2018 = vld [vmem:[#allocation4 + $0xc90] sm:$0xff]
    %v2019 = vld [vmem:[#allocation4 + $0xc98] sm:$0xff]
    %v2020 = vld [vmem:[#allocation4 + $0xca0] sm:$0xff]
    %v2021 = vld [vmem:[#allocation4 + $0xca8] sm:$0xff]
    %v2022 = vld [vmem:[#allocation4 + $0xcb0] sm:$0xff]
    %v2023 = vld [vmem:[#allocation4 + $0xcb8] sm:$0xff]
    %v2024 = vld [vmem:[#allocation4 + $0xcc0] sm:$0xff]
    %v2025 = vld [vmem:[#allocation4 + $0xcc8] sm:$0xff]
    %v2026 = vld [vmem:[#allocation4 + $0xcd0] sm:$0xff]
    %v2027 = vld [vmem:[#allocation4 + $0xcd8] sm:$0xff]
    %v2028 = vld [vmem:[#allocation4 + $0xce0] sm:$0xff]
    %v2029 = vld [vmem:[#allocation4 + $0xce8] sm:$0xff]
    %v2030 = vld [vmem:[#allocation4 + $0xcf0] sm:$0xff]
    %v2031 = vld [vmem:[#allocation4 + $0xcf8] sm:$0xff]
    %v2032 = vld [vmem:[#allocation4 + $0xd00] sm:$0xff]
    %v2033 = vld [vmem:[#allocation4 + $0xd08] sm:$0xff]
    %v2034 = vld [vmem:[#allocation4 + $0xd10] sm:$0xff]
    %v2035 = vld [vmem:[#allocation4 + $0xd18] sm:$0xff]
    %v2036 = vld [vmem:[#allocation4 + $0xd20] sm:$0xff]
    %v2037 = vld [vmem:[#allocation4 + $0xd28] sm:$0xff]
    %v2038 = vld [vmem:[#allocation4 + $0xd30] sm:$0xff]
    %v2039 = vld [vmem:[#allocation4 + $0xd38] sm:$0xff]
    %v2040 = vld [vmem:[#allocation4 + $0xd40] sm:$0xff]
    %v2041 = vld [vmem:[#allocation4 + $0xd48] sm:$0xff]
    %v2042 = vld [vmem:[#allocation4 + $0xd50] sm:$0xff]
    %v2043 = vld [vmem:[#allocation4 + $0xd58] sm:$0xff]
    %v2044 = vld [vmem:[#allocation4 + $0xd60] sm:$0xff]
    %v2045 = vld [vmem:[#allocation4 + $0xd68] sm:$0xff]
    %v2046 = vld [vmem:[#allocation4 + $0xd70] sm:$0xff]
    %v2047 = vld [vmem:[#allocation4 + $0xd78] sm:$0xff]
    %v2048 = vld [vmem:[#allocation4 + $0xd80] sm:$0xff]
    %v2049 = vld [vmem:[#allocation4 + $0xd88] sm:$0xff]
    %v2050 = vld [vmem:[#allocation4 + $0xd90] sm:$0xff]
    %v2051 = vld [vmem:[#allocation4 + $0xd98] sm:$0xff]
    %v2052 = vld [vmem:[#allocation4 + $0xda0] sm:$0xff]
    %v2053 = vld [vmem:[#allocation4 + $0xda8] sm:$0xff]
    %v2054 = vld [vmem:[#allocation4 + $0xdb0] sm:$0xff]
    %v2055 = vld [vmem:[#allocation4 + $0xdb8] sm:$0xff]
    %v2056 = vld [vmem:[#allocation4 + $0xdc0] sm:$0xff]
    %v2057 = vld [vmem:[#allocation4 + $0xdc8] sm:$0xff]
    %v2058 = vld [vmem:[#allocation4 + $0xdd0] sm:$0xff]
    %v2059 = vld [vmem:[#allocation4 + $0xdd8] sm:$0xff]
    %v2060 = vld [vmem:[#allocation4 + $0xde0] sm:$0xff]
    %v2061 = vld [vmem:[#allocation4 + $0xde8] sm:$0xff]
    %v2062 = vld [vmem:[#allocation4 + $0xdf0] sm:$0xff]
    %v2063 = vld [vmem:[#allocation4 + $0xdf8] sm:$0xff]
    %v2064 = vld [vmem:[#allocation4 + $0xe00] sm:$0xff]
    %v2065 = vld [vmem:[#allocation4 + $0xe08] sm:$0xff]
    %v2066 = vld [vmem:[#allocation4 + $0xe10] sm:$0xff]
    %v2067 = vld [vmem:[#allocation4 + $0xe18] sm:$0xff]
    %v2068 = vld [vmem:[#allocation4 + $0xe20] sm:$0xff]
    %v2069 = vld [vmem:[#allocation4 + $0xe28] sm:$0xff]
    %v2070 = vld [vmem:[#allocation4 + $0xe30] sm:$0xff]
    %v2071 = vld [vmem:[#allocation4 + $0xe38] sm:$0xff]
    %v2072 = vld [vmem:[#allocation4 + $0xe40] sm:$0xff]
    %v2073 = vld [vmem:[#allocation4 + $0xe48] sm:$0xff]
    %v2074 = vld [vmem:[#allocation4 + $0xe50] sm:$0xff]
    %v2075 = vld [vmem:[#allocation4 + $0xe58] sm:$0xff]
    %v2076 = vld [vmem:[#allocation4 + $0xe60] sm:$0xff]
    %v2077 = vld [vmem:[#allocation4 + $0xe68] sm:$0xff]
    %v2078 = vld [vmem:[#allocation4 + $0xe70] sm:$0xff]
    %v2079 = vld [vmem:[#allocation4 + $0xe78] sm:$0xff]
    %v2080 = vld [vmem:[#allocation4 + $0xe80] sm:$0xff]
    %v2081 = vld [vmem:[#allocation4 + $0xe88] sm:$0xff]
    %v2082 = vld [vmem:[#allocation4 + $0xe90] sm:$0xff]
    %v2083 = vld [vmem:[#allocation4 + $0xe98] sm:$0xff]
    %v2084 = vld [vmem:[#allocation4 + $0xea0] sm:$0xff]
    %v2085 = vld [vmem:[#allocation4 + $0xea8] sm:$0xff]
    %v2086 = vld [vmem:[#allocation4 + $0xeb0] sm:$0xff]
    %v2087 = vld [vmem:[#allocation4 + $0xeb8] sm:$0xff]
    %v2088 = vld [vmem:[#allocation4 + $0xec0] sm:$0xff]
    %v2089 = vld [vmem:[#allocation4 + $0xec8] sm:$0xff]
    %v2090 = vld [vmem:[#allocation4 + $0xed0] sm:$0xff]
    %v2091 = vld [vmem:[#allocation4 + $0xed8] sm:$0xff]
    %v2092 = vld [vmem:[#allocation4 + $0xee0] sm:$0xff]
    %v2093 = vld [vmem:[#allocation4 + $0xee8] sm:$0xff]
    %v2094 = vld [vmem:[#allocation4 + $0xef0] sm:$0xff]
    %v2095 = vld [vmem:[#allocation4 + $0xef8] sm:$0xff]
    %v2096 = vld [vmem:[#allocation4 + $0xf00] sm:$0xff]
    %v2097 = vld [vmem:[#allocation4 + $0xf08] sm:$0xff]
    %v2098 = vld [vmem:[#allocation4 + $0xf10] sm:$0xff]
    %v2099 = vld [vmem:[#allocation4 + $0xf18] sm:$0xff]
    %v2100 = vld [vmem:[#allocation4 + $0xf20] sm:$0xff]
    %v2101 = vld [vmem:[#allocation4 + $0xf28] sm:$0xff]
    %v2102 = vld [vmem:[#allocation4 + $0xf30] sm:$0xff]
    %v2103 = vld [vmem:[#allocation4 + $0xf38] sm:$0xff]
    %v2104 = vld [vmem:[#allocation4 + $0xf40] sm:$0xff]
    %v2105 = vld [vmem:[#allocation4 + $0xf48] sm:$0xff]
    %v2106 = vld [vmem:[#allocation4 + $0xf50] sm:$0xff]
    %v2107 = vld [vmem:[#allocation4 + $0xf58] sm:$0xff]
    %v2108 = vld [vmem:[#allocation4 + $0xf60] sm:$0xff]
    %v2109 = vld [vmem:[#allocation4 + $0xf68] sm:$0xff]
    %v2110 = vld [vmem:[#allocation4 + $0xf70] sm:$0xff]
    %v2111 = vld [vmem:[#allocation4 + $0xf78] sm:$0xff]
    %v2112 = vld [vmem:[#allocation4 + $0xf80] sm:$0xff]
    %v2113 = vld [vmem:[#allocation4 + $0xf88] sm:$0xff]
    %v2114 = vld [vmem:[#allocation4 + $0xf90] sm:$0xff]
    %v2115 = vld [vmem:[#allocation4 + $0xf98] sm:$0xff]
    %v2116 = vld [vmem:[#allocation4 + $0xfa0] sm:$0xff]
    %v2117 = vld [vmem:[#allocation4 + $0xfa8] sm:$0xff]
    %v2118 = vld [vmem:[#allocation4 + $0xfb0] sm:$0xff]
    %v2119 = vld [vmem:[#allocation4 + $0xfb8] sm:$0xff]
    %v2120 = vld [vmem:[#allocation4 + $0xfc0] sm:$0xff]
    %v2121 = vld [vmem:[#allocation4 + $0xfc8] sm:$0xff]
    %v2122 = vld [vmem:[#allocation4 + $0xfd0] sm:$0xff]
    %v2123 = vld [vmem:[#allocation4 + $0xfd8] sm:$0xff]
    %v2124 = vld [vmem:[#allocation4 + $0xfe0] sm:$0xff]
    %v2125 = vld [vmem:[#allocation4 + $0xfe8] sm:$0xff]
    %v2126 = vld [vmem:[#allocation4 + $0xff0] sm:$0xff]
    %v2127 = vld [vmem:[#allocation4 + $0xff8] sm:$0xff]
    %v2128 = vld [vmem:[#allocation4 + $0x1000] sm:$0xff]
    %v2129 = vld [vmem:[#allocation4 + $0x1008] sm:$0xff]
    %v2130 = vld [vmem:[#allocation4 + $0x1010] sm:$0xff]
    %v2131 = vld [vmem:[#allocation4 + $0x1018] sm:$0xff]
    %v2132 = vld [vmem:[#allocation4 + $0x1020] sm:$0xff]
    %v2133 = vld [vmem:[#allocation4 + $0x1028] sm:$0xff]
    %v2134 = vld [vmem:[#allocation4 + $0x1030] sm:$0xff]
    %v2135 = vld [vmem:[#allocation4 + $0x1038] sm:$0xff]
    %v2136 = vld [vmem:[#allocation4 + $0x1040] sm:$0xff]
    %v2137 = vld [vmem:[#allocation4 + $0x1048] sm:$0xff]
    %v2138 = vld [vmem:[#allocation4 + $0x1050] sm:$0xff]
    %v2139 = vld [vmem:[#allocation4 + $0x1058] sm:$0xff]
    %v2140 = vld [vmem:[#allocation4 + $0x1060] sm:$0xff]
    %v2141 = vld [vmem:[#allocation4 + $0x1068] sm:$0xff]
    %v2142 = vld [vmem:[#allocation4 + $0x1070] sm:$0xff]
    %v2143 = vld [vmem:[#allocation4 + $0x1078] sm:$0xff]
    %v2144 = vld [vmem:[#allocation4 + $0x1080] sm:$0xff]
    %v2145 = vld [vmem:[#allocation4 + $0x1088] sm:$0xff]
    %v2146 = vld [vmem:[#allocation4 + $0x1090] sm:$0xff]
    %v2147 = vld [vmem:[#allocation4 + $0x1098] sm:$0xff]
    %v2148 = vld [vmem:[#allocation4 + $0x10a0] sm:$0xff]
    %v2149 = vld [vmem:[#allocation4 + $0x10a8] sm:$0xff]
    %v2150 = vld [vmem:[#allocation4 + $0x10b0] sm:$0xff]
    %v2151 = vld [vmem:[#allocation4 + $0x10b8] sm:$0xff]
    %v2152 = vld [vmem:[#allocation4 + $0x10c0] sm:$0xff]
    %v2153 = vld [vmem:[#allocation4 + $0x10c8] sm:$0xff]
    %v2154 = vld [vmem:[#allocation4 + $0x10d0] sm:$0xff]
    %v2155 = vld [vmem:[#allocation4 + $0x10d8] sm:$0xff]
    %v2156 = vld [vmem:[#allocation4 + $0x10e0] sm:$0xff]
    %v2157 = vld [vmem:[#allocation4 + $0x10e8] sm:$0xff]
    %v2158 = vld [vmem:[#allocation4 + $0x10f0] sm:$0xff]
    %v2159 = vld [vmem:[#allocation4 + $0x10f8] sm:$0xff]
    %v2160 = vld [vmem:[#allocation4 + $0x1100] sm:$0xff]
    %v2161 = vld [vmem:[#allocation4 + $0x1108] sm:$0xff]
    %v2162 = vld [vmem:[#allocation4 + $0x1110] sm:$0xff]
    %v2163 = vld [vmem:[#allocation4 + $0x1118] sm:$0xff]
    %v2164 = vld [vmem:[#allocation4 + $0x1120] sm:$0xff]
    %v2165 = vld [vmem:[#allocation4 + $0x1128] sm:$0xff]
    %v2166 = vld [vmem:[#allocation4 + $0x1130] sm:$0xff]
    %v2167 = vld [vmem:[#allocation4 + $0x1138] sm:$0xff]
    %v2168 = vld [vmem:[#allocation4 + $0x1140] sm:$0xff]
    %v2169 = vld [vmem:[#allocation4 + $0x1148] sm:$0xff]
    %v2170 = vld [vmem:[#allocation4 + $0x1150] sm:$0xff]
    %v2171 = vld [vmem:[#allocation4 + $0x1158] sm:$0xff]
    %v2172 = vld [vmem:[#allocation4 + $0x1160] sm:$0xff]
    %v2173 = vld [vmem:[#allocation4 + $0x1168] sm:$0xff]
    %v2174 = vld [vmem:[#allocation4 + $0x1170] sm:$0xff]
    %v2175 = vld [vmem:[#allocation4 + $0x1178] sm:$0xff]
    %v2176 = vld [vmem:[#allocation4 + $0x1180] sm:$0xff]
    %v2177 = vld [vmem:[#allocation4 + $0x1188] sm:$0xff]
    %v2178 = vld [vmem:[#allocation4 + $0x1190] sm:$0xff]
    %v2179 = vld [vmem:[#allocation4 + $0x1198] sm:$0xff]
    %v2180 = vld [vmem:[#allocation4 + $0x11a0] sm:$0xff]
    %v2181 = vld [vmem:[#allocation4 + $0x11a8] sm:$0xff]
    %v2182 = vld [vmem:[#allocation4 + $0x11b0] sm:$0xff]
    %v2183 = vld [vmem:[#allocation4 + $0x11b8] sm:$0xff]
    %v2184 = vld [vmem:[#allocation4 + $0x11c0] sm:$0xff]
    %v2185 = vld [vmem:[#allocation4 + $0x11c8] sm:$0xff]
    %v2186 = vld [vmem:[#allocation4 + $0x11d0] sm:$0xff]
    %v2187 = vld [vmem:[#allocation4 + $0x11d8] sm:$0xff]
    %v2188 = vld [vmem:[#allocation4 + $0x11e0] sm:$0xff]
    %v2189 = vld [vmem:[#allocation4 + $0x11e8] sm:$0xff]
    %v2190 = vld [vmem:[#allocation4 + $0x11f0] sm:$0xff]
    %v2191 = vld [vmem:[#allocation4 + $0x11f8] sm:$0xff]
    %v2192 = vld [vmem:[#allocation4 + $0x1200] sm:$0xff]
    %v2193 = vld [vmem:[#allocation4 + $0x1208] sm:$0xff]
    %v2194 = vld [vmem:[#allocation4 + $0x1210] sm:$0xff]
    %v2195 = vld [vmem:[#allocation4 + $0x1218] sm:$0xff]
    %v2196 = vld [vmem:[#allocation4 + $0x1220] sm:$0xff]
    %v2197 = vld [vmem:[#allocation4 + $0x1228] sm:$0xff]
    %v2198 = vld [vmem:[#allocation4 + $0x1230] sm:$0xff]
    %v2199 = vld [vmem:[#allocation4 + $0x1238] sm:$0xff]
    %v2200 = vld [vmem:[#allocation4 + $0x1240] sm:$0xff]
    %v2201 = vld [vmem:[#allocation4 + $0x1248] sm:$0xff]
    %v2202 = vld [vmem:[#allocation4 + $0x1250] sm:$0xff]
    %v2203 = vld [vmem:[#allocation4 + $0x1258] sm:$0xff]
    %v2204 = vld [vmem:[#allocation4 + $0x1260] sm:$0xff]
    %v2205 = vld [vmem:[#allocation4 + $0x1268] sm:$0xff]
    %v2206 = vld [vmem:[#allocation4 + $0x1270] sm:$0xff]
    %v2207 = vld [vmem:[#allocation4 + $0x1278] sm:$0xff]
    %v2208 = vld [vmem:[#allocation4 + $0x1280] sm:$0xff]
    %v2209 = vld [vmem:[#allocation4 + $0x1288] sm:$0xff]
    %v2210 = vld [vmem:[#allocation4 + $0x1290] sm:$0xff]
    %v2211 = vld [vmem:[#allocation4 + $0x1298] sm:$0xff]
    %v2212 = vld [vmem:[#allocation4 + $0x12a0] sm:$0xff]
    %v2213 = vld [vmem:[#allocation4 + $0x12a8] sm:$0xff]
    %v2214 = vld [vmem:[#allocation4 + $0x12b0] sm:$0xff]
    %v2215 = vld [vmem:[#allocation4 + $0x12b8] sm:$0xff]
    %v2216 = vld [vmem:[#allocation4 + $0x12c0] sm:$0xff]
    %v2217 = vld [vmem:[#allocation4 + $0x12c8] sm:$0xff]
    %v2218 = vld [vmem:[#allocation4 + $0x12d0] sm:$0xff]
    %v2219 = vld [vmem:[#allocation4 + $0x12d8] sm:$0xff]
    %v2220 = vld [vmem:[#allocation4 + $0x12e0] sm:$0xff]
    %v2221 = vld [vmem:[#allocation4 + $0x12e8] sm:$0xff]
    %v2222 = vld [vmem:[#allocation4 + $0x12f0] sm:$0xff]
    %v2223 = vld [vmem:[#allocation4 + $0x12f8] sm:$0xff]
    %v2224 = vld [vmem:[#allocation4 + $0x1300] sm:$0xff]
    %v2225 = vld [vmem:[#allocation4 + $0x1308] sm:$0xff]
    %v2226 = vld [vmem:[#allocation4 + $0x1310] sm:$0xff]
    %v2227 = vld [vmem:[#allocation4 + $0x1318] sm:$0xff]
    %v2228 = vld [vmem:[#allocation4 + $0x1320] sm:$0xff]
    %v2229 = vld [vmem:[#allocation4 + $0x1328] sm:$0xff]
    %v2230 = vld [vmem:[#allocation4 + $0x1330] sm:$0xff]
    %v2231 = vld [vmem:[#allocation4 + $0x1338] sm:$0xff]
    %v2232 = vld [vmem:[#allocation4 + $0x1340] sm:$0xff]
    %v2233 = vld [vmem:[#allocation4 + $0x1348] sm:$0xff]
    %v2234 = vld [vmem:[#allocation4 + $0x1350] sm:$0xff]
    %v2235 = vld [vmem:[#allocation4 + $0x1358] sm:$0xff]
    %v2236 = vld [vmem:[#allocation4 + $0x1360] sm:$0xff]
    %v2237 = vld [vmem:[#allocation4 + $0x1368] sm:$0xff]
    %v2238 = vld [vmem:[#allocation4 + $0x1370] sm:$0xff]
    %v2239 = vld [vmem:[#allocation4 + $0x1378] sm:$0xff]
    %v2240 = vld [vmem:[#allocation4 + $0x1380] sm:$0xff]
    %v2241 = vld [vmem:[#allocation4 + $0x1388] sm:$0xff]
    %v2242 = vld [vmem:[#allocation4 + $0x1390] sm:$0xff]
    %v2243 = vld [vmem:[#allocation4 + $0x1398] sm:$0xff]
    %v2244 = vld [vmem:[#allocation4 + $0x13a0] sm:$0xff]
    %v2245 = vld [vmem:[#allocation4 + $0x13a8] sm:$0xff]
    %v2246 = vld [vmem:[#allocation4 + $0x13b0] sm:$0xff]
    %v2247 = vld [vmem:[#allocation4 + $0x13b8] sm:$0xff]
    %v2248 = vld [vmem:[#allocation4 + $0x13c0] sm:$0xff]
    %v2249 = vld [vmem:[#allocation4 + $0x13c8] sm:$0xff]
    %v2250 = vld [vmem:[#allocation4 + $0x13d0] sm:$0xff]
    %v2251 = vld [vmem:[#allocation4 + $0x13d8] sm:$0xff]
    %v2252 = vld [vmem:[#allocation4 + $0x13e0] sm:$0xff]
    %v2253 = vld [vmem:[#allocation4 + $0x13e8] sm:$0xff]
    %v2254 = vld [vmem:[#allocation4 + $0x13f0] sm:$0xff]
    %v2255 = vld [vmem:[#allocation4 + $0x13f8] sm:$0xff]
    %2256 = vmatprep.subr.mxu0 %v1737
    %2257 = vmatpush1.msra.mxu0 %v1736
    %2258 = vmatprep.subr.mxu0 %v1729
    %2259 = vmatpush1.msra.mxu0 %v1728
    %2260 = vmatprep.subr.mxu0 %v1721
    %2261 = vmatpush1.msra.mxu0 %v1720
    %2262 = vmatprep.subr.mxu0 %v1713
    %2263 = vmatpush1.msra.mxu0 %v1712
    %2264 = vmatprep.subr.mxu0 %v1705
    %2265 = vmatpush1.msra.mxu0 %v1704
    %2266 = vmatprep.subr.mxu0 %v1697
    %2267 = vmatpush1.msra.mxu0 %v1696
    %2268 = vmatprep.subr.mxu0 %v1689
    %2269 = vmatpush1.msra.mxu0 %v1688
    %2270 = vmatprep.subr.mxu0 %v1681
    %2271 = vmatpush1.msra.mxu0 %v1680
    %2272 = vmatprep.subr.mxu0 %v1673
    %2273 = vmatpush1.msra.mxu0 %v1672
    %2274 = vmatprep.subr.mxu0 %v1665
    %2275 = vmatpush1.msra.mxu0 %v1664
    %2276 = vmatprep.subr.mxu0 %v1657
    %2277 = vmatpush1.msra.mxu0 %v1656
    %2278 = vmatprep.subr.mxu0 %v1649
    %2279 = vmatpush1.msra.mxu0 %v1648
    %2280 = vmatprep.subr.mxu0 %v1641
    %2281 = vmatpush1.msra.mxu0 %v1640
    %2282 = vmatprep.subr.mxu0 %v1633
    %2283 = vmatpush1.msra.mxu0 %v1632
    %2284 = vmatprep.subr.mxu0 %v1625
    %2285 = vmatpush1.msra.mxu0 %v1624
    %2286 = vmatprep.subr.mxu0 %v1617
    %2287 = vmatpush1.msra.mxu0 %v1616
    %2288 = vmatprep.subr.mxu0 %v1865
    %2289 = vmatpush2.msra.mxu0 %v1864
    %2290 = vmatprep.subr.mxu0 %v1857
    %2291 = vmatpush2.msra.mxu0 %v1856
    %2292 = vmatprep.subr.mxu0 %v1849
    %2293 = vmatpush2.msra.mxu0 %v1848
    %2294 = vmatprep.subr.mxu0 %v1841
    %2295 = vmatpush2.msra.mxu0 %v1840
    %2296 = vmatprep.subr.mxu0 %v1833
    %2297 = vmatpush2.msra.mxu0 %v1832
    %2298 = vmatprep.subr.mxu0 %v1825
    %2299 = vmatpush2.msra.mxu0 %v1824
    %2300 = vmatprep.subr.mxu0 %v1817
    %2301 = vmatpush2.msra.mxu0 %v1816
    %2302 = vmatprep.subr.mxu0 %v1809
    %2303 = vmatpush2.msra.mxu0 %v1808
    %2304 = vmatprep.subr.mxu0 %v1801
    %2305 = vmatpush2.msra.mxu0 %v1800
    %2306 = vmatprep.subr.mxu0 %v1793
    %2307 = vmatpush2.msra.mxu0 %v1792
    %2308 = vmatprep.subr.mxu0 %v1785
    %2309 = vmatpush2.msra.mxu0 %v1784
    %2310 = vmatprep.subr.mxu0 %v1777
    %2311 = vmatpush2.msra.mxu0 %v1776
    %2312 = vmatprep.subr.mxu0 %v1769
    %2313 = vmatpush2.msra.mxu0 %v1768
    %2314 = vmatprep.subr.mxu0 %v1761
    %2315 = vmatpush2.msra.mxu0 %v1760
    %2316 = vmatprep.subr.mxu0 %v1753
    %2317 = vmatpush2.msra.mxu0 %v1752
    %2318 = vmatprep.subr.mxu0 %v1745
    %2319 = vmatpush2.msra.mxu0 %v1744
    %2320 = vmatprep.mubr.f32.mxu0 %v1612
    %2321 = vmatmul.mubr.f32.gmra.mxu0 %v1611
    %v2322 = vpop.f32.mrf.mxu0
    %v2323 = vadd.f32 0.0, %v2322
    %v2324 = vpop.f32.mrf.mxu0
    %v2325 = vadd.f32 0.0, %v2324
    %2326 = vdwg.mxu0
    %2327 = vmatprep.subr.mxu0 %v1993
    %2328 = vmatpush1.msra.mxu0 %v1992
    %2329 = vmatprep.subr.mxu0 %v1985
    %2330 = vmatpush1.msra.mxu0 %v1984
    %2331 = vmatprep.subr.mxu0 %v1977
    %2332 = vmatpush1.msra.mxu0 %v1976
    %2333 = vmatprep.subr.mxu0 %v1969
    %2334 = vmatpush1.msra.mxu0 %v1968
    %2335 = vmatprep.subr.mxu0 %v1961
    %2336 = vmatpush1.msra.mxu0 %v1960
    %2337 = vmatprep.subr.mxu0 %v1953
    %2338 = vmatpush1.msra.mxu0 %v1952
    %2339 = vmatprep.subr.mxu0 %v1945
    %2340 = vmatpush1.msra.mxu0 %v1944
    %2341 = vmatprep.subr.mxu0 %v1937
    %2342 = vmatpush1.msra.mxu0 %v1936
    %2343 = vmatprep.subr.mxu0 %v1929
    %2344 = vmatpush1.msra.mxu0 %v1928
    %2345 = vmatprep.subr.mxu0 %v1921
    %2346 = vmatpush1.msra.mxu0 %v1920
    %2347 = vmatprep.subr.mxu0 %v1913
    %2348 = vmatpush1.msra.mxu0 %v1912
    %2349 = vmatprep.subr.mxu0 %v1905
    %2350 = vmatpush1.msra.mxu0 %v1904
    %2351 = vmatprep.subr.mxu0 %v1897
    %2352 = vmatpush1.msra.mxu0 %v1896
    %2353 = vmatprep.subr.mxu0 %v1889
    %2354 = vmatpush1.msra.mxu0 %v1888
    %2355 = vmatprep.subr.mxu0 %v1881
    %2356 = vmatpush1.msra.mxu0 %v1880
    %2357 = vmatprep.subr.mxu0 %v1873
    %2358 = vmatpush1.msra.mxu0 %v1872
    %2359 = vmatprep.subr.mxu0 %v2121
    %2360 = vmatpush2.msra.mxu0 %v2120
    %2361 = vmatprep.subr.mxu0 %v2113
    %2362 = vmatpush2.msra.mxu0 %v2112
    %2363 = vmatprep.subr.mxu0 %v2105
    %2364 = vmatpush2.msra.mxu0 %v2104
    %2365 = vmatprep.subr.mxu0 %v2097
    %2366 = vmatpush2.msra.mxu0 %v2096
    %2367 = vmatprep.subr.mxu0 %v2089
    %2368 = vmatpush2.msra.mxu0 %v2088
    %2369 = vmatprep.subr.mxu0 %v2081
    %2370 = vmatpush2.msra.mxu0 %v2080
    %2371 = vmatprep.subr.mxu0 %v2073
    %2372 = vmatpush2.msra.mxu0 %v2072
    %2373 = vmatprep.subr.mxu0 %v2065
    %2374 = vmatpush2.msra.mxu0 %v2064
    %2375 = vmatprep.subr.mxu0 %v2057
    %2376 = vmatpush2.msra.mxu0 %v2056
    %2377 = vmatprep.subr.mxu0 %v2049
    %2378 = vmatpush2.msra.mxu0 %v2048
    %2379 = vmatprep.subr.mxu0 %v2041
    %2380 = vmatpush2.msra.mxu0 %v2040
    %2381 = vmatprep.subr.mxu0 %v2033
    %2382 = vmatpush2.msra.mxu0 %v2032
    %2383 = vmatprep.subr.mxu0 %v2025
    %2384 = vmatpush2.msra.mxu0 %v2024
    %2385 = vmatprep.subr.mxu0 %v2017
    %2386 = vmatpush2.msra.mxu0 %v2016
    %2387 = vmatprep.subr.mxu0 %v2009
    %2388 = vmatpush2.msra.mxu0 %v2008
    %2389 = vmatprep.subr.mxu0 %v2001
    %2390 = vmatpush2.msra.mxu0 %v2000
    %2391 = vmatprep.mubr.f32.mxu0 %v1614
    %2392 = vmatmul.mubr.f32.gmra.mxu0 %v1613
    %v2393 = vpop.f32.mrf.mxu0
    %v2394 = vadd.f32 %v2323, %v2393
    %v2395 = vpop.f32.mrf.mxu0
    %v2396 = vadd.f32 %v2325, %v2395
    %2397 = vdwg.mxu0
    %2398 = vmatprep.subr.mxu0 %v2249
    %2399 = vmatpush1.msra.mxu0 %v2248
    %2400 = vmatprep.subr.mxu0 %v2241
    %2401 = vmatpush1.msra.mxu0 %v2240
    %2402 = vmatprep.subr.mxu0 %v2233
    %2403 = vmatpush1.msra.mxu0 %v2232
    %2404 = vmatprep.subr.mxu0 %v2225
    %2405 = vmatpush1.msra.mxu0 %v2224
    %2406 = vmatprep.subr.mxu0 %v2217
    %2407 = vmatpush1.msra.mxu0 %v2216
    %2408 = vmatprep.subr.mxu0 %v2209
    %2409 = vmatpush1.msra.mxu0 %v2208
    %2410 = vmatprep.subr.mxu0 %v2201
    %2411 = vmatpush1.msra.mxu0 %v2200
    %2412 = vmatprep.subr.mxu0 %v2193
    %2413 = vmatpush1.msra.mxu0 %v2192
    %2414 = vmatprep.subr.mxu0 %v2185
    %2415 = vmatpush1.msra.mxu0 %v2184
    %2416 = vmatprep.subr.mxu0 %v2177
    %2417 = vmatpush1.msra.mxu0 %v2176
    %2418 = vmatprep.subr.mxu0 %v2169
    %2419 = vmatpush1.msra.mxu0 %v2168
    %2420 = vmatprep.subr.mxu0 %v2161
    %2421 = vmatpush1.msra.mxu0 %v2160
    %2422 = vmatprep.subr.mxu0 %v2153
    %2423 = vmatpush1.msra.mxu0 %v2152
    %2424 = vmatprep.subr.mxu0 %v2145
    %2425 = vmatpush1.msra.mxu0 %v2144
    %2426 = vmatprep.subr.mxu0 %v2137
    %2427 = vmatpush1.msra.mxu0 %v2136
    %2428 = vmatprep.subr.mxu0 %v2129
    %2429 = vmatpush1.msra.mxu0 %v2128
    %2430 = vmatprep.subr.mxu0 0.0
    %2431 = vmatpush2.msra.mxu0 0.0
    %2432 = vmatprep.subr.mxu0 0.0
    %2433 = vmatpush2.msra.mxu0 0.0
    %2434 = vmatprep.subr.mxu0 0.0
    %2435 = vmatpush2.msra.mxu0 0.0
    %2436 = vmatprep.subr.mxu0 0.0
    %2437 = vmatpush2.msra.mxu0 0.0
    %2438 = vmatprep.subr.mxu0 0.0
    %2439 = vmatpush2.msra.mxu0 0.0
    %2440 = vmatprep.subr.mxu0 0.0
    %2441 = vmatpush2.msra.mxu0 0.0
    %2442 = vmatprep.subr.mxu0 0.0
    %2443 = vmatpush2.msra.mxu0 0.0
    %2444 = vmatprep.subr.mxu0 0.0
    %2445 = vmatpush2.msra.mxu0 0.0
    %2446 = vmatprep.subr.mxu0 0.0
    %2447 = vmatpush2.msra.mxu0 0.0
    %2448 = vmatprep.subr.mxu0 0.0
    %2449 = vmatpush2.msra.mxu0 0.0
    %2450 = vmatprep.subr.mxu0 0.0
    %2451 = vmatpush2.msra.mxu0 0.0
    %2452 = vmatprep.subr.mxu0 0.0
    %2453 = vmatpush2.msra.mxu0 0.0
    %2454 = vmatprep.subr.mxu0 0.0
    %2455 = vmatpush2.msra.mxu0 0.0
    %2456 = vmatprep.subr.mxu0 0.0
    %2457 = vmatpush2.msra.mxu0 0.0
    %2458 = vmatprep.subr.mxu0 0.0
    %2459 = vmatpush2.msra.mxu0 0.0
    %2460 = vmatprep.subr.mxu0 0.0
    %2461 = vmatpush2.msra.mxu0 0.0
    %2462 = vmatprep.mubr.f32.mxu0 0.0
    %2463 = vmatmul.mubr.f32.gmra.mxu0 %v1615
    %v2464 = vpop.f32.mrf.mxu0
    %v2465 = vadd.f32 %v2394, %v2464
    %v2466 = vpop.f32.mrf.mxu0
    %v2467 = vadd.f32 %v2396, %v2466
    %2468 = vdwg.mxu0
    %2469 = vmatprep.subr.mxu0 %v1739
    %2470 = vmatpush1.msra.mxu0 %v1738
    %2471 = vmatprep.subr.mxu0 %v1731
    %2472 = vmatpush1.msra.mxu0 %v1730
    %2473 = vmatprep.subr.mxu0 %v1723
    %2474 = vmatpush1.msra.mxu0 %v1722
    %2475 = vmatprep.subr.mxu0 %v1715
    %2476 = vmatpush1.msra.mxu0 %v1714
    %2477 = vmatprep.subr.mxu0 %v1707
    %2478 = vmatpush1.msra.mxu0 %v1706
    %2479 = vmatprep.subr.mxu0 %v1699
    %2480 = vmatpush1.msra.mxu0 %v1698
    %2481 = vmatprep.subr.mxu0 %v1691
    %2482 = vmatpush1.msra.mxu0 %v1690
    %2483 = vmatprep.subr.mxu0 %v1683
    %2484 = vmatpush1.msra.mxu0 %v1682
    %2485 = vmatprep.subr.mxu0 %v1675
    %2486 = vmatpush1.msra.mxu0 %v1674
    %2487 = vmatprep.subr.mxu0 %v1667
    %2488 = vmatpush1.msra.mxu0 %v1666
    %2489 = vmatprep.subr.mxu0 %v1659
    %2490 = vmatpush1.msra.mxu0 %v1658
    %2491 = vmatprep.subr.mxu0 %v1651
    %2492 = vmatpush1.msra.mxu0 %v1650
    %2493 = vmatprep.subr.mxu0 %v1643
    %2494 = vmatpush1.msra.mxu0 %v1642
    %2495 = vmatprep.subr.mxu0 %v1635
    %2496 = vmatpush1.msra.mxu0 %v1634
    %2497 = vmatprep.subr.mxu0 %v1627
    %2498 = vmatpush1.msra.mxu0 %v1626
    %2499 = vmatprep.subr.mxu0 %v1619
    %2500 = vmatpush1.msra.mxu0 %v1618
    %2501 = vmatprep.subr.mxu0 %v1867
    %2502 = vmatpush2.msra.mxu0 %v1866
    %2503 = vmatprep.subr.mxu0 %v1859
    %2504 = vmatpush2.msra.mxu0 %v1858
    %2505 = vmatprep.subr.mxu0 %v1851
    %2506 = vmatpush2.msra.mxu0 %v1850
    %2507 = vmatprep.subr.mxu0 %v1843
    %2508 = vmatpush2.msra.mxu0 %v1842
    %2509 = vmatprep.subr.mxu0 %v1835
    %2510 = vmatpush2.msra.mxu0 %v1834
    %2511 = vmatprep.subr.mxu0 %v1827
    %2512 = vmatpush2.msra.mxu0 %v1826
    %2513 = vmatprep.subr.mxu0 %v1819
    %2514 = vmatpush2.msra.mxu0 %v1818
    %2515 = vmatprep.subr.mxu0 %v1811
    %2516 = vmatpush2.msra.mxu0 %v1810
    %2517 = vmatprep.subr.mxu0 %v1803
    %2518 = vmatpush2.msra.mxu0 %v1802
    %2519 = vmatprep.subr.mxu0 %v1795
    %2520 = vmatpush2.msra.mxu0 %v1794
    %2521 = vmatprep.subr.mxu0 %v1787
    %2522 = vmatpush2.msra.mxu0 %v1786
    %2523 = vmatprep.subr.mxu0 %v1779
    %2524 = vmatpush2.msra.mxu0 %v1778
    %2525 = vmatprep.subr.mxu0 %v1771
    %2526 = vmatpush2.msra.mxu0 %v1770
    %2527 = vmatprep.subr.mxu0 %v1763
    %2528 = vmatpush2.msra.mxu0 %v1762
    %2529 = vmatprep.subr.mxu0 %v1755
    %2530 = vmatpush2.msra.mxu0 %v1754
    %2531 = vmatprep.subr.mxu0 %v1747
    %2532 = vmatpush2.msra.mxu0 %v1746
    %2533 = vmatprep.mubr.f32.mxu0 %v1612
    %2534 = vmatmul.mubr.f32.gmra.mxu0 %v1611
    %v2535 = vpop.f32.mrf.mxu0
    %v2536 = vadd.f32 0.0, %v2535
    %v2537 = vpop.f32.mrf.mxu0
    %v2538 = vadd.f32 0.0, %v2537
    %2539 = vdwg.mxu0
    %2540 = vmatprep.subr.mxu0 %v1995
    %2541 = vmatpush1.msra.mxu0 %v1994
    %2542 = vmatprep.subr.mxu0 %v1987
    %2543 = vmatpush1.msra.mxu0 %v1986
    %2544 = vmatprep.subr.mxu0 %v1979
    %2545 = vmatpush1.msra.mxu0 %v1978
    %2546 = vmatprep.subr.mxu0 %v1971
    %2547 = vmatpush1.msra.mxu0 %v1970
    %2548 = vmatprep.subr.mxu0 %v1963
    %2549 = vmatpush1.msra.mxu0 %v1962
    %2550 = vmatprep.subr.mxu0 %v1955
    %2551 = vmatpush1.msra.mxu0 %v1954
    %2552 = vmatprep.subr.mxu0 %v1947
    %2553 = vmatpush1.msra.mxu0 %v1946
    %2554 = vmatprep.subr.mxu0 %v1939
    %2555 = vmatpush1.msra.mxu0 %v1938
    %2556 = vmatprep.subr.mxu0 %v1931
    %2557 = vmatpush1.msra.mxu0 %v1930
    %2558 = vmatprep.subr.mxu0 %v1923
    %2559 = vmatpush1.msra.mxu0 %v1922
    %2560 = vmatprep.subr.mxu0 %v1915
    %2561 = vmatpush1.msra.mxu0 %v1914
    %2562 = vmatprep.subr.mxu0 %v1907
    %2563 = vmatpush1.msra.mxu0 %v1906
    %2564 = vmatprep.subr.mxu0 %v1899
    %2565 = vmatpush1.msra.mxu0 %v1898
    %2566 = vmatprep.subr.mxu0 %v1891
    %2567 = vmatpush1.msra.mxu0 %v1890
    %2568 = vmatprep.subr.mxu0 %v1883
    %2569 = vmatpush1.msra.mxu0 %v1882
    %2570 = vmatprep.subr.mxu0 %v1875
    %2571 = vmatpush1.msra.mxu0 %v1874
    %2572 = vmatprep.subr.mxu0 %v2123
    %2573 = vmatpush2.msra.mxu0 %v2122
    %2574 = vmatprep.subr.mxu0 %v2115
    %2575 = vmatpush2.msra.mxu0 %v2114
    %2576 = vmatprep.subr.mxu0 %v2107
    %2577 = vmatpush2.msra.mxu0 %v2106
    %2578 = vmatprep.subr.mxu0 %v2099
    %2579 = vmatpush2.msra.mxu0 %v2098
    %2580 = vmatprep.subr.mxu0 %v2091
    %2581 = vmatpush2.msra.mxu0 %v2090
    %2582 = vmatprep.subr.mxu0 %v2083
    %2583 = vmatpush2.msra.mxu0 %v2082
    %2584 = vmatprep.subr.mxu0 %v2075
    %2585 = vmatpush2.msra.mxu0 %v2074
    %2586 = vmatprep.subr.mxu0 %v2067
    %2587 = vmatpush2.msra.mxu0 %v2066
    %2588 = vmatprep.subr.mxu0 %v2059
    %2589 = vmatpush2.msra.mxu0 %v2058
    %2590 = vmatprep.subr.mxu0 %v2051
    %2591 = vmatpush2.msra.mxu0 %v2050
    %2592 = vmatprep.subr.mxu0 %v2043
    %2593 = vmatpush2.msra.mxu0 %v2042
    %2594 = vmatprep.subr.mxu0 %v2035
    %2595 = vmatpush2.msra.mxu0 %v2034
    %2596 = vmatprep.subr.mxu0 %v2027
    %2597 = vmatpush2.msra.mxu0 %v2026
    %2598 = vmatprep.subr.mxu0 %v2019
    %2599 = vmatpush2.msra.mxu0 %v2018
    %2600 = vmatprep.subr.mxu0 %v2011
    %2601 = vmatpush2.msra.mxu0 %v2010
    %2602 = vmatprep.subr.mxu0 %v2003
    %2603 = vmatpush2.msra.mxu0 %v2002
    %2604 = vmatprep.mubr.f32.mxu0 %v1614
    %2605 = vmatmul.mubr.f32.gmra.mxu0 %v1613
    %v2606 = vpop.f32.mrf.mxu0
    %v2607 = vadd.f32 %v2536, %v2606
    %v2608 = vpop.f32.mrf.mxu0
    %v2609 = vadd.f32 %v2538, %v2608
    %2610 = vdwg.mxu0
    %2611 = vmatprep.subr.mxu0 %v2251
    %2612 = vmatpush1.msra.mxu0 %v2250
    %2613 = vmatprep.subr.mxu0 %v2243
    %2614 = vmatpush1.msra.mxu0 %v2242
    %2615 = vmatprep.subr.mxu0 %v2235
    %2616 = vmatpush1.msra.mxu0 %v2234
    %2617 = vmatprep.subr.mxu0 %v2227
    %2618 = vmatpush1.msra.mxu0 %v2226
    %2619 = vmatprep.subr.mxu0 %v2219
    %2620 = vmatpush1.msra.mxu0 %v2218
    %2621 = vmatprep.subr.mxu0 %v2211
    %2622 = vmatpush1.msra.mxu0 %v2210
    %2623 = vmatprep.subr.mxu0 %v2203
    %2624 = vmatpush1.msra.mxu0 %v2202
    %2625 = vmatprep.subr.mxu0 %v2195
    %2626 = vmatpush1.msra.mxu0 %v2194
    %2627 = vmatprep.subr.mxu0 %v2187
    %2628 = vmatpush1.msra.mxu0 %v2186
    %2629 = vmatprep.subr.mxu0 %v2179
    %2630 = vmatpush1.msra.mxu0 %v2178
    %2631 = vmatprep.subr.mxu0 %v2171
    %2632 = vmatpush1.msra.mxu0 %v2170
    %2633 = vmatprep.subr.mxu0 %v2163
    %2634 = vmatpush1.msra.mxu0 %v2162
    %2635 = vmatprep.subr.mxu0 %v2155
    %2636 = vmatpush1.msra.mxu0 %v2154
    %2637 = vmatprep.subr.mxu0 %v2147
    %2638 = vmatpush1.msra.mxu0 %v2146
    %2639 = vmatprep.subr.mxu0 %v2139
    %2640 = vmatpush1.msra.mxu0 %v2138
    %2641 = vmatprep.subr.mxu0 %v2131
    %2642 = vmatpush1.msra.mxu0 %v2130
    %2643 = vmatprep.subr.mxu0 0.0
    %2644 = vmatpush2.msra.mxu0 0.0
    %2645 = vmatprep.subr.mxu0 0.0
    %2646 = vmatpush2.msra.mxu0 0.0
    %2647 = vmatprep.subr.mxu0 0.0
    %2648 = vmatpush2.msra.mxu0 0.0
    %2649 = vmatprep.subr.mxu0 0.0
    %2650 = vmatpush2.msra.mxu0 0.0
    %2651 = vmatprep.subr.mxu0 0.0
    %2652 = vmatpush2.msra.mxu0 0.0
    %2653 = vmatprep.subr.mxu0 0.0
    %2654 = vmatpush2.msra.mxu0 0.0
    %2655 = vmatprep.subr.mxu0 0.0
    %2656 = vmatpush2.msra.mxu0 0.0
    %2657 = vmatprep.subr.mxu0 0.0
    %2658 = vmatpush2.msra.mxu0 0.0
    %2659 = vmatprep.subr.mxu0 0.0
    %2660 = vmatpush2.msra.mxu0 0.0
    %2661 = vmatprep.subr.mxu0 0.0
    %2662 = vmatpush2.msra.mxu0 0.0
    %2663 = vmatprep.subr.mxu0 0.0
    %2664 = vmatpush2.msra.mxu0 0.0
    %2665 = vmatprep.subr.mxu0 0.0
    %2666 = vmatpush2.msra.mxu0 0.0
    %2667 = vmatprep.subr.mxu0 0.0
    %2668 = vmatpush2.msra.mxu0 0.0
    %2669 = vmatprep.subr.mxu0 0.0
    %2670 = vmatpush2.msra.mxu0 0.0
    %2671 = vmatprep.subr.mxu0 0.0
    %2672 = vmatpush2.msra.mxu0 0.0
    %2673 = vmatprep.subr.mxu0 0.0
    %2674 = vmatpush2.msra.mxu0 0.0
    %2675 = vmatprep.mubr.f32.mxu0 0.0
    %2676 = vmatmul.mubr.f32.gmra.mxu0 %v1615
    %v2677 = vpop.f32.mrf.mxu0
    %v2678 = vadd.f32 %v2607, %v2677
    %v2679 = vpop.f32.mrf.mxu0
    %v2680 = vadd.f32 %v2609, %v2679
    %2681 = vdwg.mxu0
    %2682 = vmatprep.subr.mxu0 %v1741
    %2683 = vmatpush1.msra.mxu0 %v1740
    %2684 = vmatprep.subr.mxu0 %v1733
    %2685 = vmatpush1.msra.mxu0 %v1732
    %2686 = vmatprep.subr.mxu0 %v1725
    %2687 = vmatpush1.msra.mxu0 %v1724
    %2688 = vmatprep.subr.mxu0 %v1717
    %2689 = vmatpush1.msra.mxu0 %v1716
    %2690 = vmatprep.subr.mxu0 %v1709
    %2691 = vmatpush1.msra.mxu0 %v1708
    %2692 = vmatprep.subr.mxu0 %v1701
    %2693 = vmatpush1.msra.mxu0 %v1700
    %2694 = vmatprep.subr.mxu0 %v1693
    %2695 = vmatpush1.msra.mxu0 %v1692
    %2696 = vmatprep.subr.mxu0 %v1685
    %2697 = vmatpush1.msra.mxu0 %v1684
    %2698 = vmatprep.subr.mxu0 %v1677
    %2699 = vmatpush1.msra.mxu0 %v1676
    %2700 = vmatprep.subr.mxu0 %v1669
    %2701 = vmatpush1.msra.mxu0 %v1668
    %2702 = vmatprep.subr.mxu0 %v1661
    %2703 = vmatpush1.msra.mxu0 %v1660
    %2704 = vmatprep.subr.mxu0 %v1653
    %2705 = vmatpush1.msra.mxu0 %v1652
    %2706 = vmatprep.subr.mxu0 %v1645
    %2707 = vmatpush1.msra.mxu0 %v1644
    %2708 = vmatprep.subr.mxu0 %v1637
    %2709 = vmatpush1.msra.mxu0 %v1636
    %2710 = vmatprep.subr.mxu0 %v1629
    %2711 = vmatpush1.msra.mxu0 %v1628
    %2712 = vmatprep.subr.mxu0 %v1621
    %2713 = vmatpush1.msra.mxu0 %v1620
    %2714 = vmatprep.subr.mxu0 %v1869
    %2715 = vmatpush2.msra.mxu0 %v1868
    %2716 = vmatprep.subr.mxu0 %v1861
    %2717 = vmatpush2.msra.mxu0 %v1860
    %2718 = vmatprep.subr.mxu0 %v1853
    %2719 = vmatpush2.msra.mxu0 %v1852
    %2720 = vmatprep.subr.mxu0 %v1845
    %2721 = vmatpush2.msra.mxu0 %v1844
    %2722 = vmatprep.subr.mxu0 %v1837
    %2723 = vmatpush2.msra.mxu0 %v1836
    %2724 = vmatprep.subr.mxu0 %v1829
    %2725 = vmatpush2.msra.mxu0 %v1828
    %2726 = vmatprep.subr.mxu0 %v1821
    %2727 = vmatpush2.msra.mxu0 %v1820
    %2728 = vmatprep.subr.mxu0 %v1813
    %2729 = vmatpush2.msra.mxu0 %v1812
    %2730 = vmatprep.subr.mxu0 %v1805
    %2731 = vmatpush2.msra.mxu0 %v1804
    %2732 = vmatprep.subr.mxu0 %v1797
    %2733 = vmatpush2.msra.mxu0 %v1796
    %2734 = vmatprep.subr.mxu0 %v1789
    %2735 = vmatpush2.msra.mxu0 %v1788
    %2736 = vmatprep.subr.mxu0 %v1781
    %2737 = vmatpush2.msra.mxu0 %v1780
    %2738 = vmatprep.subr.mxu0 %v1773
    %2739 = vmatpush2.msra.mxu0 %v1772
    %2740 = vmatprep.subr.mxu0 %v1765
    %2741 = vmatpush2.msra.mxu0 %v1764
    %2742 = vmatprep.subr.mxu0 %v1757
    %2743 = vmatpush2.msra.mxu0 %v1756
    %2744 = vmatprep.subr.mxu0 %v1749
    %2745 = vmatpush2.msra.mxu0 %v1748
    %2746 = vmatprep.mubr.f32.mxu0 %v1612
    %2747 = vmatmul.mubr.f32.gmra.mxu0 %v1611
    %v2748 = vpop.f32.mrf.mxu0
    %v2749 = vadd.f32 0.0, %v2748
    %v2750 = vpop.f32.mrf.mxu0
    %v2751 = vadd.f32 0.0, %v2750
    %2752 = vdwg.mxu0
    %2753 = vmatprep.subr.mxu0 %v1997
    %2754 = vmatpush1.msra.mxu0 %v1996
    %2755 = vmatprep.subr.mxu0 %v1989
    %2756 = vmatpush1.msra.mxu0 %v1988
    %2757 = vmatprep.subr.mxu0 %v1981
    %2758 = vmatpush1.msra.mxu0 %v1980
    %2759 = vmatprep.subr.mxu0 %v1973
    %2760 = vmatpush1.msra.mxu0 %v1972
    %2761 = vmatprep.subr.mxu0 %v1965
    %2762 = vmatpush1.msra.mxu0 %v1964
    %2763 = vmatprep.subr.mxu0 %v1957
    %2764 = vmatpush1.msra.mxu0 %v1956
    %2765 = vmatprep.subr.mxu0 %v1949
    %2766 = vmatpush1.msra.mxu0 %v1948
    %2767 = vmatprep.subr.mxu0 %v1941
    %2768 = vmatpush1.msra.mxu0 %v1940
    %2769 = vmatprep.subr.mxu0 %v1933
    %2770 = vmatpush1.msra.mxu0 %v1932
    %2771 = vmatprep.subr.mxu0 %v1925
    %2772 = vmatpush1.msra.mxu0 %v1924
    %2773 = vmatprep.subr.mxu0 %v1917
    %2774 = vmatpush1.msra.mxu0 %v1916
    %2775 = vmatprep.subr.mxu0 %v1909
    %2776 = vmatpush1.msra.mxu0 %v1908
    %2777 = vmatprep.subr.mxu0 %v1901
    %2778 = vmatpush1.msra.mxu0 %v1900
    %2779 = vmatprep.subr.mxu0 %v1893
    %2780 = vmatpush1.msra.mxu0 %v1892
    %2781 = vmatprep.subr.mxu0 %v1885
    %2782 = vmatpush1.msra.mxu0 %v1884
    %2783 = vmatprep.subr.mxu0 %v1877
    %2784 = vmatpush1.msra.mxu0 %v1876
    %2785 = vmatprep.subr.mxu0 %v2125
    %2786 = vmatpush2.msra.mxu0 %v2124
    %2787 = vmatprep.subr.mxu0 %v2117
    %2788 = vmatpush2.msra.mxu0 %v2116
    %2789 = vmatprep.subr.mxu0 %v2109
    %2790 = vmatpush2.msra.mxu0 %v2108
    %2791 = vmatprep.subr.mxu0 %v2101
    %2792 = vmatpush2.msra.mxu0 %v2100
    %2793 = vmatprep.subr.mxu0 %v2093
    %2794 = vmatpush2.msra.mxu0 %v2092
    %2795 = vmatprep.subr.mxu0 %v2085
    %2796 = vmatpush2.msra.mxu0 %v2084
    %2797 = vmatprep.subr.mxu0 %v2077
    %2798 = vmatpush2.msra.mxu0 %v2076
    %2799 = vmatprep.subr.mxu0 %v2069
    %2800 = vmatpush2.msra.mxu0 %v2068
    %2801 = vmatprep.subr.mxu0 %v2061
    %2802 = vmatpush2.msra.mxu0 %v2060
    %2803 = vmatprep.subr.mxu0 %v2053
    %2804 = vmatpush2.msra.mxu0 %v2052
    %2805 = vmatprep.subr.mxu0 %v2045
    %2806 = vmatpush2.msra.mxu0 %v2044
    %2807 = vmatprep.subr.mxu0 %v2037
    %2808 = vmatpush2.msra.mxu0 %v2036
    %2809 = vmatprep.subr.mxu0 %v2029
    %2810 = vmatpush2.msra.mxu0 %v2028
    %2811 = vmatprep.subr.mxu0 %v2021
    %2812 = vmatpush2.msra.mxu0 %v2020
    %2813 = vmatprep.subr.mxu0 %v2013
    %2814 = vmatpush2.msra.mxu0 %v2012
    %2815 = vmatprep.subr.mxu0 %v2005
    %2816 = vmatpush2.msra.mxu0 %v2004
    %2817 = vmatprep.mubr.f32.mxu0 %v1614
    %2818 = vmatmul.mubr.f32.gmra.mxu0 %v1613
    %v2819 = vpop.f32.mrf.mxu0
    %v2820 = vadd.f32 %v2749, %v2819
    %v2821 = vpop.f32.mrf.mxu0
    %v2822 = vadd.f32 %v2751, %v2821
    %2823 = vdwg.mxu0
    %2824 = vmatprep.subr.mxu0 %v2253
    %2825 = vmatpush1.msra.mxu0 %v2252
    %2826 = vmatprep.subr.mxu0 %v2245
    %2827 = vmatpush1.msra.mxu0 %v2244
    %2828 = vmatprep.subr.mxu0 %v2237
    %2829 = vmatpush1.msra.mxu0 %v2236
    %2830 = vmatprep.subr.mxu0 %v2229
    %2831 = vmatpush1.msra.mxu0 %v2228
    %2832 = vmatprep.subr.mxu0 %v2221
    %2833 = vmatpush1.msra.mxu0 %v2220
    %2834 = vmatprep.subr.mxu0 %v2213
    %2835 = vmatpush1.msra.mxu0 %v2212
    %2836 = vmatprep.subr.mxu0 %v2205
    %2837 = vmatpush1.msra.mxu0 %v2204
    %2838 = vmatprep.subr.mxu0 %v2197
    %2839 = vmatpush1.msra.mxu0 %v2196
    %2840 = vmatprep.subr.mxu0 %v2189
    %2841 = vmatpush1.msra.mxu0 %v2188
    %2842 = vmatprep.subr.mxu0 %v2181
    %2843 = vmatpush1.msra.mxu0 %v2180
    %2844 = vmatprep.subr.mxu0 %v2173
    %2845 = vmatpush1.msra.mxu0 %v2172
    %2846 = vmatprep.subr.mxu0 %v2165
    %2847 = vmatpush1.msra.mxu0 %v2164
    %2848 = vmatprep.subr.mxu0 %v2157
    %2849 = vmatpush1.msra.mxu0 %v2156
    %2850 = vmatprep.subr.mxu0 %v2149
    %2851 = vmatpush1.msra.mxu0 %v2148
    %2852 = vmatprep.subr.mxu0 %v2141
    %2853 = vmatpush1.msra.mxu0 %v2140
    %2854 = vmatprep.subr.mxu0 %v2133
    %2855 = vmatpush1.msra.mxu0 %v2132
    %2856 = vmatprep.subr.mxu0 0.0
    %2857 = vmatpush2.msra.mxu0 0.0
    %2858 = vmatprep.subr.mxu0 0.0
    %2859 = vmatpush2.msra.mxu0 0.0
    %2860 = vmatprep.subr.mxu0 0.0
    %2861 = vmatpush2.msra.mxu0 0.0
    %2862 = vmatprep.subr.mxu0 0.0
    %2863 = vmatpush2.msra.mxu0 0.0
    %2864 = vmatprep.subr.mxu0 0.0
    %2865 = vmatpush2.msra.mxu0 0.0
    %2866 = vmatprep.subr.mxu0 0.0
    %2867 = vmatpush2.msra.mxu0 0.0
    %2868 = vmatprep.subr.mxu0 0.0
    %2869 = vmatpush2.msra.mxu0 0.0
    %2870 = vmatprep.subr.mxu0 0.0
    %2871 = vmatpush2.msra.mxu0 0.0
    %2872 = vmatprep.subr.mxu0 0.0
    %2873 = vmatpush2.msra.mxu0 0.0
    %2874 = vmatprep.subr.mxu0 0.0
    %2875 = vmatpush2.msra.mxu0 0.0
    %2876 = vmatprep.subr.mxu0 0.0
    %2877 = vmatpush2.msra.mxu0 0.0
    %2878 = vmatprep.subr.mxu0 0.0
    %2879 = vmatpush2.msra.mxu0 0.0
    %2880 = vmatprep.subr.mxu0 0.0
    %2881 = vmatpush2.msra.mxu0 0.0
    %2882 = vmatprep.subr.mxu0 0.0
    %2883 = vmatpush2.msra.mxu0 0.0
    %2884 = vmatprep.subr.mxu0 0.0
    %2885 = vmatpush2.msra.mxu0 0.0
    %2886 = vmatprep.subr.mxu0 0.0
    %2887 = vmatpush2.msra.mxu0 0.0
    %2888 = vmatprep.mubr.f32.mxu0 0.0
    %2889 = vmatmul.mubr.f32.gmra.mxu0 %v1615
    %v2890 = vpop.f32.mrf.mxu0
    %v2891 = vadd.f32 %v2820, %v2890
    %v2892 = vpop.f32.mrf.mxu0
    %v2893 = vadd.f32 %v2822, %v2892
    %2894 = vdwg.mxu0
    %2895 = vmatprep.subr.mxu0 %v1743
    %2896 = vmatpush1.msra.mxu0 %v1742
    %2897 = vmatprep.subr.mxu0 %v1735
    %2898 = vmatpush1.msra.mxu0 %v1734
    %2899 = vmatprep.subr.mxu0 %v1727
    %2900 = vmatpush1.msra.mxu0 %v1726
    %2901 = vmatprep.subr.mxu0 %v1719
    %2902 = vmatpush1.msra.mxu0 %v1718
    %2903 = vmatprep.subr.mxu0 %v1711
    %2904 = vmatpush1.msra.mxu0 %v1710
    %2905 = vmatprep.subr.mxu0 %v1703
    %2906 = vmatpush1.msra.mxu0 %v1702
    %2907 = vmatprep.subr.mxu0 %v1695
    %2908 = vmatpush1.msra.mxu0 %v1694
    %2909 = vmatprep.subr.mxu0 %v1687
    %2910 = vmatpush1.msra.mxu0 %v1686
    %2911 = vmatprep.subr.mxu0 %v1679
    %2912 = vmatpush1.msra.mxu0 %v1678
    %2913 = vmatprep.subr.mxu0 %v1671
    %2914 = vmatpush1.msra.mxu0 %v1670
    %2915 = vmatprep.subr.mxu0 %v1663
    %2916 = vmatpush1.msra.mxu0 %v1662
    %2917 = vmatprep.subr.mxu0 %v1655
    %2918 = vmatpush1.msra.mxu0 %v1654
    %2919 = vmatprep.subr.mxu0 %v1647
    %2920 = vmatpush1.msra.mxu0 %v1646
    %2921 = vmatprep.subr.mxu0 %v1639
    %2922 = vmatpush1.msra.mxu0 %v1638
    %2923 = vmatprep.subr.mxu0 %v1631
    %2924 = vmatpush1.msra.mxu0 %v1630
    %2925 = vmatprep.subr.mxu0 %v1623
    %2926 = vmatpush1.msra.mxu0 %v1622
    %2927 = vmatprep.subr.mxu0 %v1871
    %2928 = vmatpush2.msra.mxu0 %v1870
    %2929 = vmatprep.subr.mxu0 %v1863
    %2930 = vmatpush2.msra.mxu0 %v1862
    %2931 = vmatprep.subr.mxu0 %v1855
    %2932 = vmatpush2.msra.mxu0 %v1854
    %2933 = vmatprep.subr.mxu0 %v1847
    %2934 = vmatpush2.msra.mxu0 %v1846
    %2935 = vmatprep.subr.mxu0 %v1839
    %2936 = vmatpush2.msra.mxu0 %v1838
    %2937 = vmatprep.subr.mxu0 %v1831
    %2938 = vmatpush2.msra.mxu0 %v1830
    %2939 = vmatprep.subr.mxu0 %v1823
    %2940 = vmatpush2.msra.mxu0 %v1822
    %2941 = vmatprep.subr.mxu0 %v1815
    %2942 = vmatpush2.msra.mxu0 %v1814
    %2943 = vmatprep.subr.mxu0 %v1807
    %2944 = vmatpush2.msra.mxu0 %v1806
    %2945 = vmatprep.subr.mxu0 %v1799
    %2946 = vmatpush2.msra.mxu0 %v1798
    %2947 = vmatprep.subr.mxu0 %v1791
    %2948 = vmatpush2.msra.mxu0 %v1790
    %2949 = vmatprep.subr.mxu0 %v1783
    %2950 = vmatpush2.msra.mxu0 %v1782
    %2951 = vmatprep.subr.mxu0 %v1775
    %2952 = vmatpush2.msra.mxu0 %v1774
    %2953 = vmatprep.subr.mxu0 %v1767
    %2954 = vmatpush2.msra.mxu0 %v1766
    %2955 = vmatprep.subr.mxu0 %v1759
    %2956 = vmatpush2.msra.mxu0 %v1758
    %2957 = vmatprep.subr.mxu0 %v1751
    %2958 = vmatpush2.msra.mxu0 %v1750
    %2959 = vmatprep.mubr.f32.mxu0 %v1612
    %2960 = vmatmul.mubr.f32.gmra.mxu0 %v1611
    %v2961 = vpop.f32.mrf.mxu0
    %v2962 = vadd.f32 0.0, %v2961
    %v2963 = vpop.f32.mrf.mxu0
    %v2964 = vadd.f32 0.0, %v2963
    %2965 = vdwg.mxu0
    %2966 = vmatprep.subr.mxu0 %v1999
    %2967 = vmatpush1.msra.mxu0 %v1998
    %2968 = vmatprep.subr.mxu0 %v1991
    %2969 = vmatpush1.msra.mxu0 %v1990
    %2970 = vmatprep.subr.mxu0 %v1983
    %2971 = vmatpush1.msra.mxu0 %v1982
    %2972 = vmatprep.subr.mxu0 %v1975
    %2973 = vmatpush1.msra.mxu0 %v1974
    %2974 = vmatprep.subr.mxu0 %v1967
    %2975 = vmatpush1.msra.mxu0 %v1966
    %2976 = vmatprep.subr.mxu0 %v1959
    %2977 = vmatpush1.msra.mxu0 %v1958
    %2978 = vmatprep.subr.mxu0 %v1951
    %2979 = vmatpush1.msra.mxu0 %v1950
    %2980 = vmatprep.subr.mxu0 %v1943
    %2981 = vmatpush1.msra.mxu0 %v1942
    %2982 = vmatprep.subr.mxu0 %v1935
    %2983 = vmatpush1.msra.mxu0 %v1934
    %2984 = vmatprep.subr.mxu0 %v1927
    %2985 = vmatpush1.msra.mxu0 %v1926
    %2986 = vmatprep.subr.mxu0 %v1919
    %2987 = vmatpush1.msra.mxu0 %v1918
    %2988 = vmatprep.subr.mxu0 %v1911
    %2989 = vmatpush1.msra.mxu0 %v1910
    %2990 = vmatprep.subr.mxu0 %v1903
    %2991 = vmatpush1.msra.mxu0 %v1902
    %2992 = vmatprep.subr.mxu0 %v1895
    %2993 = vmatpush1.msra.mxu0 %v1894
    %2994 = vmatprep.subr.mxu0 %v1887
    %2995 = vmatpush1.msra.mxu0 %v1886
    %2996 = vmatprep.subr.mxu0 %v1879
    %2997 = vmatpush1.msra.mxu0 %v1878
    %2998 = vmatprep.subr.mxu0 %v2127
    %2999 = vmatpush2.msra.mxu0 %v2126
    %3000 = vmatprep.subr.mxu0 %v2119
    %3001 = vmatpush2.msra.mxu0 %v2118
    %3002 = vmatprep.subr.mxu0 %v2111
    %3003 = vmatpush2.msra.mxu0 %v2110
    %3004 = vmatprep.subr.mxu0 %v2103
    %3005 = vmatpush2.msra.mxu0 %v2102
    %3006 = vmatprep.subr.mxu0 %v2095
    %3007 = vmatpush2.msra.mxu0 %v2094
    %3008 = vmatprep.subr.mxu0 %v2087
    %3009 = vmatpush2.msra.mxu0 %v2086
    %3010 = vmatprep.subr.mxu0 %v2079
    %3011 = vmatpush2.msra.mxu0 %v2078
    %3012 = vmatprep.subr.mxu0 %v2071
    %3013 = vmatpush2.msra.mxu0 %v2070
    %3014 = vmatprep.subr.mxu0 %v2063
    %3015 = vmatpush2.msra.mxu0 %v2062
    %3016 = vmatprep.subr.mxu0 %v2055
    %3017 = vmatpush2.msra.mxu0 %v2054
    %3018 = vmatprep.subr.mxu0 %v2047
    %3019 = vmatpush2.msra.mxu0 %v2046
    %3020 = vmatprep.subr.mxu0 %v2039
    %3021 = vmatpush2.msra.mxu0 %v2038
    %3022 = vmatprep.subr.mxu0 %v2031
    %3023 = vmatpush2.msra.mxu0 %v2030
    %3024 = vmatprep.subr.mxu0 %v2023
    %3025 = vmatpush2.msra.mxu0 %v2022
    %3026 = vmatprep.subr.mxu0 %v2015
    %3027 = vmatpush2.msra.mxu0 %v2014
    %3028 = vmatprep.subr.mxu0 %v2007
    %3029 = vmatpush2.msra.mxu0 %v2006
    %3030 = vmatprep.mubr.f32.mxu0 %v1614
    %3031 = vmatmul.mubr.f32.gmra.mxu0 %v1613
    %v3032 = vpop.f32.mrf.mxu0
    %v3033 = vadd.f32 %v2962, %v3032
    %v3034 = vpop.f32.mrf.mxu0
    %v3035 = vadd.f32 %v2964, %v3034
    %3036 = vdwg.mxu0
    %3037 = vmatprep.subr.mxu0 %v2255
    %3038 = vmatpush1.msra.mxu0 %v2254
    %3039 = vmatprep.subr.mxu0 %v2247
    %3040 = vmatpush1.msra.mxu0 %v2246
    %3041 = vmatprep.subr.mxu0 %v2239
    %3042 = vmatpush1.msra.mxu0 %v2238
    %3043 = vmatprep.subr.mxu0 %v2231
    %3044 = vmatpush1.msra.mxu0 %v2230
    %3045 = vmatprep.subr.mxu0 %v2223
    %3046 = vmatpush1.msra.mxu0 %v2222
    %3047 = vmatprep.subr.mxu0 %v2215
    %3048 = vmatpush1.msra.mxu0 %v2214
    %3049 = vmatprep.subr.mxu0 %v2207
    %3050 = vmatpush1.msra.mxu0 %v2206
    %3051 = vmatprep.subr.mxu0 %v2199
    %3052 = vmatpush1.msra.mxu0 %v2198
    %3053 = vmatprep.subr.mxu0 %v2191
    %3054 = vmatpush1.msra.mxu0 %v2190
    %3055 = vmatprep.subr.mxu0 %v2183
    %3056 = vmatpush1.msra.mxu0 %v2182
    %3057 = vmatprep.subr.mxu0 %v2175
    %3058 = vmatpush1.msra.mxu0 %v2174
    %3059 = vmatprep.subr.mxu0 %v2167
    %3060 = vmatpush1.msra.mxu0 %v2166
    %3061 = vmatprep.subr.mxu0 %v2159
    %3062 = vmatpush1.msra.mxu0 %v2158
    %3063 = vmatprep.subr.mxu0 %v2151
    %3064 = vmatpush1.msra.mxu0 %v2150
    %3065 = vmatprep.subr.mxu0 %v2143
    %3066 = vmatpush1.msra.mxu0 %v2142
    %3067 = vmatprep.subr.mxu0 %v2135
    %3068 = vmatpush1.msra.mxu0 %v2134
    %3069 = vmatprep.subr.mxu0 0.0
    %3070 = vmatpush2.msra.mxu0 0.0
    %3071 = vmatprep.subr.mxu0 0.0
    %3072 = vmatpush2.msra.mxu0 0.0
    %3073 = vmatprep.subr.mxu0 0.0
    %3074 = vmatpush2.msra.mxu0 0.0
    %3075 = vmatprep.subr.mxu0 0.0
    %3076 = vmatpush2.msra.mxu0 0.0
    %3077 = vmatprep.subr.mxu0 0.0
    %3078 = vmatpush2.msra.mxu0 0.0
    %3079 = vmatprep.subr.mxu0 0.0
    %3080 = vmatpush2.msra.mxu0 0.0
    %3081 = vmatprep.subr.mxu0 0.0
    %3082 = vmatpush2.msra.mxu0 0.0
    %3083 = vmatprep.subr.mxu0 0.0
    %3084 = vmatpush2.msra.mxu0 0.0
    %3085 = vmatprep.subr.mxu0 0.0
    %3086 = vmatpush2.msra.mxu0 0.0
    %3087 = vmatprep.subr.mxu0 0.0
    %3088 = vmatpush2.msra.mxu0 0.0
    %3089 = vmatprep.subr.mxu0 0.0
    %3090 = vmatpush2.msra.mxu0 0.0
    %3091 = vmatprep.subr.mxu0 0.0
    %3092 = vmatpush2.msra.mxu0 0.0
    %3093 = vmatprep.subr.mxu0 0.0
    %3094 = vmatpush2.msra.mxu0 0.0
    %3095 = vmatprep.subr.mxu0 0.0
    %3096 = vmatpush2.msra.mxu0 0.0
    %3097 = vmatprep.subr.mxu0 0.0
    %3098 = vmatpush2.msra.mxu0 0.0
    %3099 = vmatprep.subr.mxu0 0.0
    %3100 = vmatpush2.msra.mxu0 0.0
    %3101 = vmatprep.mubr.f32.mxu0 0.0
    %3102 = vmatmul.mubr.f32.gmra.mxu0 %v1615
    %v3103 = vpop.f32.mrf.mxu0
    %v3104 = vadd.f32 %v3033, %v3103
    %v3105 = vpop.f32.mrf.mxu0
    %v3106 = vadd.f32 %v3035, %v3105
    %3107 = vdwg.mxu0
    %vm3108 = vcmask 1041408
    %v3109 = vsel %vm3108, %v2465, 0.0
    %v3110 = vsel %vm3108, %v2467, 0.0
    %v3111 = vadd.f32 %v3109, %v3110
    %3112 = vadd.xlane.f32.xlu0 %v3111
    %v3113 = vpop.xlane.xlu0 %3112
    %v3114 = vsel %vm3108, %v3113, 0.0
    %v3115 = vrot.slane %v3114, 4
    %v3116 = vadd.f32 %v3114, %v3115
    %v3117 = vrot.slane %v3116, 2
    %v3118 = vadd.f32 %v3116, %v3117
    %v3119 = vrot.slane %v3118, 1
    %v3120 = vadd.f32 %v3118, %v3119
    %v3121 = vmul.f32 %v3120, 0.001953125
    %v3122 = vsub.f32 %v2465, %v3121
    %v3123 = vsub.f32 %v2467, %v3121
    %v3124 = vmul.f32 %v3122, %v3122
    %v3125 = vmul.f32 %v3123, %v3123
    %v3126 = vsel %vm3108, %v3124, 0.0
    %v3127 = vsel %vm3108, %v3125, 0.0
    %v3128 = vadd.f32 %v3126, %v3127
    %3129 = vadd.xlane.f32.xlu0 %v3128
    %v3130 = vpop.xlane.xlu0 %3129
    %v3131 = vsel %vm3108, %v3130, 0.0
    %v3132 = vrot.slane %v3131, 4
    %v3133 = vadd.f32 %v3131, %v3132
    %v3134 = vrot.slane %v3133, 2
    %v3135 = vadd.f32 %v3133, %v3134
    %v3136 = vrot.slane %v3135, 1
    %v3137 = vadd.f32 %v3135, %v3136
    %v3138 = vmul.f32 %v3137, 0.001953125
    %v3139 = vadd.f32 %v3138, 1e-05
    %v3140 = vrsqrt.pop %v3139
    %v3141 = vld [vmem:[#allocation6] sm:$0x3]
    %v3142 = vmul.f32 %v3140, %v3141
    %v3144 = vlaneseq
    %v3145 = vshrl.u32 %v3144, 7
    %v3146 = vsub.s32 0, %v3145
    %v3147 = vrot.slane %v3142, %v3146
    %v3148 = vlaneseq
    %v3149 = vshrl.u32 %v3148, 7
    %v3150 = vsub.s32 1, %v3149
    %v3151 = vrot.slane %v3142, %v3150
    %v3154 = vmul.f32 %v3122, %v3147
    %v3155 = vmul.f32 %v3123, %v3151
    %v3156 = vld [vmem:[#allocation7] sm:$0x3]
    %v3158 = vlaneseq
    %v3159 = vshrl.u32 %v3158, 7
    %v3160 = vsub.s32 0, %v3159
    %v3161 = vrot.slane %v3156, %v3160
    %v3162 = vlaneseq
    %v3163 = vshrl.u32 %v3162, 7
    %v3164 = vsub.s32 1, %v3163
    %v3165 = vrot.slane %v3156, %v3164
    %v3168 = vadd.f32 %v3154, %v3161
    %v3169 = vadd.f32 %v3155, %v3165
    %v3172 = vcombine.low %v3168, %v3169
    %v3174 = vunpack.c.l.s4 1983009808
    %v3175 = vunpack.c.0.s8 %v3174
    %v3176 = vlaneseq
    %v3177 = vshrl.u32 %v3176, 7
    %v3178 = vsub.s32 %v3175, %v3177
    %v3179 = vrot.slane %v3172, %v3178
    %3181 = vst [vmem:[%s5] sm:$0xf] %v3179
    %v3182 = vsel %vm3108, %v2678, 0.0
    %v3183 = vsel %vm3108, %v2680, 0.0
    %v3184 = vadd.f32 %v3182, %v3183
    %3185 = vadd.xlane.f32.xlu0 %v3184
    %v3186 = vpop.xlane.xlu0 %3185
    %v3187 = vsel %vm3108, %v3186, 0.0
    %v3188 = vrot.slane %v3187, 4
    %v3189 = vadd.f32 %v3187, %v3188
    %v3190 = vrot.slane %v3189, 2
    %v3191 = vadd.f32 %v3189, %v3190
    %v3192 = vrot.slane %v3191, 1
    %v3193 = vadd.f32 %v3191, %v3192
    %v3194 = vmul.f32 %v3193, 0.001953125
    %v3195 = vsub.f32 %v2678, %v3194
    %v3196 = vsub.f32 %v2680, %v3194
    %v3197 = vmul.f32 %v3195, %v3195
    %v3198 = vmul.f32 %v3196, %v3196
    %v3199 = vsel %vm3108, %v3197, 0.0
    %v3200 = vsel %vm3108, %v3198, 0.0
    %v3201 = vadd.f32 %v3199, %v3200
    %3202 = vadd.xlane.f32.xlu0 %v3201
    %v3203 = vpop.xlane.xlu0 %3202
    %v3204 = vsel %vm3108, %v3203, 0.0
    %v3205 = vrot.slane %v3204, 4
    %v3206 = vadd.f32 %v3204, %v3205
    %v3207 = vrot.slane %v3206, 2
    %v3208 = vadd.f32 %v3206, %v3207
    %v3209 = vrot.slane %v3208, 1
    %v3210 = vadd.f32 %v3208, %v3209
    %v3211 = vmul.f32 %v3210, 0.001953125
    %v3212 = vadd.f32 %v3211, 1e-05
    %v3213 = vrsqrt.pop %v3212
    %v3214 = vld [vmem:[#allocation6 + $0x2] sm:$0x3]
    %v3215 = vmul.f32 %v3213, %v3214
    %v3217 = vlaneseq
    %v3218 = vshrl.u32 %v3217, 7
    %v3219 = vsub.s32 0, %v3218
    %v3220 = vrot.slane %v3215, %v3219
    %v3221 = vlaneseq
    %v3222 = vshrl.u32 %v3221, 7
    %v3223 = vsub.s32 1, %v3222
    %v3224 = vrot.slane %v3215, %v3223
    %v3227 = vmul.f32 %v3195, %v3220
    %v3228 = vmul.f32 %v3196, %v3224
    %v3229 = vld [vmem:[#allocation7 + $0x2] sm:$0x3]
    %v3231 = vlaneseq
    %v3232 = vshrl.u32 %v3231, 7
    %v3233 = vsub.s32 0, %v3232
    %v3234 = vrot.slane %v3229, %v3233
    %v3235 = vlaneseq
    %v3236 = vshrl.u32 %v3235, 7
    %v3237 = vsub.s32 1, %v3236
    %v3238 = vrot.slane %v3229, %v3237
    %v3241 = vadd.f32 %v3227, %v3234
    %v3242 = vadd.f32 %v3228, %v3238
    %v3245 = vcombine.low %v3241, %v3242
    %v3247 = vunpack.c.l.s4 1983009808
    %v3248 = vunpack.c.0.s8 %v3247
    %v3249 = vlaneseq
    %v3250 = vshrl.u32 %v3249, 7
    %v3251 = vsub.s32 %v3248, %v3250
    %v3252 = vrot.slane %v3245, %v3251
    %3254 = vst [vmem:[%s5 + $0x4] sm:$0xf] %v3252
    %v3255 = vsel %vm3108, %v2891, 0.0
    %v3256 = vsel %vm3108, %v2893, 0.0
    %v3257 = vadd.f32 %v3255, %v3256
    %3258 = vadd.xlane.f32.xlu0 %v3257
    %v3259 = vpop.xlane.xlu0 %3258
    %v3260 = vsel %vm3108, %v3259, 0.0
    %v3261 = vrot.slane %v3260, 4
    %v3262 = vadd.f32 %v3260, %v3261
    %v3263 = vrot.slane %v3262, 2
    %v3264 = vadd.f32 %v3262, %v3263
    %v3265 = vrot.slane %v3264, 1
    %v3266 = vadd.f32 %v3264, %v3265
    %v3267 = vmul.f32 %v3266, 0.001953125
    %v3268 = vsub.f32 %v2891, %v3267
    %v3269 = vsub.f32 %v2893, %v3267
    %v3270 = vmul.f32 %v3268, %v3268
    %v3271 = vmul.f32 %v3269, %v3269
    %v3272 = vsel %vm3108, %v3270, 0.0
    %v3273 = vsel %vm3108, %v3271, 0.0
    %v3274 = vadd.f32 %v3272, %v3273
    %3275 = vadd.xlane.f32.xlu0 %v3274
    %v3276 = vpop.xlane.xlu0 %3275
    %v3277 = vsel %vm3108, %v3276, 0.0
    %v3278 = vrot.slane %v3277, 4
    %v3279 = vadd.f32 %v3277, %v3278
    %v3280 = vrot.slane %v3279, 2
    %v3281 = vadd.f32 %v3279, %v3280
    %v3282 = vrot.slane %v3281, 1
    %v3283 = vadd.f32 %v3281, %v3282
    %v3284 = vmul.f32 %v3283, 0.001953125
    %v3285 = vadd.f32 %v3284, 1e-05
    %v3286 = vrsqrt.pop %v3285
    %v3287 = vld [vmem:[#allocation6 + $0x4] sm:$0x3]
    %v3288 = vmul.f32 %v3286, %v3287
    %v3290 = vlaneseq
    %v3291 = vshrl.u32 %v3290, 7
    %v3292 = vsub.s32 0, %v3291
    %v3293 = vrot.slane %v3288, %v3292
    %v3294 = vlaneseq
    %v3295 = vshrl.u32 %v3294, 7
    %v3296 = vsub.s32 1, %v3295
    %v3297 = vrot.slane %v3288, %v3296
    %v3300 = vmul.f32 %v3268, %v3293
    %v3301 = vmul.f32 %v3269, %v3297
    %v3302 = vld [vmem:[#allocation7 + $0x4] sm:$0x3]
    %v3304 = vlaneseq
    %v3305 = vshrl.u32 %v3304, 7
    %v3306 = vsub.s32 0, %v3305
    %v3307 = vrot.slane %v3302, %v3306
    %v3308 = vlaneseq
    %v3309 = vshrl.u32 %v3308, 7
    %v3310 = vsub.s32 1, %v3309
    %v3311 = vrot.slane %v3302, %v3310
    %v3314 = vadd.f32 %v3300, %v3307
    %v3315 = vadd.f32 %v3301, %v3311
    %v3318 = vcombine.low %v3314, %v3315
    %v3320 = vunpack.c.l.s4 1983009808
    %v3321 = vunpack.c.0.s8 %v3320
    %v3322 = vlaneseq
    %v3323 = vshrl.u32 %v3322, 7
    %v3324 = vsub.s32 %v3321, %v3323
    %v3325 = vrot.slane %v3318, %v3324
    %3327 = vst [vmem:[%s5 + $0x8] sm:$0xf] %v3325
    %v3328 = vsel %vm3108, %v3104, 0.0
    %v3329 = vsel %vm3108, %v3106, 0.0
    %v3330 = vadd.f32 %v3328, %v3329
    %3331 = vadd.xlane.f32.xlu0 %v3330
    %v3332 = vpop.xlane.xlu0 %3331
    %v3333 = vsel %vm3108, %v3332, 0.0
    %v3334 = vrot.slane %v3333, 4
    %v3335 = vadd.f32 %v3333, %v3334
    %v3336 = vrot.slane %v3335, 2
    %v3337 = vadd.f32 %v3335, %v3336
    %v3338 = vrot.slane %v3337, 1
    %v3339 = vadd.f32 %v3337, %v3338
    %v3340 = vmul.f32 %v3339, 0.001953125
    %v3341 = vsub.f32 %v3104, %v3340
    %v3342 = vsub.f32 %v3106, %v3340
    %v3343 = vmul.f32 %v3341, %v3341
    %v3344 = vmul.f32 %v3342, %v3342
    %v3345 = vsel %vm3108, %v3343, 0.0
    %v3346 = vsel %vm3108, %v3344, 0.0
    %v3347 = vadd.f32 %v3345, %v3346
    %3348 = vadd.xlane.f32.xlu0 %v3347
    %v3349 = vpop.xlane.xlu0 %3348
    %v3350 = vsel %vm3108, %v3349, 0.0
    %v3351 = vrot.slane %v3350, 4
    %v3352 = vadd.f32 %v3350, %v3351
    %v3353 = vrot.slane %v3352, 2
    %v3354 = vadd.f32 %v3352, %v3353
    %v3355 = vrot.slane %v3354, 1
    %v3356 = vadd.f32 %v3354, %v3355
    %v3357 = vmul.f32 %v3356, 0.001953125
    %v3358 = vadd.f32 %v3357, 1e-05
    %v3359 = vrsqrt.pop %v3358
    %v3360 = vld [vmem:[#allocation6 + $0x6] sm:$0x3]
    %v3361 = vmul.f32 %v3359, %v3360
    %v3363 = vlaneseq
    %v3364 = vshrl.u32 %v3363, 7
    %v3365 = vsub.s32 0, %v3364
    %v3366 = vrot.slane %v3361, %v3365
    %v3367 = vlaneseq
    %v3368 = vshrl.u32 %v3367, 7
    %v3369 = vsub.s32 1, %v3368
    %v3370 = vrot.slane %v3361, %v3369
    %v3373 = vmul.f32 %v3341, %v3366
    %v3374 = vmul.f32 %v3342, %v3370
    %v3375 = vld [vmem:[#allocation7 + $0x6] sm:$0x3]
    %v3377 = vlaneseq
    %v3378 = vshrl.u32 %v3377, 7
    %v3379 = vsub.s32 0, %v3378
    %v3380 = vrot.slane %v3375, %v3379
    %v3381 = vlaneseq
    %v3382 = vshrl.u32 %v3381, 7
    %v3383 = vsub.s32 1, %v3382
    %v3384 = vrot.slane %v3375, %v3383
    %v3387 = vadd.f32 %v3373, %v3380
    %v3388 = vadd.f32 %v3374, %v3384
    %v3391 = vcombine.low %v3387, %v3388
    %v3393 = vunpack.c.l.s4 1983009808
    %v3394 = vunpack.c.0.s8 %v3393
    %v3395 = vlaneseq
    %v3396 = vshrl.u32 %v3395, 7
    %v3397 = vsub.s32 %v3394, %v3396
    %v3398 = vrot.slane %v3391, %v3397
    %3400 = vst [vmem:[%s5 + $0xc] sm:$0xf] %v3398
    %3401 = vst [vmem:[%s5 + $0x10] sm:$0xff] %v71
    %3402 = vst [vmem:[%s5 + $0x18] sm:$0xff] %v72
    // Predicated region
    $region38: #{unet_innermost_block.1} parent=1 // pred_check
      _
    $region39: #{unet_innermost_block.1} parent=1 // pred_check_branch
      %3404 = sbr.rel (0) target = $region41
    $region40: #{unet_innermost_block.1} parent=1 // pred_region
      _
    $region41: #{unet_innermost_block.1} parent=1 // pred_fallthru
      _
    // Predicated region
    $region42: #{unet_innermost_block.1} parent=1 // pred_check
      _
    $region43: #{unet_innermost_block.1} parent=1 // pred_check_branch
      %3406 = sbr.rel (0) target = $region45
    $region44: #{unet_innermost_block.1} parent=1 // pred_region
      _
    $region45: #{unet_innermost_block.1} parent=1 // pred_fallthru
      _
    %3407 = vsyncpa [#allocation3], 1
    %3408 = vsyncpa [#allocation5], 1
    %3409 = vsyncpa [#allocation8], 1

</llo_original>
